<compile_context>
chip_gen: v6e
topology: v6e:2x2x1
jax: 0.10.0
libtpu: 0.0.40
codegen_flags: <defaults>
</compile_context>

<pallas_src>
import functools
import math

import jax
import jax.numpy as jnp
import numpy as np
from jax.experimental import pallas as pl
from jax.experimental.pallas import tpu as pltpu

LEAKY_SLOPE = 0.01  # nn.LeakyReLU default


# --------------------------------------------------------------------------
# Host-side precomputed constants (become XLA constants under jit).
# --------------------------------------------------------------------------
def _conv3x3_masks(H, W):
    """(9, H*W) f32 validity masks for the 9 taps of a 'same' 3x3 conv on the
    flat row-major H*W index; tap order (dh, dw) row-major."""
    row = np.arange(H)[:, None]
    col = np.arange(W)[None, :]
    masks = []
    for dh in (-1, 0, 1):
        for dw in (-1, 0, 1):
            valid = ((row + dh >= 0) & (row + dh < H) &
                     (col + dw >= 0) & (col + dw < W))
            masks.append(valid.reshape(-1))
    return jnp.asarray(np.stack(masks).astype(np.float32))


def _down_select(H, W, s):
    """One-hot (H*W, (H//s)*(W//s)) f32: selects the stride-aligned columns of
    a full-resolution valid-window conv (= the k=s, stride=s conv outputs)."""
    Hl, Wl = H // s, W // s
    src = (np.arange(Hl)[:, None] * (s * W) + np.arange(Wl)[None, :] * s).reshape(-1)
    P = np.zeros((H * W, Hl * Wl), np.float32)
    P[src, np.arange(Hl * Wl)] = 1.0
    return jnp.asarray(P)


def _up_select(H, W, s):
    """One-hot ((H//s)*(W//s), H*W) f32: nearest x`s` upsample of a flat
    channel-major image expressed as a matmul."""
    Hl, Wl = H // s, W // s
    src = ((np.arange(H)[:, None] // s) * Wl + (np.arange(W)[None, :] // s)).reshape(-1)
    U = np.zeros((Hl * Wl, H * W), np.float32)
    U[src, np.arange(H * W)] = 1.0
    return jnp.asarray(U)


# --------------------------------------------------------------------------
# In-kernel helpers.
# --------------------------------------------------------------------------
def _leaky(x):
    return jnp.where(x > 0, x, LEAKY_SLOPE * x)


def _roll_lanes(a, off):
    """result[:, p] = a[:, (p + off) % S]  for a static integer offset."""
    S = a.shape[-1]
    k = off % S
    if k == 0:
        return a
    if S % 128 == 0:
        # XLU lane rotate (cheap).  pltpu.roll == jnp.roll semantics (shift by
        # +n moves data to higher indices), so shift by S - k.
        return pltpu.roll(a, S - k, 1)
    # Small / non-lane-aligned arrays: explicit two-slice rotate.
    return jnp.concatenate([a[:, k:], a[:, :k]], axis=1)


def _conv3x3_same(a, w, b, masks, W):
    """'Same' 3x3 conv on a flat channel-major activation.
    a: (C, S=H*W) f32.  w: (Cout, 9*C) bf16 (tap-major, cin minor).
    b: (Cout, 1) f32.  masks: (9, S) f32.  Returns (Cout, S) f32."""
    taps = []
    t = 0
    for dh in (-1, 0, 1):
        for dw in (-1, 0, 1):
            sh = _roll_lanes(a, dh * W + dw)
            taps.append(sh * masks[t:t + 1, :])
            t += 1
    patches = jnp.concatenate(taps, axis=0).astype(jnp.bfloat16)     # (9C, S)
    return jnp.dot(w, patches, preferred_element_type=jnp.float32) + b


# --------------------------------------------------------------------------
# Kernel 1: standalone 3x3 conv (used for conv_in, and conv_out if no levels).
# --------------------------------------------------------------------------
def _conv3x3_kernel(W, x_ref, w_ref, b_ref, m_ref, o_ref):
    o_ref[0] = _conv3x3_same(x_ref[0], w_ref[...], b_ref[...], m_ref[...], W)


def conv3x3(x, w, b, H, W):
    B, Cin, S = x.shape
    Cout = w.shape[0]
    masks = _conv3x3_masks(H, W)
    return pl.pallas_call(
        functools.partial(_conv3x3_kernel, W),
        out_shape=jax.ShapeDtypeStruct((B, Cout, S), jnp.float32),
        grid=(B,),
        in_specs=[
            pl.BlockSpec((1, Cin, S), lambda bi: (bi, 0, 0)),
            pl.BlockSpec((Cout, 9 * Cin), lambda bi: (0, 0)),
            pl.BlockSpec((Cout, 1), lambda bi: (0, 0)),
            pl.BlockSpec((9, S), lambda bi: (0, 0)),
        ],
        out_specs=pl.BlockSpec((1, Cout, S), lambda bi: (bi, 0, 0)),
        compiler_params=pltpu.CompilerParams(dimension_semantics=("parallel",)),
    )(x, w, b, masks)


# --------------------------------------------------------------------------
# Kernel 2: fused residual block, block_depth x (x + Conv3x3(LeakyReLU(x))).
# --------------------------------------------------------------------------
def _res_block_kernel(W, depth, x_ref, wb_ref, bb_ref, m_ref, o_ref, h_scr):
    d = pl.program_id(1)

    @pl.when(d == 0)
    def _():
        h_scr[...] = x_ref[0]

    h = h_scr[...]
    new_h = h + _conv3x3_same(_leaky(h), wb_ref[0], bb_ref[0], m_ref[...], W)
    h_scr[...] = new_h

    @pl.when(d == depth - 1)
    def _():
        o_ref[0] = new_h


def res_block(x, w_stack, b_stack, H, W):
    B, C, S = x.shape
    depth = w_stack.shape[0]
    masks = _conv3x3_masks(H, W)
    return pl.pallas_call(
        functools.partial(_res_block_kernel, W, depth),
        out_shape=jax.ShapeDtypeStruct((B, C, S), jnp.float32),
        grid=(B, depth),
        in_specs=[
            pl.BlockSpec((1, C, S), lambda bi, d: (bi, 0, 0)),
            pl.BlockSpec((1, C, 9 * C), lambda bi, d: (d, 0, 0)),
            pl.BlockSpec((1, C, 1), lambda bi, d: (d, 0, 0)),
            pl.BlockSpec((9, S), lambda bi, d: (0, 0)),
        ],
        out_specs=pl.BlockSpec((1, C, S), lambda bi, d: (bi, 0, 0)),
        scratch_shapes=[pltpu.VMEM((C, S), jnp.float32)],
        compiler_params=pltpu.CompilerParams(
            dimension_semantics=("parallel", "arbitrary")),
    )(x, w_stack, b_stack, masks)


# --------------------------------------------------------------------------
# Kernel 3: pre-block + strided down-conv (k=s, stride=s) fused.
# --------------------------------------------------------------------------
def _res_block_down_kernel(W, s, depth, x_ref, wb_ref, bb_ref, wd_ref, bd_ref,
                           sel_ref, m_ref, o_ref, h_scr):
    d = pl.program_id(1)

    @pl.when(d == 0)
    def _():
        h_scr[...] = x_ref[0]

    h = h_scr[...]
    new_h = h + _conv3x3_same(_leaky(h), wb_ref[0], bb_ref[0], m_ref[...], W)
    h_scr[...] = new_h

    @pl.when(d == depth - 1)
    def _():
        # Valid-window conv at every position via lane rolls (no masks needed
        # for the stride-aligned positions we keep), then compact the columns
        # with a one-hot f32 selection matmul.
        taps = []
        for kh in range(s):
            for kw in range(s):
                taps.append(_roll_lanes(new_h, kh * W + kw))
        patches = jnp.concatenate(taps, axis=0).astype(jnp.bfloat16)    # (s*s*C, S)
        full = jnp.dot(wd_ref[...], patches,
                       preferred_element_type=jnp.float32)              # (Ci, S)
        o_ref[0] = jnp.dot(full, sel_ref[...],
                           preferred_element_type=jnp.float32) + bd_ref[...]


def res_block_down(x, lvl, H, W, s):
    B, C, S = x.shape
    w_stack, b_stack = lvl["pre"]
    wd, bd = lvl["down"]
    depth = w_stack.shape[0]
    Ci = wd.shape[0]
    S_lo = (H // s) * (W // s)
    masks = _conv3x3_masks(H, W)
    sel = _down_select(H, W, s)
    return pl.pallas_call(
        functools.partial(_res_block_down_kernel, W, s, depth),
        out_shape=jax.ShapeDtypeStruct((B, Ci, S_lo), jnp.float32),
        grid=(B, depth),
        in_specs=[
            pl.BlockSpec((1, C, S), lambda bi, d: (bi, 0, 0)),
            pl.BlockSpec((1, C, 9 * C), lambda bi, d: (d, 0, 0)),
            pl.BlockSpec((1, C, 1), lambda bi, d: (d, 0, 0)),
            pl.BlockSpec((Ci, s * s * C), lambda bi, d: (0, 0)),
            pl.BlockSpec((Ci, 1), lambda bi, d: (0, 0)),
            pl.BlockSpec((S, S_lo), lambda bi, d: (0, 0)),
            pl.BlockSpec((9, S), lambda bi, d: (0, 0)),
        ],
        out_specs=pl.BlockSpec((1, Ci, S_lo), lambda bi, d: (bi, 0, 0)),
        scratch_shapes=[pltpu.VMEM((C, S), jnp.float32)],
        compiler_params=pltpu.CompilerParams(
            dimension_semantics=("parallel", "arbitrary")),
    )(x, w_stack, b_stack, wd, bd, sel, masks)


# --------------------------------------------------------------------------
# Kernel 4: 1x1 up-conv (at low res) + nearest upsample (one-hot matmul) +
# post-block + fused ConcatSkipConn 1x1 merge (+ optional final 3x3 conv_out).
# --------------------------------------------------------------------------
def _res_block_up_merge_kernel(W, depth, has_out_conv, *refs):
    if has_out_conv:
        (y_ref, skip_ref, wu_ref, bu_ref, up_ref,
         wb_ref, bb_ref, w1_ref, w2_ref, bm_ref,
         wo_ref, bo_ref, m_ref, o_ref, h_scr) = refs
    else:
        (y_ref, skip_ref, wu_ref, bu_ref, up_ref,
         wb_ref, bb_ref, w1_ref, w2_ref, bm_ref,
         m_ref, o_ref, h_scr) = refs
        wo_ref = bo_ref = None
    d = pl.program_id(1)

    @pl.when(d == 0)
    def _():
        # 1x1 conv at LOW resolution, then nearest upsample via one-hot matmul
        # (commutes exactly with Upsample(nearest) -> Conv2d 1x1).
        low = jnp.dot(wu_ref[...], y_ref[0].astype(jnp.bfloat16),
                      preferred_element_type=jnp.float32) + bu_ref[...]   # (Cw, S_lo)
        h_scr[...] = jnp.dot(low, up_ref[...],
                             preferred_element_type=jnp.float32)          # (Cw, S)

    h = h_scr[...]
    new_h = h + _conv3x3_same(_leaky(h), wb_ref[0], bb_ref[0], m_ref[...], W)
    h_scr[...] = new_h

    @pl.when(d == depth - 1)
    def _():
        # cat([skip, net_out], channel) @ Wm == w1 @ skip + w2 @ net_out.
        merged = (jnp.dot(w1_ref[...], skip_ref[0].astype(jnp.bfloat16),
                          preferred_element_type=jnp.float32)
                  + jnp.dot(w2_ref[...], new_h.astype(jnp.bfloat16),
                            preferred_element_type=jnp.float32)
                  + bm_ref[...])
        if has_out_conv:
            o_ref[0] = _conv3x3_same(merged, wo_ref[...], bo_ref[...],
                                     m_ref[...], W)
        else:
            o_ref[0] = merged


def res_block_up_merge(y_low, skip, lvl, H, W, s, out_conv=None):
    B, Ci, S_lo = y_low.shape
    _, Cw, S = skip.shape
    w_stack, b_stack = lvl["post"]
    wu, bu = lvl["up"]
    w1, w2, bm = lvl["merge"]
    depth = w_stack.shape[0]
    masks = _conv3x3_masks(H, W)
    up = _up_select(H, W, s)
    has_out = out_conv is not None
    Cout = out_conv[0].shape[0] if has_out else Cw

    ins = [y_low, skip, wu, bu, up, w_stack, b_stack, w1, w2, bm]
    in_specs = [
        pl.BlockSpec((1, Ci, S_lo), lambda bi, d: (bi, 0, 0)),
        pl.BlockSpec((1, Cw, S), lambda bi, d: (bi, 0, 0)),
        pl.BlockSpec((Cw, Ci), lambda bi, d: (0, 0)),
        pl.BlockSpec((Cw, 1), lambda bi, d: (0, 0)),
        pl.BlockSpec((S_lo, S), lambda bi, d: (0, 0)),
        pl.BlockSpec((1, Cw, 9 * Cw), lambda bi, d: (d, 0, 0)),
        pl.BlockSpec((1, Cw, 1), lambda bi, d: (d, 0, 0)),
        pl.BlockSpec((Cw, Cw), lambda bi, d: (0, 0)),
        pl.BlockSpec((Cw, Cw), lambda bi, d: (0, 0)),
        pl.BlockSpec((Cw, 1), lambda bi, d: (0, 0)),
    ]
    if has_out:
        wo, bo = out_conv
        ins += [wo, bo]
        in_specs += [pl.BlockSpec((Cout, 9 * Cw), lambda bi, d: (0, 0)),
                     pl.BlockSpec((Cout, 1), lambda bi, d: (0, 0))]
    ins.append(masks)
    in_specs.append(pl.BlockSpec((9, S), lambda bi, d: (0, 0)))

    return pl.pallas_call(
        functools.partial(_res_block_up_merge_kernel, W, depth, has_out),
        out_shape=jax.ShapeDtypeStruct((B, Cout, S), jnp.float32),
        grid=(B, depth),
        in_specs=in_specs,
        out_specs=pl.BlockSpec((1, Cout, S), lambda bi, d: (bi, 0, 0)),
        scratch_shapes=[pltpu.VMEM((Cw, S), jnp.float32)],
        compiler_params=pltpu.CompilerParams(
            dimension_semantics=("parallel", "arbitrary")),
    )(*ins)


# --------------------------------------------------------------------------
# Deterministic parameter init (PyTorch-Conv-style uniform bounds).
# MXU weight operands are stored bf16; biases stay f32.
# --------------------------------------------------------------------------
def _uniform(key, shape, bound):
    return jax.random.uniform(key, shape, jnp.float32, -bound, bound)


def _init_conv3x3(key, cin, cout):
    kw, kb = jax.random.split(key)
    bound = 1.0 / math.sqrt(cin * 9)
    return (_uniform(kw, (cout, 9 * cin), bound).astype(jnp.bfloat16),
            _uniform(kb, (cout, 1), bound))


def _init_block(key, c, depth):
    ws, bs = zip(*[_init_conv3x3(k, c, c) for k in jax.random.split(key, depth)])
    return jnp.stack(ws), jnp.stack(bs)          # (depth, c, 9c) bf16, (depth, c, 1) f32


def _init_down(key, cin, cout, s):
    kw, kb = jax.random.split(key)
    bound = 1.0 / math.sqrt(cin * s * s)
    return (_uniform(kw, (cout, s * s * cin), bound).astype(jnp.bfloat16),
            _uniform(kb, (cout, 1), bound))


def _init_1x1(key, cin, cout):
    kw, kb = jax.random.split(key)
    bound = 1.0 / math.sqrt(cin)
    return (_uniform(kw, (cout, cin), bound).astype(jnp.bfloat16),
            _uniform(kb, (cout, 1), bound))


def _init_merge(key, width):
    kw, kb = jax.random.split(key)
    bound = 1.0 / math.sqrt(2 * width)
    wm = _uniform(kw, (width, 2 * width), bound)
    return (wm[:, :width].astype(jnp.bfloat16),   # applied to skip input (cat first)
            wm[:, width:].astype(jnp.bfloat16),   # applied to the net output
            _uniform(kb, (width, 1), bound))


def build_params(key, block_widths, block_depth, in_width, out_width, scale_factor):
    keys = iter(jax.random.split(key, 16 + 8 * len(block_widths)))
    params = {
        "conv_in": _init_conv3x3(next(keys), in_width, block_widths[0]),
        "conv_out": _init_conv3x3(next(keys), block_widths[0], out_width),
        "inner_block": _init_block(next(keys), block_widths[-1], block_depth),
        "levels": [],
    }
    for i in range(len(block_widths) - 1):
        width = block_widths[-2 - i]
        inner = block_widths[-1 - i]
        params["levels"].append({
            "pre": _init_block(next(keys), width, block_depth),
            "down": _init_down(next(keys), width, inner, scale_factor),
            "up": _init_1x1(next(keys), inner, width),
            "post": _init_block(next(keys), width, block_depth),
            "merge": _init_merge(next(keys), width),
        })
    return params


# --------------------------------------------------------------------------
# Forward pass (mirrors MultiScaleResnet2d.forward).
# --------------------------------------------------------------------------
def forward(x_nchw, params, *, scale_factor=4):
    B, Cin, H0, W = x_nchw.shape
    # Matches the PyTorch module exactly: pads a FULL 16 extra rows when H0 % 16 == 0.
    pad = 16 - H0 % 16
    H = H0 + pad
    x = jnp.pad(x_nchw, ((0, 0), (0, 0), (0, pad), (0, 0)))
    # NCHW is already channel-major -> flattening (H, W) into S is free.
    x = x.reshape(B, Cin, H * W)

    levels = params["levels"]
    n = len(levels)

    def apply_level(h, idx, Hc, Wc):
        if idx < 0:
            return res_block(h, *params["inner_block"], Hc, Wc)
        lvl = levels[idx]
        s = scale_factor
        assert Hc % s == 0 and Wc % s == 0, (Hc, Wc, s)
        skip = h
        y = res_block_down(h, lvl, Hc, Wc, s)                 # pre-block + down-conv
        y = apply_level(y, idx - 1, Hc // s, Wc // s)
        out_conv = params["conv_out"] if idx == n - 1 else None
        return res_block_up_merge(y, skip, lvl, Hc, Wc, s,    # up + post + merge (+ conv_out)
                                  out_conv=out_conv)

    h = conv3x3(x, *params["conv_in"], H, W)
    h = apply_level(h, n - 1, H, W)
    if n == 0:
        h = conv3x3(h, *params["conv_out"], H, W)
    Cout = h.shape[1]
    return h.reshape(B, Cout, H, W)[:, :, :H0, :]


if __name__ == "__main__":
    key = jax.random.PRNGKey(0)
    k_x, k_p = jax.random.split(key)

    block_widths = (4, 8)
    block_depth = 2
    in_width, out_width, scale_factor = 1, 1, 4

    x = jax.random.normal(k_x, (2, in_width, 16, 16), dtype=jnp.float32)
    params = build_params(k_p, block_widths, block_depth,
                          in_width, out_width, scale_factor)

    fwd = jax.jit(functools.partial(forward, scale_factor=scale_factor))
    y = fwd(x, params)
    y = jax.block_until_ready(y)
    assert y.shape == (2, out_width, 16, 16), y.shape
    assert bool(jnp.all(jnp.isfinite(y)))
    print("KERNEL_OK")
</pallas_src>

<mosaic_0001>
module attributes {stable_mosaic.version = 11 : i64} {
  func.func @_conv3x3_kernel(%arg0: i32, %arg1: memref<1x1x512xf32, #tpu.memory_space<vmem>>, %arg2: memref<4x9xbf16, #tpu.memory_space<vmem>>, %arg3: memref<4x1xf32, #tpu.memory_space<vmem>>, %arg4: memref<9x512xf32, #tpu.memory_space<vmem>>, %arg5: memref<1x4x512xf32, #tpu.memory_space<vmem>>) attributes {dimension_semantics = [#tpu.dimension_semantics<parallel>], iteration_bounds = array<i64: 2>, scalar_prefetch = 0 : i64, scratch_operands = 0 : i64, tpu.core_type = #tpu.core_type<tc>, window_params = [{transform_indices = @transform_0, window_bounds = array<i64: 1, 1, 512>}, {pipeline_mode = #tpu.pipeline_mode<synchronous>, transform_indices = @transform_1, window_bounds = array<i64: 4, 9>}, {pipeline_mode = #tpu.pipeline_mode<synchronous>, transform_indices = @transform_2, window_bounds = array<i64: 4, 1>}, {pipeline_mode = #tpu.pipeline_mode<synchronous>, transform_indices = @transform_3, window_bounds = array<i64: 9, 512>}, {transform_indices = @transform_4, window_bounds = array<i64: 1, 4, 512>}]} {
    %c0 = arith.constant 0 : index
    %c0_0 = arith.constant 0 : index
    %c0_1 = arith.constant 0 : index
    %0 = vector.load %arg1[%c0, %c0_0, %c0_1] : memref<1x1x512xf32, #tpu.memory_space<vmem>>, vector<1x1x512xf32>
    %1 = vector.shape_cast %0 : vector<1x1x512xf32> to vector<1x512xf32>
    %c0_2 = arith.constant 0 : index
    %c0_3 = arith.constant 0 : index
    %2 = vector.load %arg2[%c0_2, %c0_3] : memref<4x9xbf16, #tpu.memory_space<vmem>>, vector<4x9xbf16>
    %c0_4 = arith.constant 0 : index
    %c0_5 = arith.constant 0 : index
    %3 = vector.load %arg3[%c0_4, %c0_5] : memref<4x1xf32, #tpu.memory_space<vmem>>, vector<4x1xf32>
    %c0_6 = arith.constant 0 : index
    %c0_7 = arith.constant 0 : index
    %4 = vector.load %arg4[%c0_6, %c0_7] : memref<9x512xf32, #tpu.memory_space<vmem>>, vector<9x512xf32>
    %c17_i32 = arith.constant 17 : i32
    %5 = tpu.dynamic_rotate %1 by %c17_i32 dim 1 : vector<1x512xf32>, i32 -> vector<1x512xf32>
    %6 = vector.extract_strided_slice %4 {offsets = [0, 0], sizes = [1, 512], strides = [1, 1]} : vector<9x512xf32> to vector<1x512xf32>
    %7 = arith.mulf %5, %6 : vector<1x512xf32>
    %c16_i32 = arith.constant 16 : i32
    %8 = tpu.dynamic_rotate %1 by %c16_i32 dim 1 : vector<1x512xf32>, i32 -> vector<1x512xf32>
    %9 = vector.extract_strided_slice %4 {offsets = [1, 0], sizes = [1, 512], strides = [1, 1]} : vector<9x512xf32> to vector<1x512xf32>
    %10 = arith.mulf %8, %9 : vector<1x512xf32>
    %c15_i32 = arith.constant 15 : i32
    %11 = tpu.dynamic_rotate %1 by %c15_i32 dim 1 : vector<1x512xf32>, i32 -> vector<1x512xf32>
    %12 = vector.extract_strided_slice %4 {offsets = [2, 0], sizes = [1, 512], strides = [1, 1]} : vector<9x512xf32> to vector<1x512xf32>
    %13 = arith.mulf %11, %12 : vector<1x512xf32>
    %c1_i32 = arith.constant 1 : i32
    %14 = tpu.dynamic_rotate %1 by %c1_i32 dim 1 : vector<1x512xf32>, i32 -> vector<1x512xf32>
    %15 = vector.extract_strided_slice %4 {offsets = [3, 0], sizes = [1, 512], strides = [1, 1]} : vector<9x512xf32> to vector<1x512xf32>
    %16 = arith.mulf %14, %15 : vector<1x512xf32>
    %17 = vector.extract_strided_slice %4 {offsets = [4, 0], sizes = [1, 512], strides = [1, 1]} : vector<9x512xf32> to vector<1x512xf32>
    %18 = arith.mulf %1, %17 : vector<1x512xf32>
    %c511_i32 = arith.constant 511 : i32
    %19 = tpu.dynamic_rotate %1 by %c511_i32 dim 1 : vector<1x512xf32>, i32 -> vector<1x512xf32>
    %20 = vector.extract_strided_slice %4 {offsets = [5, 0], sizes = [1, 512], strides = [1, 1]} : vector<9x512xf32> to vector<1x512xf32>
    %21 = arith.mulf %19, %20 : vector<1x512xf32>
    %c497_i32 = arith.constant 497 : i32
    %22 = tpu.dynamic_rotate %1 by %c497_i32 dim 1 : vector<1x512xf32>, i32 -> vector<1x512xf32>
    %23 = vector.extract_strided_slice %4 {offsets = [6, 0], sizes = [1, 512], strides = [1, 1]} : vector<9x512xf32> to vector<1x512xf32>
    %24 = arith.mulf %22, %23 : vector<1x512xf32>
    %c496_i32 = arith.constant 496 : i32
    %25 = tpu.dynamic_rotate %1 by %c496_i32 dim 1 : vector<1x512xf32>, i32 -> vector<1x512xf32>
    %26 = vector.extract_strided_slice %4 {offsets = [7, 0], sizes = [1, 512], strides = [1, 1]} : vector<9x512xf32> to vector<1x512xf32>
    %27 = arith.mulf %25, %26 : vector<1x512xf32>
    %c495_i32 = arith.constant 495 : i32
    %28 = tpu.dynamic_rotate %1 by %c495_i32 dim 1 : vector<1x512xf32>, i32 -> vector<1x512xf32>
    %29 = vector.extract_strided_slice %4 {offsets = [8, 0], sizes = [1, 512], strides = [1, 1]} : vector<9x512xf32> to vector<1x512xf32>
    %30 = arith.mulf %28, %29 : vector<1x512xf32>
    %31 = tpu.concatenate %7, %10, %13, %16, %18, %21, %24, %27, %30 in 0 : vector<1x512xf32>, vector<1x512xf32>, vector<1x512xf32>, vector<1x512xf32>, vector<1x512xf32>, vector<1x512xf32>, vector<1x512xf32>, vector<1x512xf32>, vector<1x512xf32> -> vector<9x512xf32>
    %32 = arith.truncf %31 : vector<9x512xf32> to vector<9x512xbf16>
    %cst = arith.constant dense<0.000000e+00> : vector<4x512xf32>
    %33 = tpu.matmul %2, %32, %cst {dimension_numbers = #tpu.dot_dimension_numbers<[1], [0], [0], [1], [0, 0, 1, 1], [], []>} : vector<4x9xbf16>, vector<9x512xbf16>, vector<4x512xf32> -> vector<4x512xf32>
    %34 = vector.broadcast %3 : vector<4x1xf32> to vector<4x512xf32>
    %35 = arith.addf %33, %34 : vector<4x512xf32>
    %c0_8 = arith.constant 0 : index
    %c0_9 = arith.constant 0 : index
    %c0_10 = arith.constant 0 : index
    %36 = vector.load %arg5[%c0_8, %c0_9, %c0_10] : memref<1x4x512xf32, #tpu.memory_space<vmem>>, vector<1x4x512xf32>
    %37 = vector.shape_cast %36 : vector<1x4x512xf32> to vector<4x512xf32>
    %38 = vector.shape_cast %35 : vector<4x512xf32> to vector<1x4x512xf32>
    tpu.vector_store %arg5[%c0_8, %c0_9, %c0_10], %38 {strides = array<i32>} : memref<1x4x512xf32, #tpu.memory_space<vmem>>, vector<1x4x512xf32>,
    return
  }
  func.func @transform_0(%arg0: i32) -> (i32, i32, i32) {
    %c0_i32 = arith.constant 0 : i32
    %c0_i32_0 = arith.constant 0 : i32
    %c0_i32_1 = arith.constant 0 : i32
    return %arg0, %c0_i32, %c0_i32_0 : i32, i32, i32
  }
  func.func @transform_1(%arg0: i32) -> (i32, i32) {
    %c0_i32 = arith.constant 0 : i32
    %c0_i32_0 = arith.constant 0 : i32
    %c0_i32_1 = arith.constant 0 : i32
    return %c0_i32, %c0_i32_0 : i32, i32
  }
  func.func @transform_2(%arg0: i32) -> (i32, i32) {
    %c0_i32 = arith.constant 0 : i32
    %c0_i32_0 = arith.constant 0 : i32
    %c0_i32_1 = arith.constant 0 : i32
    return %c0_i32, %c0_i32_0 : i32, i32
  }
  func.func @transform_3(%arg0: i32) -> (i32, i32) {
    %c0_i32 = arith.constant 0 : i32
    %c0_i32_0 = arith.constant 0 : i32
    %c0_i32_1 = arith.constant 0 : i32
    return %c0_i32, %c0_i32_0 : i32, i32
  }
  func.func @transform_4(%arg0: i32) -> (i32, i32, i32) {
    %c0_i32 = arith.constant 0 : i32
    %c0_i32_0 = arith.constant 0 : i32
    %c0_i32_1 = arith.constant 0 : i32
    return %arg0, %c0_i32, %c0_i32_0 : i32, i32, i32
  }
}

module attributes {stable_mosaic.version = 11 : i64} {
  func.func @_res_block_down_kernel(%arg0: i32, %arg1: i32, %arg2: memref<1x4x512xf32, #tpu.memory_space<vmem>>, %arg3: memref<1x4x36xbf16, #tpu.memory_space<vmem>>, %arg4: memref<1x4x1xf32, #tpu.memory_space<vmem>>, %arg5: memref<8x64xbf16, #tpu.memory_space<vmem>>, %arg6: memref<8x1xf32, #tpu.memory_space<vmem>>, %arg7: memref<512x32xf32, #tpu.memory_space<vmem>>, %arg8: memref<9x512xf32, #tpu.memory_space<vmem>>, %arg9: memref<1x8x32xf32, #tpu.memory_space<vmem>>, %arg10: memref<4x512xf32, #tpu.memory_space<vmem>>) attributes {dimension_semantics = [#tpu.dimension_semantics<parallel>, #tpu.dimension_semantics<arbitrary>], iteration_bounds = array<i64: 2, 2>, scalar_prefetch = 0 : i64, scratch_operands = 1 : i64, tpu.core_type = #tpu.core_type<tc>, window_params = [{transform_indices = @transform_0, window_bounds = array<i64: 1, 4, 512>}, {transform_indices = @transform_1, window_bounds = array<i64: 1, 4, 36>}, {transform_indices = @transform_2, window_bounds = array<i64: 1, 4, 1>}, {pipeline_mode = #tpu.pipeline_mode<synchronous>, transform_indices = @transform_3, window_bounds = array<i64: 8, 64>}, {pipeline_mode = #tpu.pipeline_mode<synchronous>, transform_indices = @transform_4, window_bounds = array<i64: 8, 1>}, {pipeline_mode = #tpu.pipeline_mode<synchronous>, transform_indices = @transform_5, window_bounds = array<i64: 512, 32>}, {pipeline_mode = #tpu.pipeline_mode<synchronous>, transform_indices = @transform_6, window_bounds = array<i64: 9, 512>}, {transform_indices = @transform_7, window_bounds = array<i64: 1, 8, 32>}]} {
    %c0_i32 = arith.constant 0 : i32
    %0 = arith.cmpi eq, %arg1, %c0_i32 : i32
    %1 = arith.extui %0 : i1 to i32
    %c0_i32_0 = arith.constant 0 : i32
    %2 = arith.cmpi ne, %1, %c0_i32_0 : i32
    scf.if %2 {
      %c0_16 = arith.constant 0 : index
      %c0_17 = arith.constant 0 : index
      %c0_18 = arith.constant 0 : index
      %59 = vector.load %arg2[%c0_16, %c0_17, %c0_18] : memref<1x4x512xf32, #tpu.memory_space<vmem>>, vector<1x4x512xf32>
      %60 = vector.shape_cast %59 : vector<1x4x512xf32> to vector<4x512xf32>
      %c0_19 = arith.constant 0 : index
      %c0_20 = arith.constant 0 : index
      %61 = vector.load %arg10[%c0_19, %c0_20] : memref<4x512xf32, #tpu.memory_space<vmem>>, vector<4x512xf32>
      tpu.vector_store %arg10[%c0_19, %c0_20], %60 {strides = array<i32>} : memref<4x512xf32, #tpu.memory_space<vmem>>, vector<4x512xf32>,
    } else {
    }
    %c0 = arith.constant 0 : index
    %c0_1 = arith.constant 0 : index
    %3 = vector.load %arg10[%c0, %c0_1] : memref<4x512xf32, #tpu.memory_space<vmem>>, vector<4x512xf32>
    %cst = arith.constant 0.000000e+00 : f32
    %4 = vector.broadcast %cst : f32 to vector<4x512xf32>
    %5 = arith.cmpf ogt, %3, %4 : vector<4x512xf32>
    %cst_2 = arith.constant 0.00999999977 : f32
    %6 = vector.broadcast %cst_2 : f32 to vector<4x512xf32>
    %7 = arith.mulf %6, %3 : vector<4x512xf32>
    %8 = arith.select %5, %3, %7 : vector<4x512xi1>, vector<4x512xf32>
    %c0_3 = arith.constant 0 : index
    %c0_4 = arith.constant 0 : index
    %c0_5 = arith.constant 0 : index
    %9 = vector.load %arg3[%c0_3, %c0_4, %c0_5] : memref<1x4x36xbf16, #tpu.memory_space<vmem>>, vector<1x4x36xbf16>
    %10 = vector.shape_cast %9 : vector<1x4x36xbf16> to vector<4x36xbf16>
    %c0_6 = arith.constant 0 : index
    %c0_7 = arith.constant 0 : index
    %c0_8 = arith.constant 0 : index
    %11 = vector.load %arg4[%c0_6, %c0_7, %c0_8] : memref<1x4x1xf32, #tpu.memory_space<vmem>>, vector<1x4x1xf32>
    %12 = vector.shape_cast %11 : vector<1x4x1xf32> to vector<4x1xf32>
    %c0_9 = arith.constant 0 : index
    %c0_10 = arith.constant 0 : index
    %13 = vector.load %arg8[%c0_9, %c0_10] : memref<9x512xf32, #tpu.memory_space<vmem>>, vector<9x512xf32>
    %c17_i32 = arith.constant 17 : i32
    %14 = tpu.dynamic_rotate %8 by %c17_i32 dim 1 : vector<4x512xf32>, i32 -> vector<4x512xf32>
    %15 = vector.extract_strided_slice %13 {offsets = [0, 0], sizes = [1, 512], strides = [1, 1]} : vector<9x512xf32> to vector<1x512xf32>
    %16 = vector.broadcast %15 : vector<1x512xf32> to vector<4x512xf32>
    %17 = arith.mulf %14, %16 : vector<4x512xf32>
    %c16_i32 = arith.constant 16 : i32
    %18 = tpu.dynamic_rotate %8 by %c16_i32 dim 1 : vector<4x512xf32>, i32 -> vector<4x512xf32>
    %19 = vector.extract_strided_slice %13 {offsets = [1, 0], sizes = [1, 512], strides = [1, 1]} : vector<9x512xf32> to vector<1x512xf32>
    %20 = vector.broadcast %19 : vector<1x512xf32> to vector<4x512xf32>
    %21 = arith.mulf %18, %20 : vector<4x512xf32>
    %c15_i32 = arith.constant 15 : i32
    %22 = tpu.dynamic_rotate %8 by %c15_i32 dim 1 : vector<4x512xf32>, i32 -> vector<4x512xf32>
    %23 = vector.extract_strided_slice %13 {offsets = [2, 0], sizes = [1, 512], strides = [1, 1]} : vector<9x512xf32> to vector<1x512xf32>
    %24 = vector.broadcast %23 : vector<1x512xf32> to vector<4x512xf32>
    %25 = arith.mulf %22, %24 : vector<4x512xf32>
    %c1_i32 = arith.constant 1 : i32
    %26 = tpu.dynamic_rotate %8 by %c1_i32 dim 1 : vector<4x512xf32>, i32 -> vector<4x512xf32>
    %27 = vector.extract_strided_slice %13 {offsets = [3, 0], sizes = [1, 512], strides = [1, 1]} : vector<9x512xf32> to vector<1x512xf32>
    %28 = vector.broadcast %27 : vector<1x512xf32> to vector<4x512xf32>
    %29 = arith.mulf %26, %28 : vector<4x512xf32>
    %30 = vector.extract_strided_slice %13 {offsets = [4, 0], sizes = [1, 512], strides = [1, 1]} : vector<9x512xf32> to vector<1x512xf32>
    %31 = vector.broadcast %30 : vector<1x512xf32> to vector<4x512xf32>
    %32 = arith.mulf %8, %31 : vector<4x512xf32>
    %c511_i32 = arith.constant 511 : i32
    %33 = tpu.dynamic_rotate %8 by %c511_i32 dim 1 : vector<4x512xf32>, i32 -> vector<4x512xf32>
    %34 = vector.extract_strided_slice %13 {offsets = [5, 0], sizes = [1, 512], strides = [1, 1]} : vector<9x512xf32> to vector<1x512xf32>
    %35 = vector.broadcast %34 : vector<1x512xf32> to vector<4x512xf32>
    %36 = arith.mulf %33, %35 : vector<4x512xf32>
    %c497_i32 = arith.constant 497 : i32
    %37 = tpu.dynamic_rotate %8 by %c497_i32 dim 1 : vector<4x512xf32>, i32 -> vector<4x512xf32>
    %38 = vector.extract_strided_slice %13 {offsets = [6, 0], sizes = [1, 512], strides = [1, 1]} : vector<9x512xf32> to vector<1x512xf32>
    %39 = vector.broadcast %38 : vector<1x512xf32> to vector<4x512xf32>
    %40 = arith.mulf %37, %39 : vector<4x512xf32>
    %c496_i32 = arith.constant 496 : i32
    %41 = tpu.dynamic_rotate %8 by %c496_i32 dim 1 : vector<4x512xf32>, i32 -> vector<4x512xf32>
    %42 = vector.extract_strided_slice %13 {offsets = [7, 0], sizes = [1, 512], strides = [1, 1]} : vector<9x512xf32> to vector<1x512xf32>
    %43 = vector.broadcast %42 : vector<1x512xf32> to vector<4x512xf32>
    %44 = arith.mulf %41, %43 : vector<4x512xf32>
    %c495_i32 = arith.constant 495 : i32
    %45 = tpu.dynamic_rotate %8 by %c495_i32 dim 1 : vector<4x512xf32>, i32 -> vector<4x512xf32>
    %46 = vector.extract_strided_slice %13 {offsets = [8, 0], sizes = [1, 512], strides = [1, 1]} : vector<9x512xf32> to vector<1x512xf32>
    %47 = vector.broadcast %46 : vector<1x512xf32> to vector<4x512xf32>
    %48 = arith.mulf %45, %47 : vector<4x512xf32>
    %49 = tpu.concatenate %17, %21, %25, %29, %32, %36, %40, %44, %48 in 0 : vector<4x512xf32>, vector<4x512xf32>, vector<4x512xf32>, vector<4x512xf32>, vector<4x512xf32>, vector<4x512xf32>, vector<4x512xf32>, vector<4x512xf32>, vector<4x512xf32> -> vector<36x512xf32>
    %50 = arith.truncf %49 : vector<36x512xf32> to vector<36x512xbf16>
    %cst_11 = arith.constant dense<0.000000e+00> : vector<4x512xf32>
    %51 = tpu.matmul %10, %50, %cst_11 {dimension_numbers = #tpu.dot_dimension_numbers<[1], [0], [0], [1], [0, 0, 1, 1], [], []>} : vector<4x36xbf16>, vector<36x512xbf16>, vector<4x512xf32> -> vector<4x512xf32>
    %52 = vector.broadcast %12 : vector<4x1xf32> to vector<4x512xf32>
    %53 = arith.addf %51, %52 : vector<4x512xf32>
    %54 = arith.addf %3, %53 : vector<4x512xf32>
    %c0_12 = arith.constant 0 : index
    %c0_13 = arith.constant 0 : index
    %55 = vector.load %arg10[%c0_12, %c0_13] : memref<4x512xf32, #tpu.memory_space<vmem>>, vector<4x512xf32>
    tpu.vector_store %arg10[%c0_12, %c0_13], %54 {strides = array<i32>} : memref<4x512xf32, #tpu.memory_space<vmem>>, vector<4x512xf32>,
    %c1_i32_14 = arith.constant 1 : i32
    %56 = arith.cmpi eq, %arg1, %c1_i32_14 : i32
    %57 = arith.extui %56 : i1 to i32
    %c0_i32_15 = arith.constant 0 : i32
    %58 = arith.cmpi ne, %57, %c0_i32_15 : i32
    scf.if %58 {
      %c511_i32_16 = arith.constant 511 : i32
      %59 = tpu.dynamic_rotate %54 by %c511_i32_16 dim 1 : vector<4x512xf32>, i32 -> vector<4x512xf32>
      %c510_i32 = arith.constant 510 : i32
      %60 = tpu.dynamic_rotate %54 by %c510_i32 dim 1 : vector<4x512xf32>, i32 -> vector<4x512xf32>
      %c509_i32 = arith.constant 509 : i32
      %61 = tpu.dynamic_rotate %54 by %c509_i32 dim 1 : vector<4x512xf32>, i32 -> vector<4x512xf32>
      %c496_i32_17 = arith.constant 496 : i32
      %62 = tpu.dynamic_rotate %54 by %c496_i32_17 dim 1 : vector<4x512xf32>, i32 -> vector<4x512xf32>
      %c495_i32_18 = arith.constant 495 : i32
      %63 = tpu.dynamic_rotate %54 by %c495_i32_18 dim 1 : vector<4x512xf32>, i32 -> vector<4x512xf32>
      %c494_i32 = arith.constant 494 : i32
      %64 = tpu.dynamic_rotate %54 by %c494_i32 dim 1 : vector<4x512xf32>, i32 -> vector<4x512xf32>
      %c493_i32 = arith.constant 493 : i32
      %65 = tpu.dynamic_rotate %54 by %c493_i32 dim 1 : vector<4x512xf32>, i32 -> vector<4x512xf32>
      %c480_i32 = arith.constant 480 : i32
      %66 = tpu.dynamic_rotate %54 by %c480_i32 dim 1 : vector<4x512xf32>, i32 -> vector<4x512xf32>
      %c479_i32 = arith.constant 479 : i32
      %67 = tpu.dynamic_rotate %54 by %c479_i32 dim 1 : vector<4x512xf32>, i32 -> vector<4x512xf32>
      %c478_i32 = arith.constant 478 : i32
      %68 = tpu.dynamic_rotate %54 by %c478_i32 dim 1 : vector<4x512xf32>, i32 -> vector<4x512xf32>
      %c477_i32 = arith.constant 477 : i32
      %69 = tpu.dynamic_rotate %54 by %c477_i32 dim 1 : vector<4x512xf32>, i32 -> vector<4x512xf32>
      %c464_i32 = arith.constant 464 : i32
      %70 = tpu.dynamic_rotate %54 by %c464_i32 dim 1 : vector<4x512xf32>, i32 -> vector<4x512xf32>
      %c463_i32 = arith.constant 463 : i32
      %71 = tpu.dynamic_rotate %54 by %c463_i32 dim 1 : vector<4x512xf32>, i32 -> vector<4x512xf32>
      %c462_i32 = arith.constant 462 : i32
      %72 = tpu.dynamic_rotate %54 by %c462_i32 dim 1 : vector<4x512xf32>, i32 -> vector<4x512xf32>
      %c461_i32 = arith.constant 461 : i32
      %73 = tpu.dynamic_rotate %54 by %c461_i32 dim 1 : vector<4x512xf32>, i32 -> vector<4x512xf32>
      %74 = tpu.concatenate %54, %59, %60, %61, %62, %63, %64, %65, %66, %67, %68, %69, %70, %71, %72, %73 in 0 : vector<4x512xf32>, vector<4x512xf32>, vector<4x512xf32>, vector<4x512xf32>, vector<4x512xf32>, vector<4x512xf32>, vector<4x512xf32>, vector<4x512xf32>, vector<4x512xf32>, vector<4x512xf32>, vector<4x512xf32>, vector<4x512xf32>, vector<4x512xf32>, vector<4x512xf32>, vector<4x512xf32>, vector<4x512xf32> -> vector<64x512xf32>
      %75 = arith.truncf %74 : vector<64x512xf32> to vector<64x512xbf16>
      %c0_19 = arith.constant 0 : index
      %c0_20 = arith.constant 0 : index
      %76 = vector.load %arg5[%c0_19, %c0_20] : memref<8x64xbf16, #tpu.memory_space<vmem>>, vector<8x64xbf16>
      %cst_21 = arith.constant dense<0.000000e+00> : vector<8x512xf32>
      %77 = tpu.matmul %76, %75, %cst_21 {dimension_numbers = #tpu.dot_dimension_numbers<[1], [0], [0], [1], [0, 0, 1, 1], [], []>} : vector<8x64xbf16>, vector<64x512xbf16>, vector<8x512xf32> -> vector<8x512xf32>
      %c0_22 = arith.constant 0 : index
      %c0_23 = arith.constant 0 : index
      %78 = vector.load %arg7[%c0_22, %c0_23] : memref<512x32xf32, #tpu.memory_space<vmem>>, vector<512x32xf32>
      %cst_24 = arith.constant dense<0.000000e+00> : vector<8x32xf32>
      %79 = tpu.matmul %77, %78, %cst_24 {dimension_numbers = #tpu.dot_dimension_numbers<[1], [0], [0], [1], [0, 0, 1, 1], [], []>} : vector<8x512xf32>, vector<512x32xf32>, vector<8x32xf32> -> vector<8x32xf32>
      %c0_25 = arith.constant 0 : index
      %c0_26 = arith.constant 0 : index
      %80 = vector.load %arg6[%c0_25, %c0_26] : memref<8x1xf32, #tpu.memory_space<vmem>>, vector<8x1xf32>
      %81 = vector.broadcast %80 : vector<8x1xf32> to vector<8x32xf32>
      %82 = arith.addf %79, %81 : vector<8x32xf32>
      %c0_27 = arith.constant 0 : index
      %c0_28 = arith.constant 0 : index
      %c0_29 = arith.constant 0 : index
      %83 = vector.load %arg9[%c0_27, %c0_28, %c0_29] : memref<1x8x32xf32, #tpu.memory_space<vmem>>, vector<1x8x32xf32>
      %84 = vector.shape_cast %83 : vector<1x8x32xf32> to vector<8x32xf32>
      %85 = vector.shape_cast %82 : vector<8x32xf32> to vector<1x8x32xf32>
      tpu.vector_store %arg9[%c0_27, %c0_28, %c0_29], %85 {strides = array<i32>} : memref<1x8x32xf32, #tpu.memory_space<vmem>>, vector<1x8x32xf32>,
    } else {
    }
    return
  }
  func.func @transform_0(%arg0: i32, %arg1: i32) -> (i32, i32, i32) {
    %c0_i32 = arith.constant 0 : i32
    %c0_i32_0 = arith.constant 0 : i32
    %c0_i32_1 = arith.constant 0 : i32
    return %arg0, %c0_i32, %c0_i32_0 : i32, i32, i32
  }
  func.func @transform_1(%arg0: i32, %arg1: i32) -> (i32, i32, i32) {
    %c0_i32 = arith.constant 0 : i32
    %c0_i32_0 = arith.constant 0 : i32
    %c0_i32_1 = arith.constant 0 : i32
    return %arg1, %c0_i32, %c0_i32_0 : i32, i32, i32
  }
  func.func @transform_2(%arg0: i32, %arg1: i32) -> (i32, i32, i32) {
    %c0_i32 = arith.constant 0 : i32
    %c0_i32_0 = arith.constant 0 : i32
    %c0_i32_1 = arith.constant 0 : i32
    return %arg1, %c0_i32, %c0_i32_0 : i32, i32, i32
  }
  func.func @transform_3(%arg0: i32, %arg1: i32) -> (i32, i32) {
    %c0_i32 = arith.constant 0 : i32
    %c0_i32_0 = arith.constant 0 : i32
    %c0_i32_1 = arith.constant 0 : i32
    return %c0_i32, %c0_i32_0 : i32, i32
  }
  func.func @transform_4(%arg0: i32, %arg1: i32) -> (i32, i32) {
    %c0_i32 = arith.constant 0 : i32
    %c0_i32_0 = arith.constant 0 : i32
    %c0_i32_1 = arith.constant 0 : i32
    return %c0_i32, %c0_i32_0 : i32, i32
  }
  func.func @transform_5(%arg0: i32, %arg1: i32) -> (i32, i32) {
    %c0_i32 = arith.constant 0 : i32
    %c0_i32_0 = arith.constant 0 : i32
    %c0_i32_1 = arith.constant 0 : i32
    return %c0_i32, %c0_i32_0 : i32, i32
  }
  func.func @transform_6(%arg0: i32, %arg1: i32) -> (i32, i32) {
    %c0_i32 = arith.constant 0 : i32
    %c0_i32_0 = arith.constant 0 : i32
    %c0_i32_1 = arith.constant 0 : i32
    return %c0_i32, %c0_i32_0 : i32, i32
  }
  func.func @transform_7(%arg0: i32, %arg1: i32) -> (i32, i32, i32) {
    %c0_i32 = arith.constant 0 : i32
    %c0_i32_0 = arith.constant 0 : i32
    %c0_i32_1 = arith.constant 0 : i32
    return %arg0, %c0_i32, %c0_i32_0 : i32, i32, i32
  }
}

module attributes {stable_mosaic.version = 11 : i64} {
  func.func @_res_block_kernel(%arg0: i32, %arg1: i32, %arg2: memref<1x8x32xf32, #tpu.memory_space<vmem>>, %arg3: memref<1x8x72xbf16, #tpu.memory_space<vmem>>, %arg4: memref<1x8x1xf32, #tpu.memory_space<vmem>>, %arg5: memref<9x32xf32, #tpu.memory_space<vmem>>, %arg6: memref<1x8x32xf32, #tpu.memory_space<vmem>>, %arg7: memref<8x32xf32, #tpu.memory_space<vmem>>) attributes {dimension_semantics = [#tpu.dimension_semantics<parallel>, #tpu.dimension_semantics<arbitrary>], iteration_bounds = array<i64: 2, 2>, scalar_prefetch = 0 : i64, scratch_operands = 1 : i64, tpu.core_type = #tpu.core_type<tc>, window_params = [{transform_indices = @transform_0, window_bounds = array<i64: 1, 8, 32>}, {transform_indices = @transform_1, window_bounds = array<i64: 1, 8, 72>}, {transform_indices = @transform_2, window_bounds = array<i64: 1, 8, 1>}, {pipeline_mode = #tpu.pipeline_mode<synchronous>, transform_indices = @transform_3, window_bounds = array<i64: 9, 32>}, {transform_indices = @transform_4, window_bounds = array<i64: 1, 8, 32>}]} {
    %c0_i32 = arith.constant 0 : i32
    %0 = arith.cmpi eq, %arg1, %c0_i32 : i32
    %1 = arith.extui %0 : i1 to i32
    %c0_i32_0 = arith.constant 0 : i32
    %2 = arith.cmpi ne, %1, %c0_i32_0 : i32
    scf.if %2 {
      %c0_15 = arith.constant 0 : index
      %c0_16 = arith.constant 0 : index
      %c0_17 = arith.constant 0 : index
      %75 = vector.load %arg2[%c0_15, %c0_16, %c0_17] : memref<1x8x32xf32, #tpu.memory_space<vmem>>, vector<1x8x32xf32>
      %76 = vector.shape_cast %75 : vector<1x8x32xf32> to vector<8x32xf32>
      %c0_18 = arith.constant 0 : index
      %c0_19 = arith.constant 0 : index
      %77 = vector.load %arg7[%c0_18, %c0_19] : memref<8x32xf32, #tpu.memory_space<vmem>>, vector<8x32xf32>
      tpu.vector_store %arg7[%c0_18, %c0_19], %76 {strides = array<i32>} : memref<8x32xf32, #tpu.memory_space<vmem>>, vector<8x32xf32>,
    } else {
    }
    %c0 = arith.constant 0 : index
    %c0_1 = arith.constant 0 : index
    %3 = vector.load %arg7[%c0, %c0_1] : memref<8x32xf32, #tpu.memory_space<vmem>>, vector<8x32xf32>
    %cst = arith.constant 0.000000e+00 : f32
    %4 = vector.broadcast %cst : f32 to vector<8x32xf32>
    %5 = arith.cmpf ogt, %3, %4 : vector<8x32xf32>
    %cst_2 = arith.constant 0.00999999977 : f32
    %6 = vector.broadcast %cst_2 : f32 to vector<8x32xf32>
    %7 = arith.mulf %6, %3 : vector<8x32xf32>
    %8 = arith.select %5, %3, %7 : vector<8x32xi1>, vector<8x32xf32>
    %c0_3 = arith.constant 0 : index
    %c0_4 = arith.constant 0 : index
    %c0_5 = arith.constant 0 : index
    %9 = vector.load %arg3[%c0_3, %c0_4, %c0_5] : memref<1x8x72xbf16, #tpu.memory_space<vmem>>, vector<1x8x72xbf16>
    %10 = vector.shape_cast %9 : vector<1x8x72xbf16> to vector<8x72xbf16>
    %c0_6 = arith.constant 0 : index
    %c0_7 = arith.constant 0 : index
    %c0_8 = arith.constant 0 : index
    %11 = vector.load %arg4[%c0_6, %c0_7, %c0_8] : memref<1x8x1xf32, #tpu.memory_space<vmem>>, vector<1x8x1xf32>
    %12 = vector.shape_cast %11 : vector<1x8x1xf32> to vector<8x1xf32>
    %c0_9 = arith.constant 0 : index
    %c0_10 = arith.constant 0 : index
    %13 = vector.load %arg5[%c0_9, %c0_10] : memref<9x32xf32, #tpu.memory_space<vmem>>, vector<9x32xf32>
    %14 = vector.extract_strided_slice %8 {offsets = [0, 27], sizes = [8, 5], strides = [1, 1]} : vector<8x32xf32> to vector<8x5xf32>
    %15 = vector.extract_strided_slice %8 {offsets = [0, 0], sizes = [8, 27], strides = [1, 1]} : vector<8x32xf32> to vector<8x27xf32>
    %16 = tpu.concatenate %14, %15 in 1 : vector<8x5xf32>, vector<8x27xf32> -> vector<8x32xf32>
    %17 = vector.extract_strided_slice %13 {offsets = [0, 0], sizes = [1, 32], strides = [1, 1]} : vector<9x32xf32> to vector<1x32xf32>
    %18 = vector.broadcast %17 : vector<1x32xf32> to vector<8x32xf32>
    %19 = arith.mulf %16, %18 : vector<8x32xf32>
    %20 = vector.extract_strided_slice %8 {offsets = [0, 28], sizes = [8, 4], strides = [1, 1]} : vector<8x32xf32> to vector<8x4xf32>
    %21 = vector.extract_strided_slice %8 {offsets = [0, 0], sizes = [8, 28], strides = [1, 1]} : vector<8x32xf32> to vector<8x28xf32>
    %22 = tpu.concatenate %20, %21 in 1 : vector<8x4xf32>, vector<8x28xf32> -> vector<8x32xf32>
    %23 = vector.extract_strided_slice %13 {offsets = [1, 0], sizes = [1, 32], strides = [1, 1]} : vector<9x32xf32> to vector<1x32xf32>
    %24 = vector.broadcast %23 : vector<1x32xf32> to vector<8x32xf32>
    %25 = arith.mulf %22, %24 : vector<8x32xf32>
    %26 = vector.extract_strided_slice %8 {offsets = [0, 29], sizes = [8, 3], strides = [1, 1]} : vector<8x32xf32> to vector<8x3xf32>
    %27 = vector.extract_strided_slice %8 {offsets = [0, 0], sizes = [8, 29], strides = [1, 1]} : vector<8x32xf32> to vector<8x29xf32>
    %28 = tpu.concatenate %26, %27 in 1 : vector<8x3xf32>, vector<8x29xf32> -> vector<8x32xf32>
    %29 = vector.extract_strided_slice %13 {offsets = [2, 0], sizes = [1, 32], strides = [1, 1]} : vector<9x32xf32> to vector<1x32xf32>
    %30 = vector.broadcast %29 : vector<1x32xf32> to vector<8x32xf32>
    %31 = arith.mulf %28, %30 : vector<8x32xf32>
    %32 = vector.extract_strided_slice %8 {offsets = [0, 31], sizes = [8, 1], strides = [1, 1]} : vector<8x32xf32> to vector<8x1xf32>
    %33 = vector.extract_strided_slice %8 {offsets = [0, 0], sizes = [8, 31], strides = [1, 1]} : vector<8x32xf32> to vector<8x31xf32>
    %34 = tpu.concatenate %32, %33 in 1 : vector<8x1xf32>, vector<8x31xf32> -> vector<8x32xf32>
    %35 = vector.extract_strided_slice %13 {offsets = [3, 0], sizes = [1, 32], strides = [1, 1]} : vector<9x32xf32> to vector<1x32xf32>
    %36 = vector.broadcast %35 : vector<1x32xf32> to vector<8x32xf32>
    %37 = arith.mulf %34, %36 : vector<8x32xf32>
    %38 = vector.extract_strided_slice %13 {offsets = [4, 0], sizes = [1, 32], strides = [1, 1]} : vector<9x32xf32> to vector<1x32xf32>
    %39 = vector.broadcast %38 : vector<1x32xf32> to vector<8x32xf32>
    %40 = arith.mulf %8, %39 : vector<8x32xf32>
    %41 = vector.extract_strided_slice %8 {offsets = [0, 1], sizes = [8, 31], strides = [1, 1]} : vector<8x32xf32> to vector<8x31xf32>
    %42 = vector.extract_strided_slice %8 {offsets = [0, 0], sizes = [8, 1], strides = [1, 1]} : vector<8x32xf32> to vector<8x1xf32>
    %43 = tpu.concatenate %41, %42 in 1 : vector<8x31xf32>, vector<8x1xf32> -> vector<8x32xf32>
    %44 = vector.extract_strided_slice %13 {offsets = [5, 0], sizes = [1, 32], strides = [1, 1]} : vector<9x32xf32> to vector<1x32xf32>
    %45 = vector.broadcast %44 : vector<1x32xf32> to vector<8x32xf32>
    %46 = arith.mulf %43, %45 : vector<8x32xf32>
    %47 = vector.extract_strided_slice %8 {offsets = [0, 3], sizes = [8, 29], strides = [1, 1]} : vector<8x32xf32> to vector<8x29xf32>
    %48 = vector.extract_strided_slice %8 {offsets = [0, 0], sizes = [8, 3], strides = [1, 1]} : vector<8x32xf32> to vector<8x3xf32>
    %49 = tpu.concatenate %47, %48 in 1 : vector<8x29xf32>, vector<8x3xf32> -> vector<8x32xf32>
    %50 = vector.extract_strided_slice %13 {offsets = [6, 0], sizes = [1, 32], strides = [1, 1]} : vector<9x32xf32> to vector<1x32xf32>
    %51 = vector.broadcast %50 : vector<1x32xf32> to vector<8x32xf32>
    %52 = arith.mulf %49, %51 : vector<8x32xf32>
    %53 = vector.extract_strided_slice %8 {offsets = [0, 4], sizes = [8, 28], strides = [1, 1]} : vector<8x32xf32> to vector<8x28xf32>
    %54 = vector.extract_strided_slice %8 {offsets = [0, 0], sizes = [8, 4], strides = [1, 1]} : vector<8x32xf32> to vector<8x4xf32>
    %55 = tpu.concatenate %53, %54 in 1 : vector<8x28xf32>, vector<8x4xf32> -> vector<8x32xf32>
    %56 = vector.extract_strided_slice %13 {offsets = [7, 0], sizes = [1, 32], strides = [1, 1]} : vector<9x32xf32> to vector<1x32xf32>
    %57 = vector.broadcast %56 : vector<1x32xf32> to vector<8x32xf32>
    %58 = arith.mulf %55, %57 : vector<8x32xf32>
    %59 = vector.extract_strided_slice %8 {offsets = [0, 5], sizes = [8, 27], strides = [1, 1]} : vector<8x32xf32> to vector<8x27xf32>
    %60 = vector.extract_strided_slice %8 {offsets = [0, 0], sizes = [8, 5], strides = [1, 1]} : vector<8x32xf32> to vector<8x5xf32>
    %61 = tpu.concatenate %59, %60 in 1 : vector<8x27xf32>, vector<8x5xf32> -> vector<8x32xf32>
    %62 = vector.extract_strided_slice %13 {offsets = [8, 0], sizes = [1, 32], strides = [1, 1]} : vector<9x32xf32> to vector<1x32xf32>
    %63 = vector.broadcast %62 : vector<1x32xf32> to vector<8x32xf32>
    %64 = arith.mulf %61, %63 : vector<8x32xf32>
    %65 = tpu.concatenate %19, %25, %31, %37, %40, %46, %52, %58, %64 in 0 : vector<8x32xf32>, vector<8x32xf32>, vector<8x32xf32>, vector<8x32xf32>, vector<8x32xf32>, vector<8x32xf32>, vector<8x32xf32>, vector<8x32xf32>, vector<8x32xf32> -> vector<72x32xf32>
    %66 = arith.truncf %65 : vector<72x32xf32> to vector<72x32xbf16>
    %cst_11 = arith.constant dense<0.000000e+00> : vector<8x32xf32>
    %67 = tpu.matmul %10, %66, %cst_11 {dimension_numbers = #tpu.dot_dimension_numbers<[1], [0], [0], [1], [0, 0, 1, 1], [], []>} : vector<8x72xbf16>, vector<72x32xbf16>, vector<8x32xf32> -> vector<8x32xf32>
    %68 = vector.broadcast %12 : vector<8x1xf32> to vector<8x32xf32>
    %69 = arith.addf %67, %68 : vector<8x32xf32>
    %70 = arith.addf %3, %69 : vector<8x32xf32>
    %c0_12 = arith.constant 0 : index
    %c0_13 = arith.constant 0 : index
    %71 = vector.load %arg7[%c0_12, %c0_13] : memref<8x32xf32, #tpu.memory_space<vmem>>, vector<8x32xf32>
    tpu.vector_store %arg7[%c0_12, %c0_13], %70 {strides = array<i32>} : memref<8x32xf32, #tpu.memory_space<vmem>>, vector<8x32xf32>,
    %c1_i32 = arith.constant 1 : i32
    %72 = arith.cmpi eq, %arg1, %c1_i32 : i32
    %73 = arith.extui %72 : i1 to i32
    %c0_i32_14 = arith.constant 0 : i32
    %74 = arith.cmpi ne, %73, %c0_i32_14 : i32
    scf.if %74 {
      %c0_15 = arith.constant 0 : index
      %c0_16 = arith.constant 0 : index
      %c0_17 = arith.constant 0 : index
      %75 = vector.load %arg6[%c0_15, %c0_16, %c0_17] : memref<1x8x32xf32, #tpu.memory_space<vmem>>, vector<1x8x32xf32>
      %76 = vector.shape_cast %75 : vector<1x8x32xf32> to vector<8x32xf32>
      %77 = vector.shape_cast %70 : vector<8x32xf32> to vector<1x8x32xf32>
      tpu.vector_store %arg6[%c0_15, %c0_16, %c0_17], %77 {strides = array<i32>} : memref<1x8x32xf32, #tpu.memory_space<vmem>>, vector<1x8x32xf32>,
    } else {
    }
    return
  }
  func.func @transform_0(%arg0: i32, %arg1: i32) -> (i32, i32, i32) {
    %c0_i32 = arith.constant 0 : i32
    %c0_i32_0 = arith.constant 0 : i32
    %c0_i32_1 = arith.constant 0 : i32
    return %arg0, %c0_i32, %c0_i32_0 : i32, i32, i32
  }
  func.func @transform_1(%arg0: i32, %arg1: i32) -> (i32, i32, i32) {
    %c0_i32 = arith.constant 0 : i32
    %c0_i32_0 = arith.constant 0 : i32
    %c0_i32_1 = arith.constant 0 : i32
    return %arg1, %c0_i32, %c0_i32_0 : i32, i32, i32
  }
  func.func @transform_2(%arg0: i32, %arg1: i32) -> (i32, i32, i32) {
    %c0_i32 = arith.constant 0 : i32
    %c0_i32_0 = arith.constant 0 : i32
    %c0_i32_1 = arith.constant 0 : i32
    return %arg1, %c0_i32, %c0_i32_0 : i32, i32, i32
  }
  func.func @transform_3(%arg0: i32, %arg1: i32) -> (i32, i32) {
    %c0_i32 = arith.constant 0 : i32
    %c0_i32_0 = arith.constant 0 : i32
    %c0_i32_1 = arith.constant 0 : i32
    return %c0_i32, %c0_i32_0 : i32, i32
  }
  func.func @transform_4(%arg0: i32, %arg1: i32) -> (i32, i32, i32) {
    %c0_i32 = arith.constant 0 : i32
    %c0_i32_0 = arith.constant 0 : i32
    %c0_i32_1 = arith.constant 0 : i32
    return %arg0, %c0_i32, %c0_i32_0 : i32, i32, i32
  }
}

module attributes {stable_mosaic.version = 11 : i64} {
  func.func @_res_block_up_merge_kernel(%arg0: i32, %arg1: i32, %arg2: memref<1x8x32xf32, #tpu.memory_space<vmem>>, %arg3: memref<1x4x512xf32, #tpu.memory_space<vmem>>, %arg4: memref<4x8xbf16, #tpu.memory_space<vmem>>, %arg5: memref<4x1xf32, #tpu.memory_space<vmem>>, %arg6: memref<32x512xf32, #tpu.memory_space<vmem>>, %arg7: memref<1x4x36xbf16, #tpu.memory_space<vmem>>, %arg8: memref<1x4x1xf32, #tpu.memory_space<vmem>>, %arg9: memref<4x4xbf16, #tpu.memory_space<vmem>>, %arg10: memref<4x4xbf16, #tpu.memory_space<vmem>>, %arg11: memref<4x1xf32, #tpu.memory_space<vmem>>, %arg12: memref<1x36xbf16, #tpu.memory_space<vmem>>, %arg13: memref<1x1xf32, #tpu.memory_space<vmem>>, %arg14: memref<9x512xf32, #tpu.memory_space<vmem>>, %arg15: memref<1x1x512xf32, #tpu.memory_space<vmem>>, %arg16: memref<4x512xf32, #tpu.memory_space<vmem>>) attributes {dimension_semantics = [#tpu.dimension_semantics<parallel>, #tpu.dimension_semantics<arbitrary>], iteration_bounds = array<i64: 2, 2>, scalar_prefetch = 0 : i64, scratch_operands = 1 : i64, tpu.core_type = #tpu.core_type<tc>, window_params = [{transform_indices = @transform_0, window_bounds = array<i64: 1, 8, 32>}, {transform_indices = @transform_1, window_bounds = array<i64: 1, 4, 512>}, {pipeline_mode = #tpu.pipeline_mode<synchronous>, transform_indices = @transform_2, window_bounds = array<i64: 4, 8>}, {pipeline_mode = #tpu.pipeline_mode<synchronous>, transform_indices = @transform_3, window_bounds = array<i64: 4, 1>}, {pipeline_mode = #tpu.pipeline_mode<synchronous>, transform_indices = @transform_4, window_bounds = array<i64: 32, 512>}, {transform_indices = @transform_5, window_bounds = array<i64: 1, 4, 36>}, {transform_indices = @transform_6, window_bounds = array<i64: 1, 4, 1>}, {pipeline_mode = #tpu.pipeline_mode<synchronous>, transform_indices = @transform_7, window_bounds = array<i64: 4, 4>}, {pipeline_mode = #tpu.pipeline_mode<synchronous>, transform_indices = @transform_8, window_bounds = array<i64: 4, 4>}, {pipeline_mode = #tpu.pipeline_mode<synchronous>, transform_indices = @transform_9, window_bounds = array<i64: 4, 1>}, {pipeline_mode = #tpu.pipeline_mode<synchronous>, transform_indices = @transform_10, window_bounds = array<i64: 1, 36>}, {pipeline_mode = #tpu.pipeline_mode<synchronous>, transform_indices = @transform_11, window_bounds = array<i64: 1, 1>}, {pipeline_mode = #tpu.pipeline_mode<synchronous>, transform_indices = @transform_12, window_bounds = array<i64: 9, 512>}, {transform_indices = @transform_13, window_bounds = array<i64: 1, 1, 512>}]} {
    %c0_i32 = arith.constant 0 : i32
    %0 = arith.cmpi eq, %arg1, %c0_i32 : i32
    %1 = arith.extui %0 : i1 to i32
    %c0_i32_0 = arith.constant 0 : i32
    %2 = arith.cmpi ne, %1, %c0_i32_0 : i32
    scf.if %2 {
      %c0_16 = arith.constant 0 : index
      %c0_17 = arith.constant 0 : index
      %59 = vector.load %arg4[%c0_16, %c0_17] : memref<4x8xbf16, #tpu.memory_space<vmem>>, vector<4x8xbf16>
      %c0_18 = arith.constant 0 : index
      %c0_19 = arith.constant 0 : index
      %c0_20 = arith.constant 0 : index
      %60 = vector.load %arg2[%c0_18, %c0_19, %c0_20] : memref<1x8x32xf32, #tpu.memory_space<vmem>>, vector<1x8x32xf32>
      %61 = vector.shape_cast %60 : vector<1x8x32xf32> to vector<8x32xf32>
      %62 = arith.truncf %61 : vector<8x32xf32> to vector<8x32xbf16>
      %cst_21 = arith.constant dense<0.000000e+00> : vector<4x32xf32>
      %63 = tpu.matmul %59, %62, %cst_21 {dimension_numbers = #tpu.dot_dimension_numbers<[1], [0], [0], [1], [0, 0, 1, 1], [], []>} : vector<4x8xbf16>, vector<8x32xbf16>, vector<4x32xf32> -> vector<4x32xf32>
      %c0_22 = arith.constant 0 : index
      %c0_23 = arith.constant 0 : index
      %64 = vector.load %arg5[%c0_22, %c0_23] : memref<4x1xf32, #tpu.memory_space<vmem>>, vector<4x1xf32>
      %65 = vector.broadcast %64 : vector<4x1xf32> to vector<4x32xf32>
      %66 = arith.addf %63, %65 : vector<4x32xf32>
      %c0_24 = arith.constant 0 : index
      %c0_25 = arith.constant 0 : index
      %67 = vector.load %arg6[%c0_24, %c0_25] : memref<32x512xf32, #tpu.memory_space<vmem>>, vector<32x512xf32>
      %cst_26 = arith.constant dense<0.000000e+00> : vector<4x512xf32>
      %68 = tpu.matmul %66, %67, %cst_26 {dimension_numbers = #tpu.dot_dimension_numbers<[1], [0], [0], [1], [0, 0, 1, 1], [], []>} : vector<4x32xf32>, vector<32x512xf32>, vector<4x512xf32> -> vector<4x512xf32>
      %c0_27 = arith.constant 0 : index
      %c0_28 = arith.constant 0 : index
      %69 = vector.load %arg16[%c0_27, %c0_28] : memref<4x512xf32, #tpu.memory_space<vmem>>, vector<4x512xf32>
      tpu.vector_store %arg16[%c0_27, %c0_28], %68 {strides = array<i32>} : memref<4x512xf32, #tpu.memory_space<vmem>>, vector<4x512xf32>,
    } else {
    }
    %c0 = arith.constant 0 : index
    %c0_1 = arith.constant 0 : index
    %3 = vector.load %arg16[%c0, %c0_1] : memref<4x512xf32, #tpu.memory_space<vmem>>, vector<4x512xf32>
    %cst = arith.constant 0.000000e+00 : f32
    %4 = vector.broadcast %cst : f32 to vector<4x512xf32>
    %5 = arith.cmpf ogt, %3, %4 : vector<4x512xf32>
    %cst_2 = arith.constant 0.00999999977 : f32
    %6 = vector.broadcast %cst_2 : f32 to vector<4x512xf32>
    %7 = arith.mulf %6, %3 : vector<4x512xf32>
    %8 = arith.select %5, %3, %7 : vector<4x512xi1>, vector<4x512xf32>
    %c0_3 = arith.constant 0 : index
    %c0_4 = arith.constant 0 : index
    %c0_5 = arith.constant 0 : index
    %9 = vector.load %arg7[%c0_3, %c0_4, %c0_5] : memref<1x4x36xbf16, #tpu.memory_space<vmem>>, vector<1x4x36xbf16>
    %10 = vector.shape_cast %9 : vector<1x4x36xbf16> to vector<4x36xbf16>
    %c0_6 = arith.constant 0 : index
    %c0_7 = arith.constant 0 : index
    %c0_8 = arith.constant 0 : index
    %11 = vector.load %arg8[%c0_6, %c0_7, %c0_8] : memref<1x4x1xf32, #tpu.memory_space<vmem>>, vector<1x4x1xf32>
    %12 = vector.shape_cast %11 : vector<1x4x1xf32> to vector<4x1xf32>
    %c0_9 = arith.constant 0 : index
    %c0_10 = arith.constant 0 : index
    %13 = vector.load %arg14[%c0_9, %c0_10] : memref<9x512xf32, #tpu.memory_space<vmem>>, vector<9x512xf32>
    %c17_i32 = arith.constant 17 : i32
    %14 = tpu.dynamic_rotate %8 by %c17_i32 dim 1 : vector<4x512xf32>, i32 -> vector<4x512xf32>
    %15 = vector.extract_strided_slice %13 {offsets = [0, 0], sizes = [1, 512], strides = [1, 1]} : vector<9x512xf32> to vector<1x512xf32>
    %16 = vector.broadcast %15 : vector<1x512xf32> to vector<4x512xf32>
    %17 = arith.mulf %14, %16 : vector<4x512xf32>
    %c16_i32 = arith.constant 16 : i32
    %18 = tpu.dynamic_rotate %8 by %c16_i32 dim 1 : vector<4x512xf32>, i32 -> vector<4x512xf32>
    %19 = vector.extract_strided_slice %13 {offsets = [1, 0], sizes = [1, 512], strides = [1, 1]} : vector<9x512xf32> to vector<1x512xf32>
    %20 = vector.broadcast %19 : vector<1x512xf32> to vector<4x512xf32>
    %21 = arith.mulf %18, %20 : vector<4x512xf32>
    %c15_i32 = arith.constant 15 : i32
    %22 = tpu.dynamic_rotate %8 by %c15_i32 dim 1 : vector<4x512xf32>, i32 -> vector<4x512xf32>
    %23 = vector.extract_strided_slice %13 {offsets = [2, 0], sizes = [1, 512], strides = [1, 1]} : vector<9x512xf32> to vector<1x512xf32>
    %24 = vector.broadcast %23 : vector<1x512xf32> to vector<4x512xf32>
    %25 = arith.mulf %22, %24 : vector<4x512xf32>
    %c1_i32 = arith.constant 1 : i32
    %26 = tpu.dynamic_rotate %8 by %c1_i32 dim 1 : vector<4x512xf32>, i32 -> vector<4x512xf32>
    %27 = vector.extract_strided_slice %13 {offsets = [3, 0], sizes = [1, 512], strides = [1, 1]} : vector<9x512xf32> to vector<1x512xf32>
    %28 = vector.broadcast %27 : vector<1x512xf32> to vector<4x512xf32>
    %29 = arith.mulf %26, %28 : vector<4x512xf32>
    %30 = vector.extract_strided_slice %13 {offsets = [4, 0], sizes = [1, 512], strides = [1, 1]} : vector<9x512xf32> to vector<1x512xf32>
    %31 = vector.broadcast %30 : vector<1x512xf32> to vector<4x512xf32>
    %32 = arith.mulf %8, %31 : vector<4x512xf32>
    %c511_i32 = arith.constant 511 : i32
    %33 = tpu.dynamic_rotate %8 by %c511_i32 dim 1 : vector<4x512xf32>, i32 -> vector<4x512xf32>
    %34 = vector.extract_strided_slice %13 {offsets = [5, 0], sizes = [1, 512], strides = [1, 1]} : vector<9x512xf32> to vector<1x512xf32>
    %35 = vector.broadcast %34 : vector<1x512xf32> to vector<4x512xf32>
    %36 = arith.mulf %33, %35 : vector<4x512xf32>
    %c497_i32 = arith.constant 497 : i32
    %37 = tpu.dynamic_rotate %8 by %c497_i32 dim 1 : vector<4x512xf32>, i32 -> vector<4x512xf32>
    %38 = vector.extract_strided_slice %13 {offsets = [6, 0], sizes = [1, 512], strides = [1, 1]} : vector<9x512xf32> to vector<1x512xf32>
    %39 = vector.broadcast %38 : vector<1x512xf32> to vector<4x512xf32>
    %40 = arith.mulf %37, %39 : vector<4x512xf32>
    %c496_i32 = arith.constant 496 : i32
    %41 = tpu.dynamic_rotate %8 by %c496_i32 dim 1 : vector<4x512xf32>, i32 -> vector<4x512xf32>
    %42 = vector.extract_strided_slice %13 {offsets = [7, 0], sizes = [1, 512], strides = [1, 1]} : vector<9x512xf32> to vector<1x512xf32>
    %43 = vector.broadcast %42 : vector<1x512xf32> to vector<4x512xf32>
    %44 = arith.mulf %41, %43 : vector<4x512xf32>
    %c495_i32 = arith.constant 495 : i32
    %45 = tpu.dynamic_rotate %8 by %c495_i32 dim 1 : vector<4x512xf32>, i32 -> vector<4x512xf32>
    %46 = vector.extract_strided_slice %13 {offsets = [8, 0], sizes = [1, 512], strides = [1, 1]} : vector<9x512xf32> to vector<1x512xf32>
    %47 = vector.broadcast %46 : vector<1x512xf32> to vector<4x512xf32>
    %48 = arith.mulf %45, %47 : vector<4x512xf32>
    %49 = tpu.concatenate %17, %21, %25, %29, %32, %36, %40, %44, %48 in 0 : vector<4x512xf32>, vector<4x512xf32>, vector<4x512xf32>, vector<4x512xf32>, vector<4x512xf32>, vector<4x512xf32>, vector<4x512xf32>, vector<4x512xf32>, vector<4x512xf32> -> vector<36x512xf32>
    %50 = arith.truncf %49 : vector<36x512xf32> to vector<36x512xbf16>
    %cst_11 = arith.constant dense<0.000000e+00> : vector<4x512xf32>
    %51 = tpu.matmul %10, %50, %cst_11 {dimension_numbers = #tpu.dot_dimension_numbers<[1], [0], [0], [1], [0, 0, 1, 1], [], []>} : vector<4x36xbf16>, vector<36x512xbf16>, vector<4x512xf32> -> vector<4x512xf32>
    %52 = vector.broadcast %12 : vector<4x1xf32> to vector<4x512xf32>
    %53 = arith.addf %51, %52 : vector<4x512xf32>
    %54 = arith.addf %3, %53 : vector<4x512xf32>
    %c0_12 = arith.constant 0 : index
    %c0_13 = arith.constant 0 : index
    %55 = vector.load %arg16[%c0_12, %c0_13] : memref<4x512xf32, #tpu.memory_space<vmem>>, vector<4x512xf32>
    tpu.vector_store %arg16[%c0_12, %c0_13], %54 {strides = array<i32>} : memref<4x512xf32, #tpu.memory_space<vmem>>, vector<4x512xf32>,
    %c1_i32_14 = arith.constant 1 : i32
    %56 = arith.cmpi eq, %arg1, %c1_i32_14 : i32
    %57 = arith.extui %56 : i1 to i32
    %c0_i32_15 = arith.constant 0 : i32
    %58 = arith.cmpi ne, %57, %c0_i32_15 : i32
    scf.if %58 {
      %c0_16 = arith.constant 0 : index
      %c0_17 = arith.constant 0 : index
      %59 = vector.load %arg9[%c0_16, %c0_17] : memref<4x4xbf16, #tpu.memory_space<vmem>>, vector<4x4xbf16>
      %c0_18 = arith.constant 0 : index
      %c0_19 = arith.constant 0 : index
      %c0_20 = arith.constant 0 : index
      %60 = vector.load %arg3[%c0_18, %c0_19, %c0_20] : memref<1x4x512xf32, #tpu.memory_space<vmem>>, vector<1x4x512xf32>
      %61 = vector.shape_cast %60 : vector<1x4x512xf32> to vector<4x512xf32>
      %62 = arith.truncf %61 : vector<4x512xf32> to vector<4x512xbf16>
      %cst_21 = arith.constant dense<0.000000e+00> : vector<4x512xf32>
      %63 = tpu.matmul %59, %62, %cst_21 {dimension_numbers = #tpu.dot_dimension_numbers<[1], [0], [0], [1], [0, 0, 1, 1], [], []>} : vector<4x4xbf16>, vector<4x512xbf16>, vector<4x512xf32> -> vector<4x512xf32>
      %c0_22 = arith.constant 0 : index
      %c0_23 = arith.constant 0 : index
      %64 = vector.load %arg10[%c0_22, %c0_23] : memref<4x4xbf16, #tpu.memory_space<vmem>>, vector<4x4xbf16>
      %65 = arith.truncf %54 : vector<4x512xf32> to vector<4x512xbf16>
      %cst_24 = arith.constant dense<0.000000e+00> : vector<4x512xf32>
      %66 = tpu.matmul %64, %65, %cst_24 {dimension_numbers = #tpu.dot_dimension_numbers<[1], [0], [0], [1], [0, 0, 1, 1], [], []>} : vector<4x4xbf16>, vector<4x512xbf16>, vector<4x512xf32> -> vector<4x512xf32>
      %67 = arith.addf %63, %66 : vector<4x512xf32>
      %c0_25 = arith.constant 0 : index
      %c0_26 = arith.constant 0 : index
      %68 = vector.load %arg11[%c0_25, %c0_26] : memref<4x1xf32, #tpu.memory_space<vmem>>, vector<4x1xf32>
      %69 = vector.broadcast %68 : vector<4x1xf32> to vector<4x512xf32>
      %70 = arith.addf %67, %69 : vector<4x512xf32>
      %c0_27 = arith.constant 0 : index
      %c0_28 = arith.constant 0 : index
      %71 = vector.load %arg12[%c0_27, %c0_28] : memref<1x36xbf16, #tpu.memory_space<vmem>>, vector<1x36xbf16>
      %c0_29 = arith.constant 0 : index
      %c0_30 = arith.constant 0 : index
      %72 = vector.load %arg13[%c0_29, %c0_30] : memref<1x1xf32, #tpu.memory_space<vmem>>, vector<1x1xf32>
      %c0_31 = arith.constant 0 : index
      %c0_32 = arith.constant 0 : index
      %73 = vector.load %arg14[%c0_31, %c0_32] : memref<9x512xf32, #tpu.memory_space<vmem>>, vector<9x512xf32>
      %c17_i32_33 = arith.constant 17 : i32
      %74 = tpu.dynamic_rotate %70 by %c17_i32_33 dim 1 : vector<4x512xf32>, i32 -> vector<4x512xf32>
      %75 = vector.extract_strided_slice %73 {offsets = [0, 0], sizes = [1, 512], strides = [1, 1]} : vector<9x512xf32> to vector<1x512xf32>
      %76 = vector.broadcast %75 : vector<1x512xf32> to vector<4x512xf32>
      %77 = arith.mulf %74, %76 : vector<4x512xf32>
      %c16_i32_34 = arith.constant 16 : i32
      %78 = tpu.dynamic_rotate %70 by %c16_i32_34 dim 1 : vector<4x512xf32>, i32 -> vector<4x512xf32>
      %79 = vector.extract_strided_slice %73 {offsets = [1, 0], sizes = [1, 512], strides = [1, 1]} : vector<9x512xf32> to vector<1x512xf32>
      %80 = vector.broadcast %79 : vector<1x512xf32> to vector<4x512xf32>
      %81 = arith.mulf %78, %80 : vector<4x512xf32>
      %c15_i32_35 = arith.constant 15 : i32
      %82 = tpu.dynamic_rotate %70 by %c15_i32_35 dim 1 : vector<4x512xf32>, i32 -> vector<4x512xf32>
      %83 = vector.extract_strided_slice %73 {offsets = [2, 0], sizes = [1, 512], strides = [1, 1]} : vector<9x512xf32> to vector<1x512xf32>
      %84 = vector.broadcast %83 : vector<1x512xf32> to vector<4x512xf32>
      %85 = arith.mulf %82, %84 : vector<4x512xf32>
      %c1_i32_36 = arith.constant 1 : i32
      %86 = tpu.dynamic_rotate %70 by %c1_i32_36 dim 1 : vector<4x512xf32>, i32 -> vector<4x512xf32>
      %87 = vector.extract_strided_slice %73 {offsets = [3, 0], sizes = [1, 512], strides = [1, 1]} : vector<9x512xf32> to vector<1x512xf32>
      %88 = vector.broadcast %87 : vector<1x512xf32> to vector<4x512xf32>
      %89 = arith.mulf %86, %88 : vector<4x512xf32>
      %90 = vector.extract_strided_slice %73 {offsets = [4, 0], sizes = [1, 512], strides = [1, 1]} : vector<9x512xf32> to vector<1x512xf32>
      %91 = vector.broadcast %90 : vector<1x512xf32> to vector<4x512xf32>
      %92 = arith.mulf %70, %91 : vector<4x512xf32>
      %c511_i32_37 = arith.constant 511 : i32
      %93 = tpu.dynamic_rotate %70 by %c511_i32_37 dim 1 : vector<4x512xf32>, i32 -> vector<4x512xf32>
      %94 = vector.extract_strided_slice %73 {offsets = [5, 0], sizes = [1, 512], strides = [1, 1]} : vector<9x512xf32> to vector<1x512xf32>
      %95 = vector.broadcast %94 : vector<1x512xf32> to vector<4x512xf32>
      %96 = arith.mulf %93, %95 : vector<4x512xf32>
      %c497_i32_38 = arith.constant 497 : i32
      %97 = tpu.dynamic_rotate %70 by %c497_i32_38 dim 1 : vector<4x512xf32>, i32 -> vector<4x512xf32>
      %98 = vector.extract_strided_slice %73 {offsets = [6, 0], sizes = [1, 512], strides = [1, 1]} : vector<9x512xf32> to vector<1x512xf32>
      %99 = vector.broadcast %98 : vector<1x512xf32> to vector<4x512xf32>
      %100 = arith.mulf %97, %99 : vector<4x512xf32>
      %c496_i32_39 = arith.constant 496 : i32
      %101 = tpu.dynamic_rotate %70 by %c496_i32_39 dim 1 : vector<4x512xf32>, i32 -> vector<4x512xf32>
      %102 = vector.extract_strided_slice %73 {offsets = [7, 0], sizes = [1, 512], strides = [1, 1]} : vector<9x512xf32> to vector<1x512xf32>
      %103 = vector.broadcast %102 : vector<1x512xf32> to vector<4x512xf32>
      %104 = arith.mulf %101, %103 : vector<4x512xf32>
      %c495_i32_40 = arith.constant 495 : i32
      %105 = tpu.dynamic_rotate %70 by %c495_i32_40 dim 1 : vector<4x512xf32>, i32 -> vector<4x512xf32>
      %106 = vector.extract_strided_slice %73 {offsets = [8, 0], sizes = [1, 512], strides = [1, 1]} : vector<9x512xf32> to vector<1x512xf32>
      %107 = vector.broadcast %106 : vector<1x512xf32> to vector<4x512xf32>
      %108 = arith.mulf %105, %107 : vector<4x512xf32>
      %109 = tpu.concatenate %77, %81, %85, %89, %92, %96, %100, %104, %108 in 0 : vector<4x512xf32>, vector<4x512xf32>, vector<4x512xf32>, vector<4x512xf32>, vector<4x512xf32>, vector<4x512xf32>, vector<4x512xf32>, vector<4x512xf32>, vector<4x512xf32> -> vector<36x512xf32>
      %110 = arith.truncf %109 : vector<36x512xf32> to vector<36x512xbf16>
      %cst_41 = arith.constant dense<0.000000e+00> : vector<1x512xf32>
      %111 = tpu.matmul %71, %110, %cst_41 {dimension_numbers = #tpu.dot_dimension_numbers<[1], [0], [0], [1], [0, 0, 1, 1], [], []>} : vector<1x36xbf16>, vector<36x512xbf16>, vector<1x512xf32> -> vector<1x512xf32>
      %112 = vector.broadcast %72 : vector<1x1xf32> to vector<1x512xf32>
      %113 = arith.addf %111, %112 : vector<1x512xf32>
      %c0_42 = arith.constant 0 : index
      %c0_43 = arith.constant 0 : index
      %c0_44 = arith.constant 0 : index
      %114 = vector.load %arg15[%c0_42, %c0_43, %c0_44] : memref<1x1x512xf32, #tpu.memory_space<vmem>>, vector<1x1x512xf32>
      %115 = vector.shape_cast %114 : vector<1x1x512xf32> to vector<1x512xf32>
      %116 = vector.shape_cast %113 : vector<1x512xf32> to vector<1x1x512xf32>
      tpu.vector_store %arg15[%c0_42, %c0_43, %c0_44], %116 {strides = array<i32>} : memref<1x1x512xf32, #tpu.memory_space<vmem>>, vector<1x1x512xf32>,
    } else {
    }
    return
  }
  func.func @transform_0(%arg0: i32, %arg1: i32) -> (i32, i32, i32) {
    %c0_i32 = arith.constant 0 : i32
    %c0_i32_0 = arith.constant 0 : i32
    %c0_i32_1 = arith.constant 0 : i32
    return %arg0, %c0_i32, %c0_i32_0 : i32, i32, i32
  }
  func.func @transform_1(%arg0: i32, %arg1: i32) -> (i32, i32, i32) {
    %c0_i32 = arith.constant 0 : i32
    %c0_i32_0 = arith.constant 0 : i32
    %c0_i32_1 = arith.constant 0 : i32
    return %arg0, %c0_i32, %c0_i32_0 : i32, i32, i32
  }
  func.func @transform_2(%arg0: i32, %arg1: i32) -> (i32, i32) {
    %c0_i32 = arith.constant 0 : i32
    %c0_i32_0 = arith.constant 0 : i32
    %c0_i32_1 = arith.constant 0 : i32
    return %c0_i32, %c0_i32_0 : i32, i32
  }
  func.func @transform_3(%arg0: i32, %arg1: i32) -> (i32, i32) {
    %c0_i32 = arith.constant 0 : i32
    %c0_i32_0 = arith.constant 0 : i32
    %c0_i32_1 = arith.constant 0 : i32
    return %c0_i32, %c0_i32_0 : i32, i32
  }
  func.func @transform_4(%arg0: i32, %arg1: i32) -> (i32, i32) {
    %c0_i32 = arith.constant 0 : i32
    %c0_i32_0 = arith.constant 0 : i32
    %c0_i32_1 = arith.constant 0 : i32
    return %c0_i32, %c0_i32_0 : i32, i32
  }
  func.func @transform_5(%arg0: i32, %arg1: i32) -> (i32, i32, i32) {
    %c0_i32 = arith.constant 0 : i32
    %c0_i32_0 = arith.constant 0 : i32
    %c0_i32_1 = arith.constant 0 : i32
    return %arg1, %c0_i32, %c0_i32_0 : i32, i32, i32
  }
  func.func @transform_6(%arg0: i32, %arg1: i32) -> (i32, i32, i32) {
    %c0_i32 = arith.constant 0 : i32
    %c0_i32_0 = arith.constant 0 : i32
    %c0_i32_1 = arith.constant 0 : i32
    return %arg1, %c0_i32, %c0_i32_0 : i32, i32, i32
  }
  func.func @transform_7(%arg0: i32, %arg1: i32) -> (i32, i32) {
    %c0_i32 = arith.constant 0 : i32
    %c0_i32_0 = arith.constant 0 : i32
    %c0_i32_1 = arith.constant 0 : i32
    return %c0_i32, %c0_i32_0 : i32, i32
  }
  func.func @transform_8(%arg0: i32, %arg1: i32) -> (i32, i32) {
    %c0_i32 = arith.constant 0 : i32
    %c0_i32_0 = arith.constant 0 : i32
    %c0_i32_1 = arith.constant 0 : i32
    return %c0_i32, %c0_i32_0 : i32, i32
  }
  func.func @transform_9(%arg0: i32, %arg1: i32) -> (i32, i32) {
    %c0_i32 = arith.constant 0 : i32
    %c0_i32_0 = arith.constant 0 : i32
    %c0_i32_1 = arith.constant 0 : i32
    return %c0_i32, %c0_i32_0 : i32, i32
  }
  func.func @transform_10(%arg0: i32, %arg1: i32) -> (i32, i32) {
    %c0_i32 = arith.constant 0 : i32
    %c0_i32_0 = arith.constant 0 : i32
    %c0_i32_1 = arith.constant 0 : i32
    return %c0_i32, %c0_i32_0 : i32, i32
  }
  func.func @transform_11(%arg0: i32, %arg1: i32) -> (i32, i32) {
    %c0_i32 = arith.constant 0 : i32
    %c0_i32_0 = arith.constant 0 : i32
    %c0_i32_1 = arith.constant 0 : i32
    return %c0_i32, %c0_i32_0 : i32, i32
  }
  func.func @transform_12(%arg0: i32, %arg1: i32) -> (i32, i32) {
    %c0_i32 = arith.constant 0 : i32
    %c0_i32_0 = arith.constant 0 : i32
    %c0_i32_1 = arith.constant 0 : i32
    return %c0_i32, %c0_i32_0 : i32, i32
  }
  func.func @transform_13(%arg0: i32, %arg1: i32) -> (i32, i32, i32) {
    %c0_i32 = arith.constant 0 : i32
    %c0_i32_0 = arith.constant 0 : i32
    %c0_i32_1 = arith.constant 0 : i32
    return %arg0, %c0_i32, %c0_i32_0 : i32, i32, i32
  }
}

</mosaic_0001>

<llo_original>
// kernel: forward.4
$region0: #{forward.4}
  #allocation0 [shape = 'u32[]', space=smem, size = 0x4, offset = 0x4, fixed_abs, tag = 'smem constant byte address 0x4 - core index']
  #allocation1 [shape = 'u32[144,128]{1,0:T(1,128)}', space=vmem, size = 0x12000, scoped, tag = 'internal scratch']
  %s0 = inlined_call_operand.vmem [shape: f32[2,1,512], index: 0, kind: input, shape index: {}]
  %s1 = inlined_call_operand.vmem [shape: bf16[4,9], index: 1, kind: input, shape index: {}]
  %s2 = inlined_call_operand.vmem [shape: f32[4,1], index: 2, kind: input, shape index: {}]
  %s3 = inlined_call_operand.vmem [shape: f32[9,512], index: 3, kind: input, shape index: {}]
  %s4 = inlined_call_operand.vmem [shape: f32[2,4,512], index: 4, kind: output, shape index: {}]
  %s5 = sld [smem:[#allocation0]]
  $region49: #{forward.4} parent=0
    _
  %s7 = ssub.s32 1, %s5
  %s8 = scalar_select 0, %s7, %s5
  loop: start=0, step=1, limit=4
  $region2: #{forward.4} parent=0 // loop_pre_header
    _
  $region3: #{forward.4} parent=0 // loop_header
    %s10 = sphi 0, %s14
    %p11 = scmp.ge.s32.totalorder %s10, 4
    %s20 = sphi 0, %s22
    %s23 = sphi 0, %s20
    %s24 = sphi 0, %s23
    %s40 = sphi 0, %s24
    %s44 = sphi 0, %s44
    %s46 = sphi 0, %s44
    %s47 = sphi 0, %s46
    %s61 = sphi 0, %s47
    %s65 = sphi 0, %s65
    %s67 = sphi 0, %s65
    %s68 = sphi 0, %s67
    %s82 = sphi 0, %s68
    %s86 = sphi 0, %s86
    %s88 = sphi 0, %s86
    %s89 = sphi 0, %s88
    %s103 = sphi 0, %s89
    %s109 = sphi 0, %s111
    %s112 = sphi 0, %s109
    %s113 = sphi 0, %s112
    %s129 = sphi 0, %s113
  $region4: #{forward.4} parent=0 // loop_header_branch
    %13 = sbr.rel (%p11) target = $region8
  $region5: #{forward.4} parent=0 // loop_body
    %s15 = ssub.s32 %s10, 1
    %s16 = ssub.s32 %s10, 2
    %s17 = sadd.s32 %s10, 1
    %s18 = ssub.s32 %s10, %s17
    %p19 = scmp.eq.s32.totalorder %s18, 0
    %s21 = sadd.s32 %s20, 1
    %s22 = scalar_select %p19, %s20, %s21
    %p25 = pneg %p19
    %p26 = scmp.eq.s32.totalorder %s10, 1
    %p27 = por %p25, %p26
    %p28 = scmp.ne.s32.totalorder %s20, %s23
    %p29 = scmp.eq.s32.totalorder %s10, 0
    %p30 = por %p28, %p29
    %p31 = scmp.ne.s32.totalorder %s20, %s23
    %p32 = scmp.eq.s32.totalorder %s15, 1
    %p33 = por %p31, %p32
    %p34 = scmp.ne.s32.totalorder %s23, %s24
    %p35 = scmp.eq.s32.totalorder %s15, 0
    %p36 = por %p34, %p35
    %p37 = scmp.ne.s32.totalorder %s23, %s24
    %p38 = scmp.eq.s32.totalorder %s16, 1
    %p39 = por %p37, %p38
    %p41 = scmp.ne.s32.totalorder %s24, %s40
    %p42 = scmp.eq.s32.totalorder %s16, 0
    %p43 = por %p41, %p42
    %s45 = sadd.s32 %s44, 1
    %p48 = scmp.eq.s32.totalorder %s10, 1
    %p49 = scmp.ne.s32.totalorder %s44, %s46
    %p50 = scmp.eq.s32.totalorder %s10, 0
    %p51 = por %p49, %p50
    %p52 = scmp.ne.s32.totalorder %s44, %s46
    %p53 = scmp.eq.s32.totalorder %s15, 1
    %p54 = por %p52, %p53
    %p55 = scmp.ne.s32.totalorder %s46, %s47
    %p56 = scmp.eq.s32.totalorder %s15, 0
    %p57 = por %p55, %p56
    %p58 = scmp.ne.s32.totalorder %s46, %s47
    %p59 = scmp.eq.s32.totalorder %s16, 1
    %p60 = por %p58, %p59
    %p62 = scmp.ne.s32.totalorder %s47, %s61
    %p63 = scmp.eq.s32.totalorder %s16, 0
    %p64 = por %p62, %p63
    %s66 = sadd.s32 %s65, 1
    %p69 = scmp.eq.s32.totalorder %s10, 1
    %p70 = scmp.ne.s32.totalorder %s65, %s67
    %p71 = scmp.eq.s32.totalorder %s10, 0
    %p72 = por %p70, %p71
    %p73 = scmp.ne.s32.totalorder %s65, %s67
    %p74 = scmp.eq.s32.totalorder %s15, 1
    %p75 = por %p73, %p74
    %p76 = scmp.ne.s32.totalorder %s67, %s68
    %p77 = scmp.eq.s32.totalorder %s15, 0
    %p78 = por %p76, %p77
    %p79 = scmp.ne.s32.totalorder %s67, %s68
    %p80 = scmp.eq.s32.totalorder %s16, 1
    %p81 = por %p79, %p80
    %p83 = scmp.ne.s32.totalorder %s68, %s82
    %p84 = scmp.eq.s32.totalorder %s16, 0
    %p85 = por %p83, %p84
    %s87 = sadd.s32 %s86, 1
    %p90 = scmp.eq.s32.totalorder %s10, 1
    %p91 = scmp.ne.s32.totalorder %s86, %s88
    %p92 = scmp.eq.s32.totalorder %s10, 0
    %p93 = por %p91, %p92
    %p94 = scmp.ne.s32.totalorder %s86, %s88
    %p95 = scmp.eq.s32.totalorder %s15, 1
    %p96 = por %p94, %p95
    %p97 = scmp.ne.s32.totalorder %s88, %s89
    %p98 = scmp.eq.s32.totalorder %s15, 0
    %p99 = por %p97, %p98
    %p100 = scmp.ne.s32.totalorder %s88, %s89
    %p101 = scmp.eq.s32.totalorder %s16, 1
    %p102 = por %p100, %p101
    %p104 = scmp.ne.s32.totalorder %s89, %s103
    %p105 = scmp.eq.s32.totalorder %s16, 0
    %p106 = por %p104, %p105
    %s107 = ssub.s32 %s10, %s17
    %p108 = scmp.eq.s32.totalorder %s107, 0
    %s110 = sadd.s32 %s109, 1
    %s111 = scalar_select %p108, %s109, %s110
    %p114 = pneg %p108
    %p115 = scmp.eq.s32.totalorder %s10, 1
    %p116 = por %p114, %p115
    %p117 = scmp.ne.s32.totalorder %s109, %s112
    %p118 = scmp.eq.s32.totalorder %s10, 0
    %p119 = por %p117, %p118
    %p120 = scmp.ne.s32.totalorder %s109, %s112
    %p121 = scmp.eq.s32.totalorder %s15, 1
    %p122 = por %p120, %p121
    %p123 = scmp.ne.s32.totalorder %s112, %s113
    %p124 = scmp.eq.s32.totalorder %s15, 0
    %p125 = por %p123, %p124
    %p126 = scmp.ne.s32.totalorder %s112, %s113
    %p127 = scmp.eq.s32.totalorder %s16, 1
    %p128 = por %p126, %p127
    %p130 = scmp.ne.s32.totalorder %s113, %s129
    %p131 = scmp.eq.s32.totalorder %s16, 0
    %p132 = por %p130, %p131
    %p133 = scmp.le.s32.totalorder 1, %s10
    %p134 = scmp.lt.s32.totalorder %s10, 3
    %p135 = pnand %p133, %p134
    %p136 = pneg %p135
    // Predicated region
    $region9: #{forward.4} parent=5 // pred_check
      _
    $region10: #{forward.4} parent=5 // pred_check_branch
      %138 = sbr.rel (%p135) target = $region12
    $region11: #{forward.4} parent=5 // pred_region
      %s139 = ssub.s32 %s10, 1
      // Predicated region
      $region13: #{forward.4} parent=11 // pred_check
        %p140 = pneg %p57
      $region14: #{forward.4} parent=11 // pred_check_branch
        %142 = sbr.rel (%p140) target = $region16
      $region15: #{forward.4} parent=11 // pred_region
        _
      $region16: #{forward.4} parent=11 // pred_fallthru
        _
      // Predicated region
      $region17: #{forward.4} parent=11 // pred_check
        %p143 = pneg %p78
      $region18: #{forward.4} parent=11 // pred_check_branch
        %145 = sbr.rel (%p143) target = $region20
      $region19: #{forward.4} parent=11 // pred_region
        _
      $region20: #{forward.4} parent=11 // pred_fallthru
        _
      // Predicated region
      $region21: #{forward.4} parent=11 // pred_check
        %p146 = pneg %p99
      $region22: #{forward.4} parent=11 // pred_check_branch
        %148 = sbr.rel (%p146) target = $region24
      $region23: #{forward.4} parent=11 // pred_region
        _
      $region24: #{forward.4} parent=11 // pred_fallthru
        _
    $region12: #{forward.4} parent=5 // pred_fallthru
      _
    %p149 = scmp.lt.s32.totalorder %s10, 2
    // Predicated region
    $region25: #{forward.4} parent=5 // pred_check
      %p150 = pneg %p149
    $region26: #{forward.4} parent=5 // pred_check_branch
      %152 = sbr.rel (%p150) target = $region28
    $region27: #{forward.4} parent=5 // pred_region
      // Predicated region
      $region29: #{forward.4} parent=27 // pred_check
        %p153 = pneg %p30
      $region30: #{forward.4} parent=27 // pred_check_branch
        %155 = sbr.rel (%p153) target = $region32
      $region31: #{forward.4} parent=27 // pred_region
        %p156 = scmp.lt.s32.totalorder %s10, 1
        %s157 = scalar_select %p156, %s10, 1
        %s158 = smul.addr %s157, 4
        %s159 = scalar_lea.vmem %s0, %s158
      $region32: #{forward.4} parent=27 // pred_fallthru
        _
    $region28: #{forward.4} parent=5 // pred_fallthru
      _
    %p160 = scmp.le.s32.totalorder 1, %s10
    %p161 = scmp.lt.s32.totalorder %s10, 3
    %p162 = pnand %p160, %p161
    %p163 = pneg %p162
    // Predicated region
    $region33: #{forward.4} parent=5 // pred_check
      _
    $region34: #{forward.4} parent=5 // pred_check_branch
      %165 = sbr.rel (%p162) target = $region36
    $region35: #{forward.4} parent=5 // pred_region
      %s166 = ssub.s32 %s10, 1
      %p167 = scmp.lt.s32.totalorder %s15, 1
      %s168 = scalar_select %p167, %s15, 1
      %s169 = smul.addr %s168, 4
      %s170 = scalar_lea.vmem %s0, %s169
      %p171 = pneg %p36
      %p172 = pneg %p33
      %p173 = pneg %p57
      %p174 = pneg %p54
      %p175 = pneg %p78
      %p176 = pneg %p75
      %p177 = pneg %p99
      %p178 = pneg %p96
      %p179 = pneg %p125
      %p180 = pneg %p122
      %p181 = scmp.lt.s32.totalorder %s15, 1
      %s182 = scalar_select %p181, %s15, 1
      %s183 = smul.addr %s182, 4
      %s184 = smul.addr %s183, 4
      %s185 = scalar_lea.vmem %s4, %s184
      %p186 = scmp.lt.s32.totalorder %s15, 1
      %s187 = scalar_select %p186, %s15, 1
      %s188 = smul.addr %s187, 4
      %s189 = scalar_lea.vmem %s0, %s188
      %p190 = scmp.lt.s32.totalorder %s15, 1
      %s191 = scalar_select %p190, %s15, 1
      %s192 = smul.addr %s191, 4
      %s193 = smul.addr %s192, 4
      %s194 = scalar_lea.vmem %s4, %s193
      %v196 = vld [vmem:[%s189] sm:$0xf]
      %v197 = vld [vmem:[%s1] sm:$0x3]
      %v198 = vld [vmem:[%s2] sm:$0xf]
      %v199 = vld [vmem:[%s3] sm:$0xff]
      %v200 = vld [vmem:[%s3 + $0x8] sm:$0xff]
      %v201 = vld [vmem:[%s3 + $0x10] sm:$0xff]
      %v202 = vld [vmem:[%s3 + $0x18] sm:$0xff]
      %v203 = vld [vmem:[%s3 + $0x20] sm:$0x1]
      %v204 = vld [vmem:[%s3 + $0x28] sm:$0x1]
      %v205 = vld [vmem:[%s3 + $0x30] sm:$0x1]
      %v206 = vld [vmem:[%s3 + $0x38] sm:$0x1]
      %v208 = vlaneseq
      %v209 = vshrl.u32 %v208, 7
      %v210 = vsub.s32 0, %v209
      %v211 = vrot.slane %v196, %v210
      %v212 = vlaneseq
      %v213 = vshrl.u32 %v212, 7
      %v214 = vsub.s32 1, %v213
      %v215 = vrot.slane %v196, %v214
      %v216 = vlaneseq
      %v217 = vshrl.u32 %v216, 7
      %v218 = vsub.s32 2, %v217
      %v219 = vrot.slane %v196, %v218
      %v220 = vlaneseq
      %v221 = vshrl.u32 %v220, 7
      %v222 = vsub.s32 3, %v221
      %v223 = vrot.slane %v196, %v222
      %228 = vrot.lane.b32.xlu0 %v211, 17
      %v229 = vpop.permute.xlu0 %228
      %230 = vrot.lane.b32.xlu0 %v215, 17
      %v231 = vpop.permute.xlu0 %230
      %232 = vrot.lane.b32.xlu0 %v219, 17
      %v233 = vpop.permute.xlu0 %232
      %234 = vrot.lane.b32.xlu0 %v223, 17
      %v235 = vpop.permute.xlu0 %234
      %v236 = vlaneseq
      %v237 = vand.u32 %v236, 127
      %vm238 = vcmp.lt.s32.totalorder %v237, 17
      %v239 = vsel %vm238, %v233, %v235
      %v240 = vsel %vm238, %v231, %v233
      %v241 = vsel %vm238, %v229, %v231
      %v242 = vsel %vm238, %v235, %v229
      %v243 = vmul.f32 %v242, %v199
      %v244 = vmul.f32 %v241, %v200
      %v245 = vmul.f32 %v240, %v201
      %v246 = vmul.f32 %v239, %v202
      %247 = vrot.lane.b32.xlu0 %v211, 16
      %v248 = vpop.permute.xlu0 %247
      %249 = vrot.lane.b32.xlu0 %v215, 16
      %v250 = vpop.permute.xlu0 %249
      %251 = vrot.lane.b32.xlu0 %v219, 16
      %v252 = vpop.permute.xlu0 %251
      %253 = vrot.lane.b32.xlu0 %v223, 16
      %v254 = vpop.permute.xlu0 %253
      %vm255 = vcmp.lt.s32.totalorder %v237, 16
      %v256 = vsel %vm255, %v252, %v254
      %v257 = vsel %vm255, %v250, %v252
      %v258 = vsel %vm255, %v248, %v250
      %v259 = vsel %vm255, %v254, %v248
      %v264 = vrot.slane %v199, 1
      %v265 = vrot.slane %v200, 1
      %v266 = vrot.slane %v201, 1
      %v267 = vrot.slane %v202, 1
      %v272 = vmul.f32 %v259, %v264
      %v273 = vmul.f32 %v258, %v265
      %v274 = vmul.f32 %v257, %v266
      %v275 = vmul.f32 %v256, %v267
      %276 = vrot.lane.b32.xlu0 %v211, 15
      %v277 = vpop.permute.xlu0 %276
      %278 = vrot.lane.b32.xlu0 %v215, 15
      %v279 = vpop.permute.xlu0 %278
      %280 = vrot.lane.b32.xlu0 %v219, 15
      %v281 = vpop.permute.xlu0 %280
      %282 = vrot.lane.b32.xlu0 %v223, 15
      %v283 = vpop.permute.xlu0 %282
      %vm284 = vcmp.lt.s32.totalorder %v237, 15
      %v285 = vsel %vm284, %v281, %v283
      %v286 = vsel %vm284, %v279, %v281
      %v287 = vsel %vm284, %v277, %v279
      %v288 = vsel %vm284, %v283, %v277
      %v289 = vrot.slane %v199, 2
      %v290 = vrot.slane %v200, 2
      %v291 = vrot.slane %v201, 2
      %v292 = vrot.slane %v202, 2
      %v297 = vmul.f32 %v288, %v289
      %v298 = vmul.f32 %v287, %v290
      %v299 = vmul.f32 %v286, %v291
      %v300 = vmul.f32 %v285, %v292
      %301 = vrot.lane.b32.xlu0 %v211, 1
      %v302 = vpop.permute.xlu0 %301
      %303 = vrot.lane.b32.xlu0 %v215, 1
      %v304 = vpop.permute.xlu0 %303
      %305 = vrot.lane.b32.xlu0 %v219, 1
      %v306 = vpop.permute.xlu0 %305
      %307 = vrot.lane.b32.xlu0 %v223, 1
      %v308 = vpop.permute.xlu0 %307
      %vm309 = vcmp.lt.s32.totalorder %v237, 1
      %v310 = vsel %vm309, %v306, %v308
      %v311 = vsel %vm309, %v304, %v306
      %v312 = vsel %vm309, %v302, %v304
      %v313 = vsel %vm309, %v308, %v302
      %v314 = vrot.slane %v199, 3
      %v315 = vrot.slane %v200, 3
      %v316 = vrot.slane %v201, 3
      %v317 = vrot.slane %v202, 3
      %v322 = vmul.f32 %v313, %v314
      %v323 = vmul.f32 %v312, %v315
      %v324 = vmul.f32 %v311, %v316
      %v325 = vmul.f32 %v310, %v317
      %v326 = vcombine.high %v199, %v200
      %v327 = vcombine.high %v201, %v202
      %v329 = vunpack.c.l.s4 1966171168
      %v330 = vunpack.c.0.s8 %v329
      %v331 = vlaneseq
      %v332 = vshrl.u32 %v331, 7
      %v333 = vsub.s32 %v330, %v332
      %v334 = vrot.slane %v326, %v333
      %v336 = vunpack.c.l.s4 1966171168
      %v337 = vunpack.c.0.s8 %v336
      %v338 = vlaneseq
      %v339 = vshrl.u32 %v338, 7
      %v340 = vsub.s32 %v337, %v339
      %v341 = vrot.slane %v327, %v340
      %v342 = vcombine.low %v334, %v341
      %v344 = vunpack.c.l.s4 1966171168
      %v345 = vunpack.c.0.s8 %v344
      %v346 = vlaneseq
      %v347 = vshrl.u32 %v346, 7
      %v348 = vsub.s32 %v345, %v347
      %v349 = vrot.slane %v342, %v348
      %v351 = vmul.f32 %v196, %v349
      %352 = vrot.lane.b32.xlu0 %v211, 127
      %v353 = vpop.permute.xlu0 %352
      %354 = vrot.lane.b32.xlu0 %v215, 127
      %v355 = vpop.permute.xlu0 %354
      %356 = vrot.lane.b32.xlu0 %v219, 127
      %v357 = vpop.permute.xlu0 %356
      %358 = vrot.lane.b32.xlu0 %v223, 127
      %v359 = vpop.permute.xlu0 %358
      %vm360 = vcmp.lt.s32.totalorder %v237, 127
      %v361 = vsel %vm360, %v357, %v359
      %v362 = vsel %vm360, %v355, %v357
      %v363 = vsel %vm360, %v353, %v355
      %v364 = vsel %vm360, %v359, %v353
      %v365 = vrot.slane %v199, 5
      %v366 = vrot.slane %v200, 5
      %v367 = vrot.slane %v201, 5
      %v368 = vrot.slane %v202, 5
      %v373 = vmul.f32 %v363, %v365
      %v374 = vmul.f32 %v362, %v366
      %v375 = vmul.f32 %v361, %v367
      %v376 = vmul.f32 %v364, %v368
      %377 = vrot.lane.b32.xlu0 %v211, 113
      %v378 = vpop.permute.xlu0 %377
      %379 = vrot.lane.b32.xlu0 %v215, 113
      %v380 = vpop.permute.xlu0 %379
      %381 = vrot.lane.b32.xlu0 %v219, 113
      %v382 = vpop.permute.xlu0 %381
      %383 = vrot.lane.b32.xlu0 %v223, 113
      %v384 = vpop.permute.xlu0 %383
      %vm385 = vcmp.lt.s32.totalorder %v237, 113
      %v386 = vsel %vm385, %v382, %v384
      %v387 = vsel %vm385, %v380, %v382
      %v388 = vsel %vm385, %v378, %v380
      %v389 = vsel %vm385, %v384, %v378
      %v390 = vrot.slane %v199, 6
      %v391 = vrot.slane %v200, 6
      %v392 = vrot.slane %v201, 6
      %v393 = vrot.slane %v202, 6
      %v398 = vmul.f32 %v388, %v390
      %v399 = vmul.f32 %v387, %v391
      %v400 = vmul.f32 %v386, %v392
      %v401 = vmul.f32 %v389, %v393
      %402 = vrot.lane.b32.xlu0 %v211, 112
      %v403 = vpop.permute.xlu0 %402
      %404 = vrot.lane.b32.xlu0 %v215, 112
      %v405 = vpop.permute.xlu0 %404
      %406 = vrot.lane.b32.xlu0 %v219, 112
      %v407 = vpop.permute.xlu0 %406
      %408 = vrot.lane.b32.xlu0 %v223, 112
      %v409 = vpop.permute.xlu0 %408
      %vm410 = vcmp.lt.s32.totalorder %v237, 112
      %v411 = vsel %vm410, %v407, %v409
      %v412 = vsel %vm410, %v405, %v407
      %v413 = vsel %vm410, %v403, %v405
      %v414 = vsel %vm410, %v409, %v403
      %v415 = vrot.slane %v199, 7
      %v416 = vrot.slane %v200, 7
      %v417 = vrot.slane %v201, 7
      %v418 = vrot.slane %v202, 7
      %v423 = vmul.f32 %v413, %v415
      %v424 = vmul.f32 %v412, %v416
      %v425 = vmul.f32 %v411, %v417
      %v426 = vmul.f32 %v414, %v418
      %427 = vrot.lane.b32.xlu0 %v211, 111
      %v428 = vpop.permute.xlu0 %427
      %429 = vrot.lane.b32.xlu0 %v215, 111
      %v430 = vpop.permute.xlu0 %429
      %431 = vrot.lane.b32.xlu0 %v219, 111
      %v432 = vpop.permute.xlu0 %431
      %433 = vrot.lane.b32.xlu0 %v223, 111
      %v434 = vpop.permute.xlu0 %433
      %vm435 = vcmp.lt.s32.totalorder %v237, 111
      %v436 = vsel %vm435, %v432, %v434
      %v437 = vsel %vm435, %v430, %v432
      %v438 = vsel %vm435, %v428, %v430
      %v439 = vsel %vm435, %v434, %v428
      %v440 = vmul.f32 %v438, %v203
      %v441 = vmul.f32 %v437, %v204
      %v442 = vmul.f32 %v436, %v205
      %v443 = vmul.f32 %v439, %v206
      %v448 = vrot.slane %v272, 7
      %v449 = vrot.slane %v273, 7
      %v450 = vrot.slane %v274, 7
      %v451 = vrot.slane %v275, 7
      %v460 = vrot.slane %v297, 6
      %v461 = vrot.slane %v298, 6
      %v462 = vrot.slane %v299, 6
      %v463 = vrot.slane %v300, 6
      %v472 = vrot.slane %v322, 5
      %v473 = vrot.slane %v323, 5
      %v474 = vrot.slane %v324, 5
      %v475 = vrot.slane %v325, 5
      %v481 = vlaneseq
      %v482 = vshrl.u32 %v481, 7
      %v483 = vsub.s32 0, %v482
      %v484 = vrot.slane %v351, %v483
      %v485 = vlaneseq
      %v486 = vshrl.u32 %v485, 7
      %v487 = vsub.s32 1, %v486
      %v488 = vrot.slane %v351, %v487
      %v489 = vlaneseq
      %v490 = vshrl.u32 %v489, 7
      %v491 = vsub.s32 2, %v490
      %v492 = vrot.slane %v351, %v491
      %v493 = vlaneseq
      %v494 = vshrl.u32 %v493, 7
      %v495 = vsub.s32 3, %v494
      %v496 = vrot.slane %v351, %v495
      %v505 = vrot.slane %v373, 3
      %v506 = vrot.slane %v374, 3
      %v507 = vrot.slane %v375, 3
      %v508 = vrot.slane %v376, 3
      %v517 = vrot.slane %v398, 2
      %v518 = vrot.slane %v399, 2
      %v519 = vrot.slane %v400, 2
      %v520 = vrot.slane %v401, 2
      %v529 = vrot.slane %v423, 1
      %v530 = vrot.slane %v424, 1
      %v531 = vrot.slane %v425, 1
      %v532 = vrot.slane %v426, 1
      %vm537 = vcmask 1040384
      %v538 = vsel %vm537, %v243, %v448
      %v539 = vsel %vm537, %v244, %v449
      %v540 = vsel %vm537, %v245, %v450
      %v541 = vsel %vm537, %v246, %v451
      %vm542 = vcmask 1041408
      %v543 = vsel %vm542, %v538, %v460
      %v544 = vsel %vm542, %v539, %v461
      %v545 = vsel %vm542, %v540, %v462
      %v546 = vsel %vm542, %v541, %v463
      %vm547 = vcmask 1042432
      %v548 = vsel %vm547, %v543, %v472
      %v549 = vsel %vm547, %v544, %v473
      %v550 = vsel %vm547, %v545, %v474
      %v551 = vsel %vm547, %v546, %v475
      %vm552 = vcmask 1043456
      %v553 = vsel %vm552, %v548, %v484
      %v554 = vsel %vm552, %v549, %v488
      %v555 = vsel %vm552, %v550, %v492
      %v556 = vsel %vm552, %v551, %v496
      %vm557 = vcmask 1044480
      %v558 = vsel %vm557, %v553, %v505
      %v559 = vsel %vm557, %v554, %v506
      %v560 = vsel %vm557, %v555, %v507
      %v561 = vsel %vm557, %v556, %v508
      %vm562 = vcmask 1045504
      %v563 = vsel %vm562, %v558, %v517
      %v564 = vsel %vm562, %v559, %v518
      %v565 = vsel %vm562, %v560, %v519
      %v566 = vsel %vm562, %v561, %v520
      %vm567 = vcmask 1046528
      %v568 = vsel %vm567, %v563, %v529
      %v569 = vsel %vm567, %v564, %v530
      %v570 = vsel %vm567, %v565, %v531
      %v571 = vsel %vm567, %v566, %v532
      %v572 = vpack.c.bf16 %v440, %v568
      %v573 = vpack.c.bf16 %v441, %v569
      %v574 = vpack.c.bf16 %v442, %v570
      %v575 = vpack.c.bf16 %v443, %v571
      %577 = vset.pattern.permute.xlu0 0
      %578 = vperm.xlu0 %577, %v198
      %v579 = vpop.permute.xlu0 %578
      %vm581 = vcmask 72704
      %v583 = vsel %vm581, %v197, 0
      %v585 = vsel %vm552, 4294967295, 65535
      %v586 = vsel %vm557, %v585, 0
      %v588 = vand.u32 %v572, %v586
      %v591 = vand.u32 %v573, %v586
      %v594 = vand.u32 %v574, %v586
      %v597 = vand.u32 %v575, %v586
      %599 = vmatprep.subr.bf16.mxu0 0
      %600 = vmatpush1.bf16.msra.mxu0 0
      %601 = vmatprep.subr.bf16.mxu0 0
      %602 = vmatpush1.bf16.msra.mxu0 0
      %603 = vmatprep.subr.bf16.mxu0 0
      %604 = vmatpush1.bf16.msra.mxu0 0
      %605 = vmatprep.subr.bf16.mxu0 0
      %606 = vmatpush1.bf16.msra.mxu0 0
      %607 = vmatprep.subr.bf16.mxu0 0
      %608 = vmatpush1.bf16.msra.mxu0 0
      %609 = vmatprep.subr.bf16.mxu0 0
      %610 = vmatpush1.bf16.msra.mxu0 0
      %611 = vmatprep.subr.bf16.mxu0 0
      %612 = vmatpush1.bf16.msra.mxu0 0
      %613 = vmatprep.subr.bf16.mxu0 %v591
      %614 = vmatpush1.bf16.msra.mxu0 %v588
      %615 = vmatprep.subr.bf16.mxu0 0
      %616 = vmatpush2.bf16.msra.mxu0 0
      %617 = vmatprep.subr.bf16.mxu0 0
      %618 = vmatpush2.bf16.msra.mxu0 0
      %619 = vmatprep.subr.bf16.mxu0 0
      %620 = vmatpush2.bf16.msra.mxu0 0
      %621 = vmatprep.subr.bf16.mxu0 0
      %622 = vmatpush2.bf16.msra.mxu0 0
      %623 = vmatprep.subr.bf16.mxu0 0
      %624 = vmatpush2.bf16.msra.mxu0 0
      %625 = vmatprep.subr.bf16.mxu0 0
      %626 = vmatpush2.bf16.msra.mxu0 0
      %627 = vmatprep.subr.bf16.mxu0 0
      %628 = vmatpush2.bf16.msra.mxu0 0
      %629 = vmatprep.subr.bf16.mxu0 0
      %630 = vmatpush2.bf16.msra.mxu0 0
      %631 = vmatprep.mubr.bf16.mxu0 0
      %632 = vmatmul.mubr.bf16.gmra.mxu0 %v583
      %v633 = vpop.f32.mrf.mxu0
      %v634 = vadd.f32 %v579, %v633
      %v635 = vpop.f32.mrf.mxu0
      %v636 = vadd.f32 %v579, %v635
      %v637 = vpop.f32.mrf.mxu0
      %v638 = vpop.f32.mrf.mxu0
      %639 = vdwg.mxu0
      %640 = vmatprep.subr.bf16.mxu0 0
      %641 = vmatpush1.bf16.msra.mxu0 0
      %642 = vmatprep.subr.bf16.mxu0 0
      %643 = vmatpush1.bf16.msra.mxu0 0
      %644 = vmatprep.subr.bf16.mxu0 0
      %645 = vmatpush1.bf16.msra.mxu0 0
      %646 = vmatprep.subr.bf16.mxu0 0
      %647 = vmatpush1.bf16.msra.mxu0 0
      %648 = vmatprep.subr.bf16.mxu0 0
      %649 = vmatpush1.bf16.msra.mxu0 0
      %650 = vmatprep.subr.bf16.mxu0 0
      %651 = vmatpush1.bf16.msra.mxu0 0
      %652 = vmatprep.subr.bf16.mxu0 0
      %653 = vmatpush1.bf16.msra.mxu0 0
      %654 = vmatprep.subr.bf16.mxu0 %v597
      %655 = vmatpush1.bf16.msra.mxu0 %v594
      %656 = vmatprep.subr.bf16.mxu0 0
      %657 = vmatpush2.bf16.msra.mxu0 0
      %658 = vmatprep.subr.bf16.mxu0 0
      %659 = vmatpush2.bf16.msra.mxu0 0
      %660 = vmatprep.subr.bf16.mxu0 0
      %661 = vmatpush2.bf16.msra.mxu0 0
      %662 = vmatprep.subr.bf16.mxu0 0
      %663 = vmatpush2.bf16.msra.mxu0 0
      %664 = vmatprep.subr.bf16.mxu0 0
      %665 = vmatpush2.bf16.msra.mxu0 0
      %666 = vmatprep.subr.bf16.mxu0 0
      %667 = vmatpush2.bf16.msra.mxu0 0
      %668 = vmatprep.subr.bf16.mxu0 0
      %669 = vmatpush2.bf16.msra.mxu0 0
      %670 = vmatprep.subr.bf16.mxu0 0
      %671 = vmatpush2.bf16.msra.mxu0 0
      %672 = vmatprep.mubr.bf16.mxu0 0
      %673 = vmatmul.mubr.bf16.gmra.mxu0 %v583
      %v674 = vpop.f32.mrf.mxu0
      %v675 = vadd.f32 %v579, %v674
      %v676 = vpop.f32.mrf.mxu0
      %v677 = vadd.f32 %v579, %v676
      %v678 = vpop.f32.mrf.mxu0
      %v679 = vpop.f32.mrf.mxu0
      %680 = vdwg.mxu0
      %v685 = vcombine.low %v634, %v636
      %v686 = vcombine.low %v675, %v677
      %689 = vst [vmem:[%s194] sm:$0xff] %v685
      %690 = vst [vmem:[%s194 + $0x8] sm:$0xff] %v686
      %p691 = scmp.lt.s32.totalorder %s15, 1
      %s692 = scalar_select %p691, %s15, 1
      %s693 = smul.addr %s692, 4
      %s694 = smul.addr %s693, 4
      %s695 = scalar_lea.vmem %s4, %s694
      // Predicated region
      $region37: #{forward.4} parent=35 // pred_check
        %p696 = pneg %p122
      $region38: #{forward.4} parent=35 // pred_check_branch
        %698 = sbr.rel (%p696) target = $region40
      $region39: #{forward.4} parent=35 // pred_region
        _
      $region40: #{forward.4} parent=35 // pred_fallthru
        _
    $region36: #{forward.4} parent=5 // pred_fallthru
      _
    %p699 = scmp.le.s32.totalorder 2, %s10
    // Predicated region
    $region41: #{forward.4} parent=5 // pred_check
      %p700 = pneg %p699
    $region42: #{forward.4} parent=5 // pred_check_branch
      %702 = sbr.rel (%p700) target = $region44
    $region43: #{forward.4} parent=5 // pred_region
      %s703 = ssub.s32 %s10, 2
      // Predicated region
      $region45: #{forward.4} parent=43 // pred_check
        %p704 = pneg %p128
      $region46: #{forward.4} parent=43 // pred_check_branch
        %706 = sbr.rel (%p704) target = $region48
      $region47: #{forward.4} parent=43 // pred_region
        %p707 = scmp.lt.s32.totalorder %s16, 1
        %s708 = scalar_select %p707, %s16, 1
        %s709 = smul.addr %s708, 4
        %s710 = smul.addr %s709, 4
        %s711 = scalar_lea.vmem %s4, %s710
      $region48: #{forward.4} parent=43 // pred_fallthru
        _
    $region44: #{forward.4} parent=5 // pred_fallthru
      _
  $region6: #{forward.4} parent=0 // loop_footer
    %s14 = sadd.s32 1, %s10
  $region7: #{forward.4} parent=0 // loop_footer_branch
    %9 = sbr.rel target = $region3
  $region8: #{forward.4} parent=0 // loop_exit
    _

// kernel: forward.6
$region0: #{forward.6}
  #allocation0 [shape = 'u32[]', space=smem, size = 0x4, offset = 0x4, fixed_abs, tag = 'smem constant byte address 0x4 - core index']
  #allocation1 [shape = 'u32[144,128]{1,0:T(1,128)}', space=vmem, size = 0x12000, scoped, tag = 'internal scratch']
  #allocation2 [shape = 'f32[8,32]{1,0:T(8,128)}', space=vmem, size = 0x1000, scoped, tag = 'scratch operand']
  %s0 = inlined_call_operand.vmem [shape: f32[2,8,32], index: 0, kind: input, shape index: {}]
  %s1 = inlined_call_operand.vmem [shape: bf16[2,8,72], index: 1, kind: input, shape index: {}]
  %s2 = inlined_call_operand.vmem [shape: f32[2,8,1], index: 2, kind: input, shape index: {}]
  %s3 = inlined_call_operand.vmem [shape: f32[9,32], index: 3, kind: input, shape index: {}]
  %s4 = inlined_call_operand.vmem [shape: f32[2,8,32], index: 4, kind: output, shape index: {}]
  %s5 = sld [smem:[#allocation0]]
  $region57: #{forward.6} parent=0
    _
  %s7 = ssub.s32 1, %s5
  %s8 = scalar_select 0, %s7, %s5
  loop: start=0, step=1, limit=6
  $region2: #{forward.6} parent=0 // loop_pre_header
    _
  $region3: #{forward.6} parent=0 // loop_header
    %s10 = sphi 0, %s14
    %p11 = scmp.ge.s32.totalorder %s10, 6
    %s17 = sphi 0, %s29
    %s18 = sphi 0, %s25
    %s19 = sphi 0, %s17
    %s20 = sphi 0, %s18
    %s21 = sphi 0, %s19
    %s22 = sphi 0, %s20
    %s32 = sphi 0, %s34
    %s35 = sphi 0, %s32
    %s36 = sphi 0, %s35
    %s52 = sphi 0, %s36
    %s58 = sphi 0, %s60
    %s61 = sphi 0, %s58
    %s62 = sphi 0, %s61
    %s78 = sphi 0, %s62
    %s84 = sphi 0, %s86
    %s87 = sphi 0, %s84
    %s88 = sphi 0, %s87
    %s104 = sphi 0, %s88
    %s108 = sphi 0, %s108
    %s110 = sphi 0, %s108
    %s111 = sphi 0, %s110
    %s125 = sphi 0, %s111
    %s131 = sphi 0, %s133
    %s134 = sphi 0, %s131
    %s135 = sphi 0, %s134
    %s151 = sphi 0, %s135
  $region4: #{forward.6} parent=0 // loop_header_branch
    %13 = sbr.rel (%p11) target = $region8
  $region5: #{forward.6} parent=0 // loop_body
    %s15 = ssub.s32 %s10, 1
    %s16 = ssub.s32 %s10, 2
    %s23 = sadd.s32 1, %s18
    %p24 = scmp.ge.s32.totalorder %s23, 2
    %s25 = scalar_select %p24, 0, %s23
    %s26 = sadd.s32 1, %s17
    %s27 = scalar_select %p24, %s26, %s17
    %p28 = scmp.ge.s32.totalorder %s27, 2
    %s29 = scalar_select %p28, 0, %s27
    %s30 = ssub.s32 %s17, %s29
    %p31 = scmp.eq.s32.totalorder %s30, 0
    %s33 = sadd.s32 %s32, 1
    %s34 = scalar_select %p31, %s32, %s33
    %p37 = pneg %p31
    %p38 = scmp.eq.s32.totalorder %s10, 3
    %p39 = por %p37, %p38
    %p40 = scmp.ne.s32.totalorder %s32, %s35
    %p41 = scmp.eq.s32.totalorder %s10, 0
    %p42 = por %p40, %p41
    %p43 = scmp.ne.s32.totalorder %s32, %s35
    %p44 = scmp.eq.s32.totalorder %s15, 3
    %p45 = por %p43, %p44
    %p46 = scmp.ne.s32.totalorder %s35, %s36
    %p47 = scmp.eq.s32.totalorder %s15, 0
    %p48 = por %p46, %p47
    %p49 = scmp.ne.s32.totalorder %s35, %s36
    %p50 = scmp.eq.s32.totalorder %s16, 3
    %p51 = por %p49, %p50
    %p53 = scmp.ne.s32.totalorder %s36, %s52
    %p54 = scmp.eq.s32.totalorder %s16, 0
    %p55 = por %p53, %p54
    %s56 = ssub.s32 %s18, %s25
    %p57 = scmp.eq.s32.totalorder %s56, 0
    %s59 = sadd.s32 %s58, 1
    %s60 = scalar_select %p57, %s58, %s59
    %p63 = pneg %p57
    %p64 = scmp.eq.s32.totalorder %s10, 3
    %p65 = por %p63, %p64
    %p66 = scmp.ne.s32.totalorder %s58, %s61
    %p67 = scmp.eq.s32.totalorder %s10, 0
    %p68 = por %p66, %p67
    %p69 = scmp.ne.s32.totalorder %s58, %s61
    %p70 = scmp.eq.s32.totalorder %s15, 3
    %p71 = por %p69, %p70
    %p72 = scmp.ne.s32.totalorder %s61, %s62
    %p73 = scmp.eq.s32.totalorder %s15, 0
    %p74 = por %p72, %p73
    %p75 = scmp.ne.s32.totalorder %s61, %s62
    %p76 = scmp.eq.s32.totalorder %s16, 3
    %p77 = por %p75, %p76
    %p79 = scmp.ne.s32.totalorder %s62, %s78
    %p80 = scmp.eq.s32.totalorder %s16, 0
    %p81 = por %p79, %p80
    %s82 = ssub.s32 %s18, %s25
    %p83 = scmp.eq.s32.totalorder %s82, 0
    %s85 = sadd.s32 %s84, 1
    %s86 = scalar_select %p83, %s84, %s85
    %p89 = pneg %p83
    %p90 = scmp.eq.s32.totalorder %s10, 3
    %p91 = por %p89, %p90
    %p92 = scmp.ne.s32.totalorder %s84, %s87
    %p93 = scmp.eq.s32.totalorder %s10, 0
    %p94 = por %p92, %p93
    %p95 = scmp.ne.s32.totalorder %s84, %s87
    %p96 = scmp.eq.s32.totalorder %s15, 3
    %p97 = por %p95, %p96
    %p98 = scmp.ne.s32.totalorder %s87, %s88
    %p99 = scmp.eq.s32.totalorder %s15, 0
    %p100 = por %p98, %p99
    %p101 = scmp.ne.s32.totalorder %s87, %s88
    %p102 = scmp.eq.s32.totalorder %s16, 3
    %p103 = por %p101, %p102
    %p105 = scmp.ne.s32.totalorder %s88, %s104
    %p106 = scmp.eq.s32.totalorder %s16, 0
    %p107 = por %p105, %p106
    %s109 = sadd.s32 %s108, 1
    %p112 = scmp.eq.s32.totalorder %s10, 3
    %p113 = scmp.ne.s32.totalorder %s108, %s110
    %p114 = scmp.eq.s32.totalorder %s10, 0
    %p115 = por %p113, %p114
    %p116 = scmp.ne.s32.totalorder %s108, %s110
    %p117 = scmp.eq.s32.totalorder %s15, 3
    %p118 = por %p116, %p117
    %p119 = scmp.ne.s32.totalorder %s110, %s111
    %p120 = scmp.eq.s32.totalorder %s15, 0
    %p121 = por %p119, %p120
    %p122 = scmp.ne.s32.totalorder %s110, %s111
    %p123 = scmp.eq.s32.totalorder %s16, 3
    %p124 = por %p122, %p123
    %p126 = scmp.ne.s32.totalorder %s111, %s125
    %p127 = scmp.eq.s32.totalorder %s16, 0
    %p128 = por %p126, %p127
    %s129 = ssub.s32 %s17, %s29
    %p130 = scmp.eq.s32.totalorder %s129, 0
    %s132 = sadd.s32 %s131, 1
    %s133 = scalar_select %p130, %s131, %s132
    %p136 = pneg %p130
    %p137 = scmp.eq.s32.totalorder %s10, 3
    %p138 = por %p136, %p137
    %p139 = scmp.ne.s32.totalorder %s131, %s134
    %p140 = scmp.eq.s32.totalorder %s10, 0
    %p141 = por %p139, %p140
    %p142 = scmp.ne.s32.totalorder %s131, %s134
    %p143 = scmp.eq.s32.totalorder %s15, 3
    %p144 = por %p142, %p143
    %p145 = scmp.ne.s32.totalorder %s134, %s135
    %p146 = scmp.eq.s32.totalorder %s15, 0
    %p147 = por %p145, %p146
    %p148 = scmp.ne.s32.totalorder %s134, %s135
    %p149 = scmp.eq.s32.totalorder %s16, 3
    %p150 = por %p148, %p149
    %p152 = scmp.ne.s32.totalorder %s135, %s151
    %p153 = scmp.eq.s32.totalorder %s16, 0
    %p154 = por %p152, %p153
    %p155 = scmp.le.s32.totalorder 1, %s10
    %p156 = scmp.lt.s32.totalorder %s10, 5
    %p157 = pnand %p155, %p156
    %p158 = pneg %p157
    // Predicated region
    $region9: #{forward.6} parent=5 // pred_check
      _
    $region10: #{forward.6} parent=5 // pred_check_branch
      %160 = sbr.rel (%p157) target = $region12
    $region11: #{forward.6} parent=5 // pred_region
      %s161 = ssub.s32 %s10, 1
      // Predicated region
      $region13: #{forward.6} parent=11 // pred_check
        %p162 = pneg %p121
      $region14: #{forward.6} parent=11 // pred_check_branch
        %164 = sbr.rel (%p162) target = $region16
      $region15: #{forward.6} parent=11 // pred_region
        _
      $region16: #{forward.6} parent=11 // pred_fallthru
        _
    $region12: #{forward.6} parent=5 // pred_fallthru
      _
    %p165 = scmp.lt.s32.totalorder %s10, 4
    // Predicated region
    $region17: #{forward.6} parent=5 // pred_check
      %p166 = pneg %p165
    $region18: #{forward.6} parent=5 // pred_check_branch
      %168 = sbr.rel (%p166) target = $region20
    $region19: #{forward.6} parent=5 // pred_region
      // Predicated region
      $region21: #{forward.6} parent=19 // pred_check
        %p169 = pneg %p42
      $region22: #{forward.6} parent=19 // pred_check_branch
        %171 = sbr.rel (%p169) target = $region24
      $region23: #{forward.6} parent=19 // pred_region
        %p172 = scmp.lt.s32.totalorder %s17, 1
        %s173 = scalar_select %p172, %s17, 1
        %s174 = smul.addr %s173, 8
        %s175 = scalar_lea.vmem %s0, %s174
      $region24: #{forward.6} parent=19 // pred_fallthru
        _
      // Predicated region
      $region25: #{forward.6} parent=19 // pred_check
        %p176 = pneg %p68
      $region26: #{forward.6} parent=19 // pred_check_branch
        %178 = sbr.rel (%p176) target = $region28
      $region27: #{forward.6} parent=19 // pred_region
        %p179 = scmp.lt.s32.totalorder %s18, 1
        %s180 = scalar_select %p179, %s18, 1
        %s181 = smul.addr %s180, 4
        %s182 = scalar_lea.vmem %s1, %s181
      $region28: #{forward.6} parent=19 // pred_fallthru
        _
      // Predicated region
      $region29: #{forward.6} parent=19 // pred_check
        %p183 = pneg %p94
      $region30: #{forward.6} parent=19 // pred_check_branch
        %185 = sbr.rel (%p183) target = $region32
      $region31: #{forward.6} parent=19 // pred_region
        %p186 = scmp.lt.s32.totalorder %s18, 1
        %s187 = scalar_select %p186, %s18, 1
        %s188 = smul.addr %s187, 8
        %s189 = scalar_lea.vmem %s2, %s188
      $region32: #{forward.6} parent=19 // pred_fallthru
        _
    $region20: #{forward.6} parent=5 // pred_fallthru
      _
    %p190 = scmp.le.s32.totalorder 1, %s10
    %p191 = scmp.lt.s32.totalorder %s10, 5
    %p192 = pnand %p190, %p191
    %p193 = pneg %p192
    // Predicated region
    $region33: #{forward.6} parent=5 // pred_check
      _
    $region34: #{forward.6} parent=5 // pred_check_branch
      %195 = sbr.rel (%p192) target = $region36
    $region35: #{forward.6} parent=5 // pred_region
      %s196 = ssub.s32 %s10, 1
      %p197 = scmp.lt.s32.totalorder %s19, 1
      %s198 = scalar_select %p197, %s19, 1
      %s199 = smul.addr %s198, 8
      %s200 = scalar_lea.vmem %s0, %s199
      %p201 = pneg %p48
      %p202 = pneg %p45
      %p203 = scmp.lt.s32.totalorder %s20, 1
      %s204 = scalar_select %p203, %s20, 1
      %s205 = smul.addr %s204, 4
      %s206 = scalar_lea.vmem %s1, %s205
      %p207 = pneg %p74
      %p208 = pneg %p71
      %p209 = scmp.lt.s32.totalorder %s20, 1
      %s210 = scalar_select %p209, %s20, 1
      %s211 = smul.addr %s210, 8
      %s212 = scalar_lea.vmem %s2, %s211
      %p213 = pneg %p100
      %p214 = pneg %p97
      %p215 = pneg %p121
      %p216 = pneg %p118
      %p217 = pneg %p147
      %p218 = pneg %p144
      %p219 = scmp.lt.s32.totalorder %s19, 1
      %s220 = scalar_select %p219, %s19, 1
      %s221 = smul.addr %s220, 8
      %s222 = scalar_lea.vmem %s4, %s221
      %p223 = scmp.lt.s32.totalorder %s19, 1
      %s224 = scalar_select %p223, %s19, 1
      %s225 = smul.addr %s224, 8
      %s226 = scalar_lea.vmem %s0, %s225
      %p227 = scmp.lt.s32.totalorder %s20, 1
      %s228 = scalar_select %p227, %s20, 1
      %s229 = smul.addr %s228, 4
      %s230 = scalar_lea.vmem %s1, %s229
      %p231 = scmp.lt.s32.totalorder %s20, 1
      %s232 = scalar_select %p231, %s20, 1
      %s233 = smul.addr %s232, 8
      %s234 = scalar_lea.vmem %s2, %s233
      %p235 = scmp.lt.s32.totalorder %s19, 1
      %s236 = scalar_select %p235, %s19, 1
      %s237 = smul.addr %s236, 8
      %s238 = scalar_lea.vmem %s4, %s237
      %p240 = scmp.eq.s32.totalorder %s20, 0
      // Predicated region
      $region37: #{forward.6} parent=35 // pred_check
        %p241 = pneg %p240
      $region38: #{forward.6} parent=35 // pred_check_branch
        %243 = sbr.rel (%p241) target = $region40
      $region39: #{forward.6} parent=35 // pred_region
        %v244 = vld [vmem:[%s226] sm:$0xff]
        %vm245 = vcmask 261120
        %246 = vst.msk [vmem:[#allocation2] sm:$0xff] %vm245, %v244
      $region40: #{forward.6} parent=35 // pred_fallthru
        _
      %v247 = vld [vmem:[#allocation2] sm:$0xff]
      %vm248 = vcmp.gt.f32.partialorder %v247, 0.0
      %v249 = vmul.f32 %v247, 0.01
      %v250 = vsel %vm248, %v247, %v249
      %v251 = vld [vmem:[%s230] sm:$0xf]
      %v252 = vld [vmem:[%s234] sm:$0xff]
      %v253 = vld [vmem:[%s3] sm:$0xff]
      %v254 = vld [vmem:[%s3 + $0x8] sm:$0x1]
      %256 = vrot.lane.b32.xlu0 %v250, 101
      %v257 = vpop.permute.xlu0 %256
      %259 = vrot.lane.b32.xlu0 %v250, 5
      %v260 = vpop.permute.xlu0 %259
      %vm262 = vcmask 39936
      %v263 = vsel %vm262, %v257, %v260
      %v264 = vlaneseq
      %v265 = vshrl.u32 %v264, 7
      %v266 = vsub.s32 0, %v265
      %v267 = vrot.slane %v253, %v266
      %v268 = vmul.f32 %v263, %v267
      %269 = vrot.lane.b32.xlu0 %v250, 100
      %v270 = vpop.permute.xlu0 %269
      %272 = vrot.lane.b32.xlu0 %v250, 4
      %v273 = vpop.permute.xlu0 %272
      %vm275 = vcmask 31744
      %v276 = vsel %vm275, %v270, %v273
      %v277 = vlaneseq
      %v278 = vshrl.u32 %v277, 7
      %v279 = vsub.s32 1, %v278
      %v280 = vrot.slane %v253, %v279
      %v281 = vmul.f32 %v276, %v280
      %282 = vrot.lane.b32.xlu0 %v250, 99
      %v283 = vpop.permute.xlu0 %282
      %285 = vrot.lane.b32.xlu0 %v250, 3
      %v286 = vpop.permute.xlu0 %285
      %vm288 = vcmask 23552
      %v289 = vsel %vm288, %v283, %v286
      %v290 = vlaneseq
      %v291 = vshrl.u32 %v290, 7
      %v292 = vsub.s32 2, %v291
      %v293 = vrot.slane %v253, %v292
      %v294 = vmul.f32 %v289, %v293
      %295 = vrot.lane.b32.xlu0 %v250, 97
      %v296 = vpop.permute.xlu0 %295
      %298 = vrot.lane.b32.xlu0 %v250, 1
      %v299 = vpop.permute.xlu0 %298
      %vm301 = vcmask 7168
      %v302 = vsel %vm301, %v296, %v299
      %v303 = vlaneseq
      %v304 = vshrl.u32 %v303, 7
      %v305 = vsub.s32 3, %v304
      %v306 = vrot.slane %v253, %v305
      %v307 = vmul.f32 %v302, %v306
      %v308 = vlaneseq
      %v309 = vshrl.u32 %v308, 7
      %v310 = vsub.s32 4, %v309
      %v311 = vrot.slane %v253, %v310
      %v312 = vmul.f32 %v250, %v311
      %313 = vrot.lane.b32.xlu0 %v250, 127
      %v314 = vpop.permute.xlu0 %313
      %316 = vrot.lane.b32.xlu0 %v250, 31
      %v317 = vpop.permute.xlu0 %316
      %vm319 = vcmask 252928
      %v320 = vsel %vm319, %v314, %v317
      %v321 = vlaneseq
      %v322 = vshrl.u32 %v321, 7
      %v323 = vsub.s32 5, %v322
      %v324 = vrot.slane %v253, %v323
      %v325 = vmul.f32 %v320, %v324
      %326 = vrot.lane.b32.xlu0 %v250, 125
      %v327 = vpop.permute.xlu0 %326
      %329 = vrot.lane.b32.xlu0 %v250, 29
      %v330 = vpop.permute.xlu0 %329
      %vm332 = vcmask 236544
      %v333 = vsel %vm332, %v327, %v330
      %v334 = vlaneseq
      %v335 = vshrl.u32 %v334, 7
      %v336 = vsub.s32 6, %v335
      %v337 = vrot.slane %v253, %v336
      %v338 = vmul.f32 %v333, %v337
      %339 = vrot.lane.b32.xlu0 %v250, 124
      %v340 = vpop.permute.xlu0 %339
      %342 = vrot.lane.b32.xlu0 %v250, 28
      %v343 = vpop.permute.xlu0 %342
      %vm345 = vcmask 228352
      %v346 = vsel %vm345, %v340, %v343
      %v347 = vlaneseq
      %v348 = vshrl.u32 %v347, 7
      %v349 = vsub.s32 7, %v348
      %v350 = vrot.slane %v253, %v349
      %v351 = vmul.f32 %v346, %v350
      %352 = vrot.lane.b32.xlu0 %v250, 123
      %v353 = vpop.permute.xlu0 %352
      %355 = vrot.lane.b32.xlu0 %v250, 27
      %v356 = vpop.permute.xlu0 %355
      %vm358 = vcmask 220160
      %v359 = vsel %vm358, %v353, %v356
      %v360 = vlaneseq
      %v361 = vshrl.u32 %v360, 7
      %v362 = vsub.s32 0, %v361
      %v363 = vrot.slane %v254, %v362
      %v364 = vmul.f32 %v359, %v363
      %v365 = vpack.c.bf16 %v281, %v268
      %v366 = vpack.c.bf16 %v307, %v294
      %v367 = vpack.c.bf16 %v325, %v312
      %v368 = vpack.c.bf16 %v351, %v338
      %v369 = vpack.c.bf16 %v364, %v364
      %371 = vset.pattern.permute.xlu0 0
      %372 = vperm.xlu0 %371, %v252
      %v373 = vpop.permute.xlu0 %372
      %vm375 = vcmask 588800
      %v377 = vsel %vm375, %v251, 0
      %vm379 = vcmask 1043456
      %v381 = vsel %vm379, %v369, 0
      %383 = vmatprep.subr.bf16.mxu0 0
      %384 = vmatpush1.bf16.msra.mxu0 0
      %385 = vmatprep.subr.bf16.mxu0 0
      %386 = vmatpush1.bf16.msra.mxu0 0
      %387 = vmatprep.subr.bf16.mxu0 0
      %388 = vmatpush1.bf16.msra.mxu0 0
      %389 = vmatprep.subr.bf16.mxu0 0
      %390 = vmatpush1.bf16.msra.mxu0 %v381
      %391 = vmatprep.subr.bf16.mxu0 0
      %392 = vmatpush1.bf16.msra.mxu0 %v368
      %393 = vmatprep.subr.bf16.mxu0 0
      %394 = vmatpush1.bf16.msra.mxu0 %v367
      %395 = vmatprep.subr.bf16.mxu0 0
      %396 = vmatpush1.bf16.msra.mxu0 %v366
      %397 = vmatprep.subr.bf16.mxu0 0
      %398 = vmatpush1.bf16.msra.mxu0 %v365
      %399 = vmatprep.subr.bf16.mxu0 0
      %400 = vmatpush2.bf16.msra.mxu0 0
      %401 = vmatprep.subr.bf16.mxu0 0
      %402 = vmatpush2.bf16.msra.mxu0 0
      %403 = vmatprep.subr.bf16.mxu0 0
      %404 = vmatpush2.bf16.msra.mxu0 0
      %405 = vmatprep.subr.bf16.mxu0 0
      %406 = vmatpush2.bf16.msra.mxu0 0
      %407 = vmatprep.subr.bf16.mxu0 0
      %408 = vmatpush2.bf16.msra.mxu0 0
      %409 = vmatprep.subr.bf16.mxu0 0
      %410 = vmatpush2.bf16.msra.mxu0 0
      %411 = vmatprep.subr.bf16.mxu0 0
      %412 = vmatpush2.bf16.msra.mxu0 0
      %413 = vmatprep.subr.bf16.mxu0 0
      %414 = vmatpush2.bf16.msra.mxu0 0
      %415 = vmatprep.mubr.bf16.mxu0 0
      %416 = vmatmul.mubr.bf16.gmra.mxu0 %v377
      %v417 = vpop.f32.mrf.mxu0
      %v418 = vadd.f32 %v373, %v417
      %v419 = vpop.f32.mrf.mxu0
      %v420 = vpop.f32.mrf.mxu0
      %v421 = vpop.f32.mrf.mxu0
      %422 = vdwg.mxu0
      %v423 = vadd.f32 %v247, %v418
      %vm424 = vcmask 261120
      %425 = vst.msk [vmem:[#allocation2] sm:$0xff] %vm424, %v423
      %p426 = scmp.eq.s32.totalorder %s20, 1
      // Predicated region
      $region41: #{forward.6} parent=35 // pred_check
        %p427 = pneg %p426
      $region42: #{forward.6} parent=35 // pred_check_branch
        %429 = sbr.rel (%p427) target = $region44
      $region43: #{forward.6} parent=35 // pred_region
        %430 = vst.msk [vmem:[%s238] sm:$0xff] %vm424, %v423
      $region44: #{forward.6} parent=35 // pred_fallthru
        _
      %p431 = scmp.lt.s32.totalorder %s19, 1
      %s432 = scalar_select %p431, %s19, 1
      %s433 = smul.addr %s432, 8
      %s434 = scalar_lea.vmem %s4, %s433
      // Predicated region
      $region45: #{forward.6} parent=35 // pred_check
        %p435 = pneg %p144
      $region46: #{forward.6} parent=35 // pred_check_branch
        %437 = sbr.rel (%p435) target = $region48
      $region47: #{forward.6} parent=35 // pred_region
        _
      $region48: #{forward.6} parent=35 // pred_fallthru
        _
    $region36: #{forward.6} parent=5 // pred_fallthru
      _
    %p438 = scmp.le.s32.totalorder 2, %s10
    // Predicated region
    $region49: #{forward.6} parent=5 // pred_check
      %p439 = pneg %p438
    $region50: #{forward.6} parent=5 // pred_check_branch
      %441 = sbr.rel (%p439) target = $region52
    $region51: #{forward.6} parent=5 // pred_region
      %s442 = ssub.s32 %s10, 2
      // Predicated region
      $region53: #{forward.6} parent=51 // pred_check
        %p443 = pneg %p150
      $region54: #{forward.6} parent=51 // pred_check_branch
        %445 = sbr.rel (%p443) target = $region56
      $region55: #{forward.6} parent=51 // pred_region
        %p446 = scmp.lt.s32.totalorder %s21, 1
        %s447 = scalar_select %p446, %s21, 1
        %s448 = smul.addr %s447, 8
        %s449 = scalar_lea.vmem %s4, %s448
      $region56: #{forward.6} parent=51 // pred_fallthru
        _
    $region52: #{forward.6} parent=5 // pred_fallthru
      _
  $region6: #{forward.6} parent=0 // loop_footer
    %s14 = sadd.s32 1, %s10
  $region7: #{forward.6} parent=0 // loop_footer_branch
    %9 = sbr.rel target = $region3
  $region8: #{forward.6} parent=0 // loop_exit
    _

// kernel: forward.5
$region0: #{forward.5}
  #allocation0 [shape = 'u32[]', space=smem, size = 0x4, offset = 0x4, fixed_abs, tag = 'smem constant byte address 0x4 - core index']
  #allocation1 [shape = 'u32[144,128]{1,0:T(1,128)}', space=vmem, size = 0x12000, scoped, tag = 'internal scratch']
  #allocation2 [shape = 'f32[4,512]{1,0:T(4,128)}', space=vmem, size = 0x2000, scoped, tag = 'scratch operand']
  %s0 = inlined_call_operand.vmem [shape: f32[2,4,512], index: 0, kind: input, shape index: {}]
  %s1 = inlined_call_operand.vmem [shape: bf16[2,4,36], index: 1, kind: input, shape index: {}]
  %s2 = inlined_call_operand.vmem [shape: f32[2,4,1], index: 2, kind: input, shape index: {}]
  %s3 = inlined_call_operand.vmem [shape: bf16[8,64], index: 3, kind: input, shape index: {}]
  %s4 = inlined_call_operand.vmem [shape: f32[8,1], index: 4, kind: input, shape index: {}]
  %s5 = inlined_call_operand.hbm [shape: f32[512,32], index: 5, kind: input, shape index: {}]
  %s6 = inlined_call_operand.vmem [shape: f32[9,512], index: 6, kind: input, shape index: {}]
  %s7 = inlined_call_operand.vmem [shape: f32[2,8,32], index: 7, kind: output, shape index: {}]
  %s8 = sld [smem:[#allocation0]]
  $region73: #{forward.5} parent=0
    _
  %s10 = ssub.s32 1, %s8
  %s11 = scalar_select 0, %s10, %s8
  $region1: #{forward.5} parent=0
    #allocation3 [shape = 'u8[262144]{0}', space=vmem, size = 0x40000, scoped, tag = 'input window, operand 5, single buffered']
    #allocation4 [shape = 's32[2]{0}', space=sflag, size = 0x8, scoped, tag = 'scoped memory for forward.5']
    %12 = vsyncpa [#allocation4], 0
    loop: start=0, step=1, limit=6
    $region2: #{forward.5} parent=1 // loop_pre_header
      _
    $region3: #{forward.5} parent=1 // loop_header
      %s14 = sphi 0, %s18
      %p15 = scmp.ge.s32.totalorder %s14, 6
      %s21 = sphi 0, %s33
      %s22 = sphi 0, %s29
      %s23 = sphi 0, %s21
      %s24 = sphi 0, %s22
      %s25 = sphi 0, %s23
      %s26 = sphi 0, %s24
      %s36 = sphi 0, %s38
      %s39 = sphi 0, %s36
      %s40 = sphi 0, %s39
      %s56 = sphi 0, %s40
      %s62 = sphi 0, %s64
      %s65 = sphi 0, %s62
      %s66 = sphi 0, %s65
      %s82 = sphi 0, %s66
      %s88 = sphi 0, %s90
      %s91 = sphi 0, %s88
      %s92 = sphi 0, %s91
      %s108 = sphi 0, %s92
      %s112 = sphi 0, %s112
      %s114 = sphi 0, %s112
      %s115 = sphi 0, %s114
      %s129 = sphi 0, %s115
      %s133 = sphi 0, %s133
      %s135 = sphi 0, %s133
      %s136 = sphi 0, %s135
      %s150 = sphi 0, %s136
      %s154 = sphi 0, %s154
      %s156 = sphi 0, %s154
      %s157 = sphi 0, %s156
      %s171 = sphi 0, %s157
      %s175 = sphi 0, %s175
      %s177 = sphi 0, %s175
      %s178 = sphi 0, %s177
      %s192 = sphi 0, %s178
      %s198 = sphi 0, %s200
      %s201 = sphi 0, %s198
      %s202 = sphi 0, %s201
      %s218 = sphi 0, %s202
    $region4: #{forward.5} parent=1 // loop_header_branch
      %17 = sbr.rel (%p15) target = $region8
    $region5: #{forward.5} parent=1 // loop_body
      %s19 = ssub.s32 %s14, 1
      %s20 = ssub.s32 %s14, 2
      %s27 = sadd.s32 1, %s22
      %p28 = scmp.ge.s32.totalorder %s27, 2
      %s29 = scalar_select %p28, 0, %s27
      %s30 = sadd.s32 1, %s21
      %s31 = scalar_select %p28, %s30, %s21
      %p32 = scmp.ge.s32.totalorder %s31, 2
      %s33 = scalar_select %p32, 0, %s31
      %s34 = ssub.s32 %s21, %s33
      %p35 = scmp.eq.s32.totalorder %s34, 0
      %s37 = sadd.s32 %s36, 1
      %s38 = scalar_select %p35, %s36, %s37
      %p41 = pneg %p35
      %p42 = scmp.eq.s32.totalorder %s14, 3
      %p43 = por %p41, %p42
      %p44 = scmp.ne.s32.totalorder %s36, %s39
      %p45 = scmp.eq.s32.totalorder %s14, 0
      %p46 = por %p44, %p45
      %p47 = scmp.ne.s32.totalorder %s36, %s39
      %p48 = scmp.eq.s32.totalorder %s19, 3
      %p49 = por %p47, %p48
      %p50 = scmp.ne.s32.totalorder %s39, %s40
      %p51 = scmp.eq.s32.totalorder %s19, 0
      %p52 = por %p50, %p51
      %p53 = scmp.ne.s32.totalorder %s39, %s40
      %p54 = scmp.eq.s32.totalorder %s20, 3
      %p55 = por %p53, %p54
      %p57 = scmp.ne.s32.totalorder %s40, %s56
      %p58 = scmp.eq.s32.totalorder %s20, 0
      %p59 = por %p57, %p58
      %s60 = ssub.s32 %s22, %s29
      %p61 = scmp.eq.s32.totalorder %s60, 0
      %s63 = sadd.s32 %s62, 1
      %s64 = scalar_select %p61, %s62, %s63
      %p67 = pneg %p61
      %p68 = scmp.eq.s32.totalorder %s14, 3
      %p69 = por %p67, %p68
      %p70 = scmp.ne.s32.totalorder %s62, %s65
      %p71 = scmp.eq.s32.totalorder %s14, 0
      %p72 = por %p70, %p71
      %p73 = scmp.ne.s32.totalorder %s62, %s65
      %p74 = scmp.eq.s32.totalorder %s19, 3
      %p75 = por %p73, %p74
      %p76 = scmp.ne.s32.totalorder %s65, %s66
      %p77 = scmp.eq.s32.totalorder %s19, 0
      %p78 = por %p76, %p77
      %p79 = scmp.ne.s32.totalorder %s65, %s66
      %p80 = scmp.eq.s32.totalorder %s20, 3
      %p81 = por %p79, %p80
      %p83 = scmp.ne.s32.totalorder %s66, %s82
      %p84 = scmp.eq.s32.totalorder %s20, 0
      %p85 = por %p83, %p84
      %s86 = ssub.s32 %s22, %s29
      %p87 = scmp.eq.s32.totalorder %s86, 0
      %s89 = sadd.s32 %s88, 1
      %s90 = scalar_select %p87, %s88, %s89
      %p93 = pneg %p87
      %p94 = scmp.eq.s32.totalorder %s14, 3
      %p95 = por %p93, %p94
      %p96 = scmp.ne.s32.totalorder %s88, %s91
      %p97 = scmp.eq.s32.totalorder %s14, 0
      %p98 = por %p96, %p97
      %p99 = scmp.ne.s32.totalorder %s88, %s91
      %p100 = scmp.eq.s32.totalorder %s19, 3
      %p101 = por %p99, %p100
      %p102 = scmp.ne.s32.totalorder %s91, %s92
      %p103 = scmp.eq.s32.totalorder %s19, 0
      %p104 = por %p102, %p103
      %p105 = scmp.ne.s32.totalorder %s91, %s92
      %p106 = scmp.eq.s32.totalorder %s20, 3
      %p107 = por %p105, %p106
      %p109 = scmp.ne.s32.totalorder %s92, %s108
      %p110 = scmp.eq.s32.totalorder %s20, 0
      %p111 = por %p109, %p110
      %s113 = sadd.s32 %s112, 1
      %p116 = scmp.eq.s32.totalorder %s14, 3
      %p117 = scmp.ne.s32.totalorder %s112, %s114
      %p118 = scmp.eq.s32.totalorder %s14, 0
      %p119 = por %p117, %p118
      %p120 = scmp.ne.s32.totalorder %s112, %s114
      %p121 = scmp.eq.s32.totalorder %s19, 3
      %p122 = por %p120, %p121
      %p123 = scmp.ne.s32.totalorder %s114, %s115
      %p124 = scmp.eq.s32.totalorder %s19, 0
      %p125 = por %p123, %p124
      %p126 = scmp.ne.s32.totalorder %s114, %s115
      %p127 = scmp.eq.s32.totalorder %s20, 3
      %p128 = por %p126, %p127
      %p130 = scmp.ne.s32.totalorder %s115, %s129
      %p131 = scmp.eq.s32.totalorder %s20, 0
      %p132 = por %p130, %p131
      %s134 = sadd.s32 %s133, 1
      %p137 = scmp.eq.s32.totalorder %s14, 3
      %p138 = scmp.ne.s32.totalorder %s133, %s135
      %p139 = scmp.eq.s32.totalorder %s14, 0
      %p140 = por %p138, %p139
      %p141 = scmp.ne.s32.totalorder %s133, %s135
      %p142 = scmp.eq.s32.totalorder %s19, 3
      %p143 = por %p141, %p142
      %p144 = scmp.ne.s32.totalorder %s135, %s136
      %p145 = scmp.eq.s32.totalorder %s19, 0
      %p146 = por %p144, %p145
      %p147 = scmp.ne.s32.totalorder %s135, %s136
      %p148 = scmp.eq.s32.totalorder %s20, 3
      %p149 = por %p147, %p148
      %p151 = scmp.ne.s32.totalorder %s136, %s150
      %p152 = scmp.eq.s32.totalorder %s20, 0
      %p153 = por %p151, %p152
      %s155 = sadd.s32 %s154, 1
      %p158 = scmp.eq.s32.totalorder %s14, 3
      %p159 = scmp.ne.s32.totalorder %s154, %s156
      %p160 = scmp.eq.s32.totalorder %s14, 0
      %p161 = por %p159, %p160
      %p162 = scmp.ne.s32.totalorder %s154, %s156
      %p163 = scmp.eq.s32.totalorder %s19, 3
      %p164 = por %p162, %p163
      %p165 = scmp.ne.s32.totalorder %s156, %s157
      %p166 = scmp.eq.s32.totalorder %s19, 0
      %p167 = por %p165, %p166
      %p168 = scmp.ne.s32.totalorder %s156, %s157
      %p169 = scmp.eq.s32.totalorder %s20, 3
      %p170 = por %p168, %p169
      %p172 = scmp.ne.s32.totalorder %s157, %s171
      %p173 = scmp.eq.s32.totalorder %s20, 0
      %p174 = por %p172, %p173
      %s176 = sadd.s32 %s175, 1
      %p179 = scmp.eq.s32.totalorder %s14, 3
      %p180 = scmp.ne.s32.totalorder %s175, %s177
      %p181 = scmp.eq.s32.totalorder %s14, 0
      %p182 = por %p180, %p181
      %p183 = scmp.ne.s32.totalorder %s175, %s177
      %p184 = scmp.eq.s32.totalorder %s19, 3
      %p185 = por %p183, %p184
      %p186 = scmp.ne.s32.totalorder %s177, %s178
      %p187 = scmp.eq.s32.totalorder %s19, 0
      %p188 = por %p186, %p187
      %p189 = scmp.ne.s32.totalorder %s177, %s178
      %p190 = scmp.eq.s32.totalorder %s20, 3
      %p191 = por %p189, %p190
      %p193 = scmp.ne.s32.totalorder %s178, %s192
      %p194 = scmp.eq.s32.totalorder %s20, 0
      %p195 = por %p193, %p194
      %s196 = ssub.s32 %s21, %s33
      %p197 = scmp.eq.s32.totalorder %s196, 0
      %s199 = sadd.s32 %s198, 1
      %s200 = scalar_select %p197, %s198, %s199
      %p203 = pneg %p197
      %p204 = scmp.eq.s32.totalorder %s14, 3
      %p205 = por %p203, %p204
      %p206 = scmp.ne.s32.totalorder %s198, %s201
      %p207 = scmp.eq.s32.totalorder %s14, 0
      %p208 = por %p206, %p207
      %p209 = scmp.ne.s32.totalorder %s198, %s201
      %p210 = scmp.eq.s32.totalorder %s19, 3
      %p211 = por %p209, %p210
      %p212 = scmp.ne.s32.totalorder %s201, %s202
      %p213 = scmp.eq.s32.totalorder %s19, 0
      %p214 = por %p212, %p213
      %p215 = scmp.ne.s32.totalorder %s201, %s202
      %p216 = scmp.eq.s32.totalorder %s20, 3
      %p217 = por %p215, %p216
      %p219 = scmp.ne.s32.totalorder %s202, %s218
      %p220 = scmp.eq.s32.totalorder %s20, 0
      %p221 = por %p219, %p220
      %p222 = scmp.le.s32.totalorder 1, %s14
      %p223 = scmp.lt.s32.totalorder %s14, 5
      %p224 = pnand %p222, %p223
      %p225 = pneg %p224
      // Predicated region
      $region9: #{forward.5} parent=5 // pred_check
        _
      $region10: #{forward.5} parent=5 // pred_check_branch
        %227 = sbr.rel (%p224) target = $region12
      $region11: #{forward.5} parent=5 // pred_region
        %s228 = ssub.s32 %s14, 1
        // Predicated region
        $region13: #{forward.5} parent=11 // pred_check
          %p229 = pneg %p125
        $region14: #{forward.5} parent=11 // pred_check_branch
          %231 = sbr.rel (%p229) target = $region16
        $region15: #{forward.5} parent=11 // pred_region
          _
        $region16: #{forward.5} parent=11 // pred_fallthru
          _
        // Predicated region
        $region17: #{forward.5} parent=11 // pred_check
          %p232 = pneg %p146
        $region18: #{forward.5} parent=11 // pred_check_branch
          %234 = sbr.rel (%p232) target = $region20
        $region19: #{forward.5} parent=11 // pred_region
          _
        $region20: #{forward.5} parent=11 // pred_fallthru
          _
        // Predicated region
        $region21: #{forward.5} parent=11 // pred_check
          %p235 = pneg %p167
        $region22: #{forward.5} parent=11 // pred_check_branch
          %237 = sbr.rel (%p235) target = $region24
        $region23: #{forward.5} parent=11 // pred_region
          %s239 = ssub.s32 8192, 8192
          %240 = vsyncadd [#allocation4], %s239
          %s241 = sshll.u32 [#allocation3], 4
          %s242 = int_to_ptr.vmem [resolvable:$true] %s241
          %247 = dma.hbm_to_vmem [thread:$0]  %s5, 8192, %s242, [#allocation4], 128, 128, 8
        $region24: #{forward.5} parent=11 // pred_fallthru
          _
        // Predicated region
        $region25: #{forward.5} parent=11 // pred_check
          %p248 = pneg %p188
        $region26: #{forward.5} parent=11 // pred_check_branch
          %250 = sbr.rel (%p248) target = $region28
        $region27: #{forward.5} parent=11 // pred_region
          _
        $region28: #{forward.5} parent=11 // pred_fallthru
          _
      $region12: #{forward.5} parent=5 // pred_fallthru
        _
      %p251 = scmp.lt.s32.totalorder %s14, 4
      // Predicated region
      $region29: #{forward.5} parent=5 // pred_check
        %p252 = pneg %p251
      $region30: #{forward.5} parent=5 // pred_check_branch
        %254 = sbr.rel (%p252) target = $region32
      $region31: #{forward.5} parent=5 // pred_region
        // Predicated region
        $region33: #{forward.5} parent=31 // pred_check
          %p255 = pneg %p46
        $region34: #{forward.5} parent=31 // pred_check_branch
          %257 = sbr.rel (%p255) target = $region36
        $region35: #{forward.5} parent=31 // pred_region
          %p258 = scmp.lt.s32.totalorder %s21, 1
          %s259 = scalar_select %p258, %s21, 1
          %s260 = smul.addr %s259, 4
          %s261 = smul.addr %s260, 4
          %s262 = scalar_lea.vmem %s0, %s261
        $region36: #{forward.5} parent=31 // pred_fallthru
          _
        // Predicated region
        $region37: #{forward.5} parent=31 // pred_check
          %p263 = pneg %p72
        $region38: #{forward.5} parent=31 // pred_check_branch
          %265 = sbr.rel (%p263) target = $region40
        $region39: #{forward.5} parent=31 // pred_region
          %p266 = scmp.lt.s32.totalorder %s22, 1
          %s267 = scalar_select %p266, %s22, 1
          %s268 = smul.addr %s267, 2
          %s269 = scalar_lea.vmem %s1, %s268
        $region40: #{forward.5} parent=31 // pred_fallthru
          _
        // Predicated region
        $region41: #{forward.5} parent=31 // pred_check
          %p270 = pneg %p98
        $region42: #{forward.5} parent=31 // pred_check_branch
          %272 = sbr.rel (%p270) target = $region44
        $region43: #{forward.5} parent=31 // pred_region
          %p273 = scmp.lt.s32.totalorder %s22, 1
          %s274 = scalar_select %p273, %s22, 1
          %s275 = smul.addr %s274, 4
          %s276 = scalar_lea.vmem %s2, %s275
        $region44: #{forward.5} parent=31 // pred_fallthru
          _
      $region32: #{forward.5} parent=5 // pred_fallthru
        _
      %p277 = scmp.le.s32.totalorder 1, %s14
      %p278 = scmp.lt.s32.totalorder %s14, 5
      %p279 = pnand %p277, %p278
      %p280 = pneg %p279
      // Predicated region
      $region45: #{forward.5} parent=5 // pred_check
        _
      $region46: #{forward.5} parent=5 // pred_check_branch
        %282 = sbr.rel (%p279) target = $region48
      $region47: #{forward.5} parent=5 // pred_region
        %s283 = ssub.s32 %s14, 1
        // Predicated region
        $region49: #{forward.5} parent=47 // pred_check
          %p284 = pneg %p167
        $region50: #{forward.5} parent=47 // pred_check_branch
          %286 = sbr.rel (%p284) target = $region52
        $region51: #{forward.5} parent=47 // pred_region
          %287 = dma.done [#allocation4], 8192
        $region52: #{forward.5} parent=47 // pred_fallthru
          _
        %p288 = scmp.lt.s32.totalorder %s23, 1
        %s289 = scalar_select %p288, %s23, 1
        %s290 = smul.addr %s289, 4
        %s291 = smul.addr %s290, 4
        %s292 = scalar_lea.vmem %s0, %s291
        %p293 = pneg %p52
        %p294 = pneg %p49
        %p295 = scmp.lt.s32.totalorder %s24, 1
        %s296 = scalar_select %p295, %s24, 1
        %s297 = smul.addr %s296, 2
        %s298 = scalar_lea.vmem %s1, %s297
        %p299 = pneg %p78
        %p300 = pneg %p75
        %p301 = scmp.lt.s32.totalorder %s24, 1
        %s302 = scalar_select %p301, %s24, 1
        %s303 = smul.addr %s302, 4
        %s304 = scalar_lea.vmem %s2, %s303
        %p305 = pneg %p104
        %p306 = pneg %p101
        %p307 = pneg %p125
        %p308 = pneg %p122
        %p309 = pneg %p146
        %p310 = pneg %p143
        %p311 = pneg %p167
        %p312 = pneg %p164
        %p313 = pneg %p188
        %p314 = pneg %p185
        %p315 = pneg %p214
        %p316 = pneg %p211
        %p317 = scmp.lt.s32.totalorder %s23, 1
        %s318 = scalar_select %p317, %s23, 1
        %s319 = smul.addr %s318, 8
        %s320 = scalar_lea.vmem %s7, %s319
        %p321 = scmp.lt.s32.totalorder %s23, 1
        %s322 = scalar_select %p321, %s23, 1
        %s323 = smul.addr %s322, 4
        %s324 = smul.addr %s323, 4
        %s325 = scalar_lea.vmem %s0, %s324
        %p326 = scmp.lt.s32.totalorder %s24, 1
        %s327 = scalar_select %p326, %s24, 1
        %s328 = smul.addr %s327, 2
        %s329 = scalar_lea.vmem %s1, %s328
        %p330 = scmp.lt.s32.totalorder %s24, 1
        %s331 = scalar_select %p330, %s24, 1
        %s332 = smul.addr %s331, 4
        %s333 = scalar_lea.vmem %s2, %s332
        %p334 = scmp.lt.s32.totalorder %s23, 1
        %s335 = scalar_select %p334, %s23, 1
        %s336 = smul.addr %s335, 8
        %s337 = scalar_lea.vmem %s7, %s336
        %p339 = scmp.eq.s32.totalorder %s24, 0
        // Predicated region
        $region53: #{forward.5} parent=47 // pred_check
          %p340 = pneg %p339
        $region54: #{forward.5} parent=47 // pred_check_branch
          %342 = sbr.rel (%p340) target = $region56
        $region55: #{forward.5} parent=47 // pred_region
          %v343 = vld [vmem:[%s325] sm:$0xff]
          %v344 = vld [vmem:[%s325 + $0x8] sm:$0xff]
          %345 = vst [vmem:[#allocation2] sm:$0xff] %v343
          %346 = vst [vmem:[#allocation2 + $0x8] sm:$0xff] %v344
        $region56: #{forward.5} parent=47 // pred_fallthru
          _
        %v347 = vld [vmem:[#allocation2] sm:$0xff]
        %v348 = vld [vmem:[#allocation2 + $0x8] sm:$0xff]
        %vm349 = vcmp.gt.f32.partialorder %v347, 0.0
        %vm350 = vcmp.gt.f32.partialorder %v348, 0.0
        %v351 = vmul.f32 %v347, 0.01
        %v352 = vmul.f32 %v348, 0.01
        %v353 = vsel %vm349, %v347, %v351
        %v354 = vsel %vm350, %v348, %v352
        %v355 = vld [vmem:[%s329] sm:$0x3]
        %v356 = vld [vmem:[%s333] sm:$0xf]
        %v357 = vld [vmem:[%s6] sm:$0xff]
        %v358 = vld [vmem:[%s6 + $0x8] sm:$0xff]
        %v359 = vld [vmem:[%s6 + $0x10] sm:$0xff]
        %v360 = vld [vmem:[%s6 + $0x18] sm:$0xff]
        %v361 = vld [vmem:[%s6 + $0x20] sm:$0x1]
        %v362 = vld [vmem:[%s6 + $0x28] sm:$0x1]
        %v363 = vld [vmem:[%s6 + $0x30] sm:$0x1]
        %v364 = vld [vmem:[%s6 + $0x38] sm:$0x1]
        %v367 = vcombine.high %v353, %v353
        %v368 = vcombine.high %v354, %v354
        %371 = vrot.lane.b32.xlu0 %v353, 17
        %v372 = vpop.permute.xlu0 %371
        %373 = vrot.lane.b32.xlu0 %v367, 17
        %v374 = vpop.permute.xlu0 %373
        %375 = vrot.lane.b32.xlu0 %v354, 17
        %v376 = vpop.permute.xlu0 %375
        %377 = vrot.lane.b32.xlu0 %v368, 17
        %v378 = vpop.permute.xlu0 %377
        %v379 = vlaneseq
        %v380 = vand.u32 %v379, 127
        %vm381 = vcmp.lt.s32.totalorder %v380, 17
        %v382 = vsel %vm381, %v376, %v378
        %v383 = vsel %vm381, %v374, %v376
        %v384 = vsel %vm381, %v372, %v374
        %v385 = vsel %vm381, %v378, %v372
        %v386 = vlaneseq
        %v387 = vshrl.u32 %v386, 7
        %v388 = vsub.s32 0, %v387
        %v389 = vrot.slane %v357, %v388
        %v390 = vlaneseq
        %v391 = vshrl.u32 %v390, 7
        %v392 = vsub.s32 0, %v391
        %v393 = vrot.slane %v358, %v392
        %v394 = vlaneseq
        %v395 = vshrl.u32 %v394, 7
        %v396 = vsub.s32 0, %v395
        %v397 = vrot.slane %v359, %v396
        %v398 = vlaneseq
        %v399 = vshrl.u32 %v398, 7
        %v400 = vsub.s32 0, %v399
        %v401 = vrot.slane %v360, %v400
        %v402 = vmul.f32 %v385, %v389
        %v403 = vmul.f32 %v384, %v393
        %v404 = vmul.f32 %v383, %v397
        %v405 = vmul.f32 %v382, %v401
        %406 = vrot.lane.b32.xlu0 %v353, 16
        %v407 = vpop.permute.xlu0 %406
        %408 = vrot.lane.b32.xlu0 %v367, 16
        %v409 = vpop.permute.xlu0 %408
        %410 = vrot.lane.b32.xlu0 %v354, 16
        %v411 = vpop.permute.xlu0 %410
        %412 = vrot.lane.b32.xlu0 %v368, 16
        %v413 = vpop.permute.xlu0 %412
        %vm414 = vcmp.lt.s32.totalorder %v380, 16
        %v415 = vsel %vm414, %v411, %v413
        %v416 = vsel %vm414, %v409, %v411
        %v417 = vsel %vm414, %v407, %v409
        %v418 = vsel %vm414, %v413, %v407
        %v419 = vlaneseq
        %v420 = vshrl.u32 %v419, 7
        %v421 = vsub.s32 1, %v420
        %v422 = vrot.slane %v357, %v421
        %v423 = vlaneseq
        %v424 = vshrl.u32 %v423, 7
        %v425 = vsub.s32 1, %v424
        %v426 = vrot.slane %v358, %v425
        %v427 = vlaneseq
        %v428 = vshrl.u32 %v427, 7
        %v429 = vsub.s32 1, %v428
        %v430 = vrot.slane %v359, %v429
        %v431 = vlaneseq
        %v432 = vshrl.u32 %v431, 7
        %v433 = vsub.s32 1, %v432
        %v434 = vrot.slane %v360, %v433
        %v435 = vmul.f32 %v418, %v422
        %v436 = vmul.f32 %v417, %v426
        %v437 = vmul.f32 %v416, %v430
        %v438 = vmul.f32 %v415, %v434
        %439 = vrot.lane.b32.xlu0 %v353, 15
        %v440 = vpop.permute.xlu0 %439
        %441 = vrot.lane.b32.xlu0 %v367, 15
        %v442 = vpop.permute.xlu0 %441
        %443 = vrot.lane.b32.xlu0 %v354, 15
        %v444 = vpop.permute.xlu0 %443
        %445 = vrot.lane.b32.xlu0 %v368, 15
        %v446 = vpop.permute.xlu0 %445
        %vm447 = vcmp.lt.s32.totalorder %v380, 15
        %v448 = vsel %vm447, %v444, %v446
        %v449 = vsel %vm447, %v442, %v444
        %v450 = vsel %vm447, %v440, %v442
        %v451 = vsel %vm447, %v446, %v440
        %v452 = vlaneseq
        %v453 = vshrl.u32 %v452, 7
        %v454 = vsub.s32 2, %v453
        %v455 = vrot.slane %v357, %v454
        %v456 = vlaneseq
        %v457 = vshrl.u32 %v456, 7
        %v458 = vsub.s32 2, %v457
        %v459 = vrot.slane %v358, %v458
        %v460 = vlaneseq
        %v461 = vshrl.u32 %v460, 7
        %v462 = vsub.s32 2, %v461
        %v463 = vrot.slane %v359, %v462
        %v464 = vlaneseq
        %v465 = vshrl.u32 %v464, 7
        %v466 = vsub.s32 2, %v465
        %v467 = vrot.slane %v360, %v466
        %v468 = vmul.f32 %v451, %v455
        %v469 = vmul.f32 %v450, %v459
        %v470 = vmul.f32 %v449, %v463
        %v471 = vmul.f32 %v448, %v467
        %472 = vrot.lane.b32.xlu0 %v353, 1
        %v473 = vpop.permute.xlu0 %472
        %474 = vrot.lane.b32.xlu0 %v367, 1
        %v475 = vpop.permute.xlu0 %474
        %476 = vrot.lane.b32.xlu0 %v354, 1
        %v477 = vpop.permute.xlu0 %476
        %478 = vrot.lane.b32.xlu0 %v368, 1
        %v479 = vpop.permute.xlu0 %478
        %vm480 = vcmp.lt.s32.totalorder %v380, 1
        %v481 = vsel %vm480, %v477, %v479
        %v482 = vsel %vm480, %v475, %v477
        %v483 = vsel %vm480, %v473, %v475
        %v484 = vsel %vm480, %v479, %v473
        %v485 = vlaneseq
        %v486 = vshrl.u32 %v485, 7
        %v487 = vsub.s32 3, %v486
        %v488 = vrot.slane %v357, %v487
        %v489 = vlaneseq
        %v490 = vshrl.u32 %v489, 7
        %v491 = vsub.s32 3, %v490
        %v492 = vrot.slane %v358, %v491
        %v493 = vlaneseq
        %v494 = vshrl.u32 %v493, 7
        %v495 = vsub.s32 3, %v494
        %v496 = vrot.slane %v359, %v495
        %v497 = vlaneseq
        %v498 = vshrl.u32 %v497, 7
        %v499 = vsub.s32 3, %v498
        %v500 = vrot.slane %v360, %v499
        %v501 = vmul.f32 %v484, %v488
        %v502 = vmul.f32 %v483, %v492
        %v503 = vmul.f32 %v482, %v496
        %v504 = vmul.f32 %v481, %v500
        %v505 = vlaneseq
        %v506 = vshrl.u32 %v505, 7
        %v507 = vsub.s32 4, %v506
        %v508 = vrot.slane %v357, %v507
        %v509 = vlaneseq
        %v510 = vshrl.u32 %v509, 7
        %v511 = vsub.s32 4, %v510
        %v512 = vrot.slane %v358, %v511
        %v513 = vlaneseq
        %v514 = vshrl.u32 %v513, 7
        %v515 = vsub.s32 4, %v514
        %v516 = vrot.slane %v359, %v515
        %v517 = vlaneseq
        %v518 = vshrl.u32 %v517, 7
        %v519 = vsub.s32 4, %v518
        %v520 = vrot.slane %v360, %v519
        %v525 = vcombine.low %v508, %v512
        %v526 = vcombine.low %v516, %v520
        %v529 = vmul.f32 %v353, %v525
        %v530 = vmul.f32 %v354, %v526
        %531 = vrot.lane.b32.xlu0 %v353, 127
        %v532 = vpop.permute.xlu0 %531
        %533 = vrot.lane.b32.xlu0 %v367, 127
        %v534 = vpop.permute.xlu0 %533
        %535 = vrot.lane.b32.xlu0 %v354, 127
        %v536 = vpop.permute.xlu0 %535
        %537 = vrot.lane.b32.xlu0 %v368, 127
        %v538 = vpop.permute.xlu0 %537
        %vm539 = vcmp.lt.s32.totalorder %v380, 127
        %v540 = vsel %vm539, %v536, %v538
        %v541 = vsel %vm539, %v534, %v536
        %v542 = vsel %vm539, %v532, %v534
        %v543 = vsel %vm539, %v538, %v532
        %v544 = vlaneseq
        %v545 = vshrl.u32 %v544, 7
        %v546 = vsub.s32 5, %v545
        %v547 = vrot.slane %v357, %v546
        %v548 = vlaneseq
        %v549 = vshrl.u32 %v548, 7
        %v550 = vsub.s32 5, %v549
        %v551 = vrot.slane %v358, %v550
        %v552 = vlaneseq
        %v553 = vshrl.u32 %v552, 7
        %v554 = vsub.s32 5, %v553
        %v555 = vrot.slane %v359, %v554
        %v556 = vlaneseq
        %v557 = vshrl.u32 %v556, 7
        %v558 = vsub.s32 5, %v557
        %v559 = vrot.slane %v360, %v558
        %v560 = vmul.f32 %v542, %v547
        %v561 = vmul.f32 %v541, %v551
        %v562 = vmul.f32 %v540, %v555
        %v563 = vmul.f32 %v543, %v559
        %564 = vrot.lane.b32.xlu0 %v353, 113
        %v565 = vpop.permute.xlu0 %564
        %566 = vrot.lane.b32.xlu0 %v367, 113
        %v567 = vpop.permute.xlu0 %566
        %568 = vrot.lane.b32.xlu0 %v354, 113
        %v569 = vpop.permute.xlu0 %568
        %570 = vrot.lane.b32.xlu0 %v368, 113
        %v571 = vpop.permute.xlu0 %570
        %vm572 = vcmp.lt.s32.totalorder %v380, 113
        %v573 = vsel %vm572, %v569, %v571
        %v574 = vsel %vm572, %v567, %v569
        %v575 = vsel %vm572, %v565, %v567
        %v576 = vsel %vm572, %v571, %v565
        %v577 = vlaneseq
        %v578 = vshrl.u32 %v577, 7
        %v579 = vsub.s32 6, %v578
        %v580 = vrot.slane %v357, %v579
        %v581 = vlaneseq
        %v582 = vshrl.u32 %v581, 7
        %v583 = vsub.s32 6, %v582
        %v584 = vrot.slane %v358, %v583
        %v585 = vlaneseq
        %v586 = vshrl.u32 %v585, 7
        %v587 = vsub.s32 6, %v586
        %v588 = vrot.slane %v359, %v587
        %v589 = vlaneseq
        %v590 = vshrl.u32 %v589, 7
        %v591 = vsub.s32 6, %v590
        %v592 = vrot.slane %v360, %v591
        %v593 = vmul.f32 %v575, %v580
        %v594 = vmul.f32 %v574, %v584
        %v595 = vmul.f32 %v573, %v588
        %v596 = vmul.f32 %v576, %v592
        %597 = vrot.lane.b32.xlu0 %v353, 112
        %v598 = vpop.permute.xlu0 %597
        %599 = vrot.lane.b32.xlu0 %v367, 112
        %v600 = vpop.permute.xlu0 %599
        %601 = vrot.lane.b32.xlu0 %v354, 112
        %v602 = vpop.permute.xlu0 %601
        %603 = vrot.lane.b32.xlu0 %v368, 112
        %v604 = vpop.permute.xlu0 %603
        %vm605 = vcmp.lt.s32.totalorder %v380, 112
        %v606 = vsel %vm605, %v602, %v604
        %v607 = vsel %vm605, %v600, %v602
        %v608 = vsel %vm605, %v598, %v600
        %v609 = vsel %vm605, %v604, %v598
        %v610 = vlaneseq
        %v611 = vshrl.u32 %v610, 7
        %v612 = vsub.s32 7, %v611
        %v613 = vrot.slane %v357, %v612
        %v614 = vlaneseq
        %v615 = vshrl.u32 %v614, 7
        %v616 = vsub.s32 7, %v615
        %v617 = vrot.slane %v358, %v616
        %v618 = vlaneseq
        %v619 = vshrl.u32 %v618, 7
        %v620 = vsub.s32 7, %v619
        %v621 = vrot.slane %v359, %v620
        %v622 = vlaneseq
        %v623 = vshrl.u32 %v622, 7
        %v624 = vsub.s32 7, %v623
        %v625 = vrot.slane %v360, %v624
        %v626 = vmul.f32 %v608, %v613
        %v627 = vmul.f32 %v607, %v617
        %v628 = vmul.f32 %v606, %v621
        %v629 = vmul.f32 %v609, %v625
        %630 = vrot.lane.b32.xlu0 %v353, 111
        %v631 = vpop.permute.xlu0 %630
        %632 = vrot.lane.b32.xlu0 %v367, 111
        %v633 = vpop.permute.xlu0 %632
        %634 = vrot.lane.b32.xlu0 %v354, 111
        %v635 = vpop.permute.xlu0 %634
        %636 = vrot.lane.b32.xlu0 %v368, 111
        %v637 = vpop.permute.xlu0 %636
        %vm638 = vcmp.lt.s32.totalorder %v380, 111
        %v639 = vsel %vm638, %v635, %v637
        %v640 = vsel %vm638, %v633, %v635
        %v641 = vsel %vm638, %v631, %v633
        %v642 = vsel %vm638, %v637, %v631
        %v643 = vlaneseq
        %v644 = vshrl.u32 %v643, 7
        %v645 = vsub.s32 0, %v644
        %v646 = vrot.slane %v361, %v645
        %v647 = vlaneseq
        %v648 = vshrl.u32 %v647, 7
        %v649 = vsub.s32 0, %v648
        %v650 = vrot.slane %v362, %v649
        %v651 = vlaneseq
        %v652 = vshrl.u32 %v651, 7
        %v653 = vsub.s32 0, %v652
        %v654 = vrot.slane %v363, %v653
        %v655 = vlaneseq
        %v656 = vshrl.u32 %v655, 7
        %v657 = vsub.s32 0, %v656
        %v658 = vrot.slane %v364, %v657
        %v659 = vmul.f32 %v641, %v646
        %v660 = vmul.f32 %v640, %v650
        %v661 = vmul.f32 %v639, %v654
        %v662 = vmul.f32 %v642, %v658
        %v667 = vrot.slane %v435, 4
        %v668 = vrot.slane %v436, 4
        %v669 = vrot.slane %v437, 4
        %v670 = vrot.slane %v438, 4
        %v679 = vrot.slane %v501, 4
        %v680 = vrot.slane %v502, 4
        %v681 = vrot.slane %v503, 4
        %v682 = vrot.slane %v504, 4
        %v689 = vcombine.high %v529, %v529
        %v690 = vcombine.high %v530, %v530
        %v697 = vrot.slane %v560, 4
        %v698 = vrot.slane %v561, 4
        %v699 = vrot.slane %v562, 4
        %v700 = vrot.slane %v563, 4
        %v709 = vrot.slane %v626, 4
        %v710 = vrot.slane %v627, 4
        %v711 = vrot.slane %v628, 4
        %v712 = vrot.slane %v629, 4
        %vm717 = vcmask 1043456
        %v718 = vsel %vm717, %v402, %v667
        %v719 = vsel %vm717, %v403, %v668
        %v720 = vsel %vm717, %v404, %v669
        %v721 = vsel %vm717, %v405, %v670
        %v722 = vsel %vm717, %v468, %v679
        %v723 = vsel %vm717, %v469, %v680
        %v724 = vsel %vm717, %v470, %v681
        %v725 = vsel %vm717, %v471, %v682
        %v726 = vsel %vm717, %v529, %v697
        %v727 = vsel %vm717, %v689, %v698
        %v728 = vsel %vm717, %v530, %v699
        %v729 = vsel %vm717, %v690, %v700
        %v730 = vsel %vm717, %v593, %v709
        %v731 = vsel %vm717, %v594, %v710
        %v732 = vsel %vm717, %v595, %v711
        %v733 = vsel %vm717, %v596, %v712
        %v734 = vpack.c.bf16 %v722, %v718
        %v735 = vpack.c.bf16 %v723, %v719
        %v736 = vpack.c.bf16 %v724, %v720
        %v737 = vpack.c.bf16 %v725, %v721
        %v738 = vpack.c.bf16 %v730, %v726
        %v739 = vpack.c.bf16 %v731, %v727
        %v740 = vpack.c.bf16 %v732, %v728
        %v741 = vpack.c.bf16 %v733, %v729
        %v742 = vpack.c.bf16 %v659, %v659
        %v743 = vpack.c.bf16 %v660, %v660
        %v744 = vpack.c.bf16 %v661, %v661
        %v745 = vpack.c.bf16 %v662, %v662
        %747 = vset.pattern.permute.xlu0 0
        %748 = vperm.xlu0 %747, %v356
        %v749 = vpop.permute.xlu0 %748
        %vm751 = vcmask 293888
        %v753 = vsel %vm751, %v355, 0
        %vm755 = vcmask 1041408
        %v757 = vsel %vm755, %v742, 0
        %v760 = vsel %vm755, %v743, 0
        %v763 = vsel %vm755, %v744, 0
        %v766 = vsel %vm755, %v745, 0
        %768 = vmatprep.subr.bf16.mxu0 0
        %769 = vmatpush1.bf16.msra.mxu0 0
        %770 = vmatprep.subr.bf16.mxu0 0
        %771 = vmatpush1.bf16.msra.mxu0 0
        %772 = vmatprep.subr.bf16.mxu0 0
        %773 = vmatpush1.bf16.msra.mxu0 0
        %774 = vmatprep.subr.bf16.mxu0 0
        %775 = vmatpush1.bf16.msra.mxu0 0
        %776 = vmatprep.subr.bf16.mxu0 0
        %777 = vmatpush1.bf16.msra.mxu0 0
        %778 = vmatprep.subr.bf16.mxu0 %v760
        %779 = vmatpush1.bf16.msra.mxu0 %v757
        %780 = vmatprep.subr.bf16.mxu0 %v739
        %781 = vmatpush1.bf16.msra.mxu0 %v738
        %782 = vmatprep.subr.bf16.mxu0 %v735
        %783 = vmatpush1.bf16.msra.mxu0 %v734
        %784 = vmatprep.subr.bf16.mxu0 0
        %785 = vmatpush2.bf16.msra.mxu0 0
        %786 = vmatprep.subr.bf16.mxu0 0
        %787 = vmatpush2.bf16.msra.mxu0 0
        %788 = vmatprep.subr.bf16.mxu0 0
        %789 = vmatpush2.bf16.msra.mxu0 0
        %790 = vmatprep.subr.bf16.mxu0 0
        %791 = vmatpush2.bf16.msra.mxu0 0
        %792 = vmatprep.subr.bf16.mxu0 0
        %793 = vmatpush2.bf16.msra.mxu0 0
        %794 = vmatprep.subr.bf16.mxu0 0
        %795 = vmatpush2.bf16.msra.mxu0 0
        %796 = vmatprep.subr.bf16.mxu0 0
        %797 = vmatpush2.bf16.msra.mxu0 0
        %798 = vmatprep.subr.bf16.mxu0 0
        %799 = vmatpush2.bf16.msra.mxu0 0
        %800 = vmatprep.mubr.bf16.mxu0 0
        %801 = vmatmul.mubr.bf16.gmra.mxu0 %v753
        %v802 = vpop.f32.mrf.mxu0
        %v803 = vadd.f32 %v749, %v802
        %v804 = vpop.f32.mrf.mxu0
        %v805 = vadd.f32 %v749, %v804
        %v806 = vpop.f32.mrf.mxu0
        %v807 = vpop.f32.mrf.mxu0
        %808 = vdwg.mxu0
        %809 = vmatprep.subr.bf16.mxu0 0
        %810 = vmatpush1.bf16.msra.mxu0 0
        %811 = vmatprep.subr.bf16.mxu0 0
        %812 = vmatpush1.bf16.msra.mxu0 0
        %813 = vmatprep.subr.bf16.mxu0 0
        %814 = vmatpush1.bf16.msra.mxu0 0
        %815 = vmatprep.subr.bf16.mxu0 0
        %816 = vmatpush1.bf16.msra.mxu0 0
        %817 = vmatprep.subr.bf16.mxu0 0
        %818 = vmatpush1.bf16.msra.mxu0 0
        %819 = vmatprep.subr.bf16.mxu0 %v766
        %820 = vmatpush1.bf16.msra.mxu0 %v763
        %821 = vmatprep.subr.bf16.mxu0 %v741
        %822 = vmatpush1.bf16.msra.mxu0 %v740
        %823 = vmatprep.subr.bf16.mxu0 %v737
        %824 = vmatpush1.bf16.msra.mxu0 %v736
        %825 = vmatprep.subr.bf16.mxu0 0
        %826 = vmatpush2.bf16.msra.mxu0 0
        %827 = vmatprep.subr.bf16.mxu0 0
        %828 = vmatpush2.bf16.msra.mxu0 0
        %829 = vmatprep.subr.bf16.mxu0 0
        %830 = vmatpush2.bf16.msra.mxu0 0
        %831 = vmatprep.subr.bf16.mxu0 0
        %832 = vmatpush2.bf16.msra.mxu0 0
        %833 = vmatprep.subr.bf16.mxu0 0
        %834 = vmatpush2.bf16.msra.mxu0 0
        %835 = vmatprep.subr.bf16.mxu0 0
        %836 = vmatpush2.bf16.msra.mxu0 0
        %837 = vmatprep.subr.bf16.mxu0 0
        %838 = vmatpush2.bf16.msra.mxu0 0
        %839 = vmatprep.subr.bf16.mxu0 0
        %840 = vmatpush2.bf16.msra.mxu0 0
        %841 = vmatprep.mubr.bf16.mxu0 0
        %842 = vmatmul.mubr.bf16.gmra.mxu0 %v753
        %v843 = vpop.f32.mrf.mxu0
        %v844 = vadd.f32 %v749, %v843
        %v845 = vpop.f32.mrf.mxu0
        %v846 = vadd.f32 %v749, %v845
        %v847 = vpop.f32.mrf.mxu0
        %v848 = vpop.f32.mrf.mxu0
        %849 = vdwg.mxu0
        %v854 = vcombine.low %v803, %v805
        %v855 = vcombine.low %v844, %v846
        %v858 = vadd.f32 %v347, %v854
        %v859 = vadd.f32 %v348, %v855
        %860 = vst [vmem:[#allocation2] sm:$0xff] %v858
        %861 = vst [vmem:[#allocation2 + $0x8] sm:$0xff] %v859
        %p862 = scmp.eq.s32.totalorder %s24, 1
        // Predicated region
        $region57: #{forward.5} parent=47 // pred_check
          %p863 = pneg %p862
        $region58: #{forward.5} parent=47 // pred_check_branch
          %865 = sbr.rel (%p863) target = $region60
        $region59: #{forward.5} parent=47 // pred_region
          %v868 = vcombine.high %v858, %v858
          %v869 = vcombine.high %v859, %v859
          %872 = vrot.lane.b32.xlu0 %v858, 127
          %v873 = vpop.permute.xlu0 %872
          %874 = vrot.lane.b32.xlu0 %v868, 127
          %v875 = vpop.permute.xlu0 %874
          %876 = vrot.lane.b32.xlu0 %v859, 127
          %v877 = vpop.permute.xlu0 %876
          %878 = vrot.lane.b32.xlu0 %v869, 127
          %v879 = vpop.permute.xlu0 %878
          %v880 = vsel %vm539, %v877, %v879
          %v881 = vsel %vm539, %v875, %v877
          %v882 = vsel %vm539, %v873, %v875
          %v883 = vsel %vm539, %v879, %v873
          %884 = vrot.lane.b32.xlu0 %v858, 126
          %v885 = vpop.permute.xlu0 %884
          %886 = vrot.lane.b32.xlu0 %v868, 126
          %v887 = vpop.permute.xlu0 %886
          %888 = vrot.lane.b32.xlu0 %v859, 126
          %v889 = vpop.permute.xlu0 %888
          %890 = vrot.lane.b32.xlu0 %v869, 126
          %v891 = vpop.permute.xlu0 %890
          %vm892 = vcmp.lt.s32.totalorder %v380, 126
          %v893 = vsel %vm892, %v889, %v891
          %v894 = vsel %vm892, %v887, %v889
          %v895 = vsel %vm892, %v885, %v887
          %v896 = vsel %vm892, %v891, %v885
          %897 = vrot.lane.b32.xlu0 %v858, 125
          %v898 = vpop.permute.xlu0 %897
          %899 = vrot.lane.b32.xlu0 %v868, 125
          %v900 = vpop.permute.xlu0 %899
          %901 = vrot.lane.b32.xlu0 %v859, 125
          %v902 = vpop.permute.xlu0 %901
          %903 = vrot.lane.b32.xlu0 %v869, 125
          %v904 = vpop.permute.xlu0 %903
          %vm905 = vcmp.lt.s32.totalorder %v380, 125
          %v906 = vsel %vm905, %v902, %v904
          %v907 = vsel %vm905, %v900, %v902
          %v908 = vsel %vm905, %v898, %v900
          %v909 = vsel %vm905, %v904, %v898
          %910 = vrot.lane.b32.xlu0 %v858, 112
          %v911 = vpop.permute.xlu0 %910
          %912 = vrot.lane.b32.xlu0 %v868, 112
          %v913 = vpop.permute.xlu0 %912
          %914 = vrot.lane.b32.xlu0 %v859, 112
          %v915 = vpop.permute.xlu0 %914
          %916 = vrot.lane.b32.xlu0 %v869, 112
          %v917 = vpop.permute.xlu0 %916
          %v918 = vsel %vm605, %v915, %v917
          %v919 = vsel %vm605, %v913, %v915
          %v920 = vsel %vm605, %v911, %v913
          %v921 = vsel %vm605, %v917, %v911
          %922 = vrot.lane.b32.xlu0 %v858, 111
          %v923 = vpop.permute.xlu0 %922
          %924 = vrot.lane.b32.xlu0 %v868, 111
          %v925 = vpop.permute.xlu0 %924
          %926 = vrot.lane.b32.xlu0 %v859, 111
          %v927 = vpop.permute.xlu0 %926
          %928 = vrot.lane.b32.xlu0 %v869, 111
          %v929 = vpop.permute.xlu0 %928
          %v930 = vsel %vm638, %v927, %v929
          %v931 = vsel %vm638, %v925, %v927
          %v932 = vsel %vm638, %v923, %v925
          %v933 = vsel %vm638, %v929, %v923
          %934 = vrot.lane.b32.xlu0 %v858, 110
          %v935 = vpop.permute.xlu0 %934
          %936 = vrot.lane.b32.xlu0 %v868, 110
          %v937 = vpop.permute.xlu0 %936
          %938 = vrot.lane.b32.xlu0 %v859, 110
          %v939 = vpop.permute.xlu0 %938
          %940 = vrot.lane.b32.xlu0 %v869, 110
          %v941 = vpop.permute.xlu0 %940
          %vm942 = vcmp.lt.s32.totalorder %v380, 110
          %v943 = vsel %vm942, %v939, %v941
          %v944 = vsel %vm942, %v937, %v939
          %v945 = vsel %vm942, %v935, %v937
          %v946 = vsel %vm942, %v941, %v935
          %947 = vrot.lane.b32.xlu0 %v858, 109
          %v948 = vpop.permute.xlu0 %947
          %949 = vrot.lane.b32.xlu0 %v868, 109
          %v950 = vpop.permute.xlu0 %949
          %951 = vrot.lane.b32.xlu0 %v859, 109
          %v952 = vpop.permute.xlu0 %951
          %953 = vrot.lane.b32.xlu0 %v869, 109
          %v954 = vpop.permute.xlu0 %953
          %vm955 = vcmp.lt.s32.totalorder %v380, 109
          %v956 = vsel %vm955, %v952, %v954
          %v957 = vsel %vm955, %v950, %v952
          %v958 = vsel %vm955, %v948, %v950
          %v959 = vsel %vm955, %v954, %v948
          %960 = vrot.lane.b32.xlu0 %v858, 96
          %v961 = vpop.permute.xlu0 %960
          %962 = vrot.lane.b32.xlu0 %v868, 96
          %v963 = vpop.permute.xlu0 %962
          %964 = vrot.lane.b32.xlu0 %v859, 96
          %v965 = vpop.permute.xlu0 %964
          %966 = vrot.lane.b32.xlu0 %v869, 96
          %v967 = vpop.permute.xlu0 %966
          %vm968 = vcmp.lt.s32.totalorder %v380, 96
          %v969 = vsel %vm968, %v965, %v967
          %v970 = vsel %vm968, %v963, %v965
          %v971 = vsel %vm968, %v961, %v963
          %v972 = vsel %vm968, %v967, %v961
          %973 = vrot.lane.b32.xlu0 %v858, 95
          %v974 = vpop.permute.xlu0 %973
          %975 = vrot.lane.b32.xlu0 %v868, 95
          %v976 = vpop.permute.xlu0 %975
          %977 = vrot.lane.b32.xlu0 %v859, 95
          %v978 = vpop.permute.xlu0 %977
          %979 = vrot.lane.b32.xlu0 %v869, 95
          %v980 = vpop.permute.xlu0 %979
          %vm981 = vcmp.lt.s32.totalorder %v380, 95
          %v982 = vsel %vm981, %v978, %v980
          %v983 = vsel %vm981, %v976, %v978
          %v984 = vsel %vm981, %v974, %v976
          %v985 = vsel %vm981, %v980, %v974
          %986 = vrot.lane.b32.xlu0 %v858, 94
          %v987 = vpop.permute.xlu0 %986
          %988 = vrot.lane.b32.xlu0 %v868, 94
          %v989 = vpop.permute.xlu0 %988
          %990 = vrot.lane.b32.xlu0 %v859, 94
          %v991 = vpop.permute.xlu0 %990
          %992 = vrot.lane.b32.xlu0 %v869, 94
          %v993 = vpop.permute.xlu0 %992
          %vm994 = vcmp.lt.s32.totalorder %v380, 94
          %v995 = vsel %vm994, %v991, %v993
          %v996 = vsel %vm994, %v989, %v991
          %v997 = vsel %vm994, %v987, %v989
          %v998 = vsel %vm994, %v993, %v987
          %999 = vrot.lane.b32.xlu0 %v858, 93
          %v1000 = vpop.permute.xlu0 %999
          %1001 = vrot.lane.b32.xlu0 %v868, 93
          %v1002 = vpop.permute.xlu0 %1001
          %1003 = vrot.lane.b32.xlu0 %v859, 93
          %v1004 = vpop.permute.xlu0 %1003
          %1005 = vrot.lane.b32.xlu0 %v869, 93
          %v1006 = vpop.permute.xlu0 %1005
          %vm1007 = vcmp.lt.s32.totalorder %v380, 93
          %v1008 = vsel %vm1007, %v1004, %v1006
          %v1009 = vsel %vm1007, %v1002, %v1004
          %v1010 = vsel %vm1007, %v1000, %v1002
          %v1011 = vsel %vm1007, %v1006, %v1000
          %1012 = vrot.lane.b32.xlu0 %v858, 80
          %v1013 = vpop.permute.xlu0 %1012
          %1014 = vrot.lane.b32.xlu0 %v868, 80
          %v1015 = vpop.permute.xlu0 %1014
          %1016 = vrot.lane.b32.xlu0 %v859, 80
          %v1017 = vpop.permute.xlu0 %1016
          %1018 = vrot.lane.b32.xlu0 %v869, 80
          %v1019 = vpop.permute.xlu0 %1018
          %vm1020 = vcmp.lt.s32.totalorder %v380, 80
          %v1021 = vsel %vm1020, %v1017, %v1019
          %v1022 = vsel %vm1020, %v1015, %v1017
          %v1023 = vsel %vm1020, %v1013, %v1015
          %v1024 = vsel %vm1020, %v1019, %v1013
          %1025 = vrot.lane.b32.xlu0 %v858, 79
          %v1026 = vpop.permute.xlu0 %1025
          %1027 = vrot.lane.b32.xlu0 %v868, 79
          %v1028 = vpop.permute.xlu0 %1027
          %1029 = vrot.lane.b32.xlu0 %v859, 79
          %v1030 = vpop.permute.xlu0 %1029
          %1031 = vrot.lane.b32.xlu0 %v869, 79
          %v1032 = vpop.permute.xlu0 %1031
          %vm1033 = vcmp.lt.s32.totalorder %v380, 79
          %v1034 = vsel %vm1033, %v1030, %v1032
          %v1035 = vsel %vm1033, %v1028, %v1030
          %v1036 = vsel %vm1033, %v1026, %v1028
          %v1037 = vsel %vm1033, %v1032, %v1026
          %1038 = vrot.lane.b32.xlu0 %v858, 78
          %v1039 = vpop.permute.xlu0 %1038
          %1040 = vrot.lane.b32.xlu0 %v868, 78
          %v1041 = vpop.permute.xlu0 %1040
          %1042 = vrot.lane.b32.xlu0 %v859, 78
          %v1043 = vpop.permute.xlu0 %1042
          %1044 = vrot.lane.b32.xlu0 %v869, 78
          %v1045 = vpop.permute.xlu0 %1044
          %vm1046 = vcmp.lt.s32.totalorder %v380, 78
          %v1047 = vsel %vm1046, %v1043, %v1045
          %v1048 = vsel %vm1046, %v1041, %v1043
          %v1049 = vsel %vm1046, %v1039, %v1041
          %v1050 = vsel %vm1046, %v1045, %v1039
          %1051 = vrot.lane.b32.xlu0 %v858, 77
          %v1052 = vpop.permute.xlu0 %1051
          %1053 = vrot.lane.b32.xlu0 %v868, 77
          %v1054 = vpop.permute.xlu0 %1053
          %1055 = vrot.lane.b32.xlu0 %v859, 77
          %v1056 = vpop.permute.xlu0 %1055
          %1057 = vrot.lane.b32.xlu0 %v869, 77
          %v1058 = vpop.permute.xlu0 %1057
          %vm1059 = vcmp.lt.s32.totalorder %v380, 77
          %v1060 = vsel %vm1059, %v1056, %v1058
          %v1061 = vsel %vm1059, %v1054, %v1056
          %v1062 = vsel %vm1059, %v1052, %v1054
          %v1063 = vsel %vm1059, %v1058, %v1052
          %v1068 = vrot.slane %v882, 4
          %v1069 = vrot.slane %v881, 4
          %v1070 = vrot.slane %v880, 4
          %v1071 = vrot.slane %v883, 4
          %v1080 = vrot.slane %v908, 4
          %v1081 = vrot.slane %v907, 4
          %v1082 = vrot.slane %v906, 4
          %v1083 = vrot.slane %v909, 4
          %v1092 = vrot.slane %v932, 4
          %v1093 = vrot.slane %v931, 4
          %v1094 = vrot.slane %v930, 4
          %v1095 = vrot.slane %v933, 4
          %v1104 = vrot.slane %v958, 4
          %v1105 = vrot.slane %v957, 4
          %v1106 = vrot.slane %v956, 4
          %v1107 = vrot.slane %v959, 4
          %v1116 = vrot.slane %v984, 4
          %v1117 = vrot.slane %v983, 4
          %v1118 = vrot.slane %v982, 4
          %v1119 = vrot.slane %v985, 4
          %v1128 = vrot.slane %v1010, 4
          %v1129 = vrot.slane %v1009, 4
          %v1130 = vrot.slane %v1008, 4
          %v1131 = vrot.slane %v1011, 4
          %v1140 = vrot.slane %v1036, 4
          %v1141 = vrot.slane %v1035, 4
          %v1142 = vrot.slane %v1034, 4
          %v1143 = vrot.slane %v1037, 4
          %v1152 = vrot.slane %v1062, 4
          %v1153 = vrot.slane %v1061, 4
          %v1154 = vrot.slane %v1060, 4
          %v1155 = vrot.slane %v1063, 4
          %v1160 = vsel %vm717, %v858, %v1068
          %v1161 = vsel %vm717, %v868, %v1069
          %v1162 = vsel %vm717, %v859, %v1070
          %v1163 = vsel %vm717, %v869, %v1071
          %v1164 = vsel %vm717, %v895, %v1080
          %v1165 = vsel %vm717, %v894, %v1081
          %v1166 = vsel %vm717, %v893, %v1082
          %v1167 = vsel %vm717, %v896, %v1083
          %v1168 = vsel %vm717, %v920, %v1092
          %v1169 = vsel %vm717, %v919, %v1093
          %v1170 = vsel %vm717, %v918, %v1094
          %v1171 = vsel %vm717, %v921, %v1095
          %v1172 = vsel %vm717, %v945, %v1104
          %v1173 = vsel %vm717, %v944, %v1105
          %v1174 = vsel %vm717, %v943, %v1106
          %v1175 = vsel %vm717, %v946, %v1107
          %v1176 = vsel %vm717, %v971, %v1116
          %v1177 = vsel %vm717, %v970, %v1117
          %v1178 = vsel %vm717, %v969, %v1118
          %v1179 = vsel %vm717, %v972, %v1119
          %v1180 = vsel %vm717, %v997, %v1128
          %v1181 = vsel %vm717, %v996, %v1129
          %v1182 = vsel %vm717, %v995, %v1130
          %v1183 = vsel %vm717, %v998, %v1131
          %v1184 = vsel %vm717, %v1023, %v1140
          %v1185 = vsel %vm717, %v1022, %v1141
          %v1186 = vsel %vm717, %v1021, %v1142
          %v1187 = vsel %vm717, %v1024, %v1143
          %v1188 = vsel %vm717, %v1049, %v1152
          %v1189 = vsel %vm717, %v1048, %v1153
          %v1190 = vsel %vm717, %v1047, %v1154
          %v1191 = vsel %vm717, %v1050, %v1155
          %v1192 = vpack.c.bf16 %v1164, %v1160
          %v1193 = vpack.c.bf16 %v1165, %v1161
          %v1194 = vpack.c.bf16 %v1166, %v1162
          %v1195 = vpack.c.bf16 %v1167, %v1163
          %v1196 = vpack.c.bf16 %v1172, %v1168
          %v1197 = vpack.c.bf16 %v1173, %v1169
          %v1198 = vpack.c.bf16 %v1174, %v1170
          %v1199 = vpack.c.bf16 %v1175, %v1171
          %v1200 = vpack.c.bf16 %v1180, %v1176
          %v1201 = vpack.c.bf16 %v1181, %v1177
          %v1202 = vpack.c.bf16 %v1182, %v1178
          %v1203 = vpack.c.bf16 %v1183, %v1179
          %v1204 = vpack.c.bf16 %v1188, %v1184
          %v1205 = vpack.c.bf16 %v1189, %v1185
          %v1206 = vpack.c.bf16 %v1190, %v1186
          %v1207 = vpack.c.bf16 %v1191, %v1187
          %v1208 = vld [vmem:[%s3] sm:$0xf]
          %vm1209 = vcmask 523264
          %v1211 = vsel %vm1209, %v1208, 0
          %1213 = vmatprep.subr.bf16.mxu0 0
          %1214 = vmatpush1.bf16.msra.mxu0 0
          %1215 = vmatprep.subr.bf16.mxu0 0
          %1216 = vmatpush1.bf16.msra.mxu0 0
          %1217 = vmatprep.subr.bf16.mxu0 0
          %1218 = vmatpush1.bf16.msra.mxu0 0
          %1219 = vmatprep.subr.bf16.mxu0 0
          %1220 = vmatpush1.bf16.msra.mxu0 0
          %1221 = vmatprep.subr.bf16.mxu0 %v1205
          %1222 = vmatpush1.bf16.msra.mxu0 %v1204
          %1223 = vmatprep.subr.bf16.mxu0 %v1201
          %1224 = vmatpush1.bf16.msra.mxu0 %v1200
          %1225 = vmatprep.subr.bf16.mxu0 %v1197
          %1226 = vmatpush1.bf16.msra.mxu0 %v1196
          %1227 = vmatprep.subr.bf16.mxu0 %v1193
          %1228 = vmatpush1.bf16.msra.mxu0 %v1192
          %1229 = vmatprep.subr.bf16.mxu0 0
          %1230 = vmatpush2.bf16.msra.mxu0 0
          %1231 = vmatprep.subr.bf16.mxu0 0
          %1232 = vmatpush2.bf16.msra.mxu0 0
          %1233 = vmatprep.subr.bf16.mxu0 0
          %1234 = vmatpush2.bf16.msra.mxu0 0
          %1235 = vmatprep.subr.bf16.mxu0 0
          %1236 = vmatpush2.bf16.msra.mxu0 0
          %1237 = vmatprep.subr.bf16.mxu0 0
          %1238 = vmatpush2.bf16.msra.mxu0 0
          %1239 = vmatprep.subr.bf16.mxu0 0
          %1240 = vmatpush2.bf16.msra.mxu0 0
          %1241 = vmatprep.subr.bf16.mxu0 0
          %1242 = vmatpush2.bf16.msra.mxu0 0
          %1243 = vmatprep.subr.bf16.mxu0 0
          %1244 = vmatpush2.bf16.msra.mxu0 0
          %1245 = vmatprep.mubr.bf16.mxu0 0
          %1246 = vmatmul.mubr.bf16.gmra.mxu0 %v1211
          %v1247 = vpop.f32.mrf.mxu0
          %v1248 = vadd.f32 0.0, %v1247
          %v1249 = vpop.f32.mrf.mxu0
          %v1250 = vadd.f32 0.0, %v1249
          %v1251 = vpop.f32.mrf.mxu0
          %v1252 = vpop.f32.mrf.mxu0
          %1253 = vdwg.mxu0
          %1254 = vmatprep.subr.bf16.mxu0 0
          %1255 = vmatpush1.bf16.msra.mxu0 0
          %1256 = vmatprep.subr.bf16.mxu0 0
          %1257 = vmatpush1.bf16.msra.mxu0 0
          %1258 = vmatprep.subr.bf16.mxu0 0
          %1259 = vmatpush1.bf16.msra.mxu0 0
          %1260 = vmatprep.subr.bf16.mxu0 0
          %1261 = vmatpush1.bf16.msra.mxu0 0
          %1262 = vmatprep.subr.bf16.mxu0 %v1207
          %1263 = vmatpush1.bf16.msra.mxu0 %v1206
          %1264 = vmatprep.subr.bf16.mxu0 %v1203
          %1265 = vmatpush1.bf16.msra.mxu0 %v1202
          %1266 = vmatprep.subr.bf16.mxu0 %v1199
          %1267 = vmatpush1.bf16.msra.mxu0 %v1198
          %1268 = vmatprep.subr.bf16.mxu0 %v1195
          %1269 = vmatpush1.bf16.msra.mxu0 %v1194
          %1270 = vmatprep.subr.bf16.mxu0 0
          %1271 = vmatpush2.bf16.msra.mxu0 0
          %1272 = vmatprep.subr.bf16.mxu0 0
          %1273 = vmatpush2.bf16.msra.mxu0 0
          %1274 = vmatprep.subr.bf16.mxu0 0
          %1275 = vmatpush2.bf16.msra.mxu0 0
          %1276 = vmatprep.subr.bf16.mxu0 0
          %1277 = vmatpush2.bf16.msra.mxu0 0
          %1278 = vmatprep.subr.bf16.mxu0 0
          %1279 = vmatpush2.bf16.msra.mxu0 0
          %1280 = vmatprep.subr.bf16.mxu0 0
          %1281 = vmatpush2.bf16.msra.mxu0 0
          %1282 = vmatprep.subr.bf16.mxu0 0
          %1283 = vmatpush2.bf16.msra.mxu0 0
          %1284 = vmatprep.subr.bf16.mxu0 0
          %1285 = vmatpush2.bf16.msra.mxu0 0
          %1286 = vmatprep.mubr.bf16.mxu0 0
          %1287 = vmatmul.mubr.bf16.gmra.mxu0 %v1211
          %v1288 = vpop.f32.mrf.mxu0
          %v1289 = vadd.f32 0.0, %v1288
          %v1290 = vpop.f32.mrf.mxu0
          %v1291 = vadd.f32 0.0, %v1290
          %v1292 = vpop.f32.mrf.mxu0
          %v1293 = vpop.f32.mrf.mxu0
          %1294 = vdwg.mxu0
          %v1295 = vld [vmem:[#allocation3] sm:$0xff]
          %v1296 = vld [vmem:[#allocation3 + $0x8] sm:$0xff]
          %v1297 = vld [vmem:[#allocation3 + $0x10] sm:$0xff]
          %v1298 = vld [vmem:[#allocation3 + $0x18] sm:$0xff]
          %v1299 = vld [vmem:[#allocation3 + $0x20] sm:$0xff]
          %v1300 = vld [vmem:[#allocation3 + $0x28] sm:$0xff]
          %v1301 = vld [vmem:[#allocation3 + $0x30] sm:$0xff]
          %v1302 = vld [vmem:[#allocation3 + $0x38] sm:$0xff]
          %v1303 = vld [vmem:[#allocation3 + $0x40] sm:$0xff]
          %v1304 = vld [vmem:[#allocation3 + $0x48] sm:$0xff]
          %v1305 = vld [vmem:[#allocation3 + $0x50] sm:$0xff]
          %v1306 = vld [vmem:[#allocation3 + $0x58] sm:$0xff]
          %v1307 = vld [vmem:[#allocation3 + $0x60] sm:$0xff]
          %v1308 = vld [vmem:[#allocation3 + $0x68] sm:$0xff]
          %v1309 = vld [vmem:[#allocation3 + $0x70] sm:$0xff]
          %v1310 = vld [vmem:[#allocation3 + $0x78] sm:$0xff]
          %v1311 = vld [vmem:[#allocation3 + $0x80] sm:$0xff]
          %v1312 = vld [vmem:[#allocation3 + $0x88] sm:$0xff]
          %v1313 = vld [vmem:[#allocation3 + $0x90] sm:$0xff]
          %v1314 = vld [vmem:[#allocation3 + $0x98] sm:$0xff]
          %v1315 = vld [vmem:[#allocation3 + $0xa0] sm:$0xff]
          %v1316 = vld [vmem:[#allocation3 + $0xa8] sm:$0xff]
          %v1317 = vld [vmem:[#allocation3 + $0xb0] sm:$0xff]
          %v1318 = vld [vmem:[#allocation3 + $0xb8] sm:$0xff]
          %v1319 = vld [vmem:[#allocation3 + $0xc0] sm:$0xff]
          %v1320 = vld [vmem:[#allocation3 + $0xc8] sm:$0xff]
          %v1321 = vld [vmem:[#allocation3 + $0xd0] sm:$0xff]
          %v1322 = vld [vmem:[#allocation3 + $0xd8] sm:$0xff]
          %v1323 = vld [vmem:[#allocation3 + $0xe0] sm:$0xff]
          %v1324 = vld [vmem:[#allocation3 + $0xe8] sm:$0xff]
          %v1325 = vld [vmem:[#allocation3 + $0xf0] sm:$0xff]
          %v1326 = vld [vmem:[#allocation3 + $0xf8] sm:$0xff]
          %v1327 = vld [vmem:[#allocation3 + $0x100] sm:$0xff]
          %v1328 = vld [vmem:[#allocation3 + $0x108] sm:$0xff]
          %v1329 = vld [vmem:[#allocation3 + $0x110] sm:$0xff]
          %v1330 = vld [vmem:[#allocation3 + $0x118] sm:$0xff]
          %v1331 = vld [vmem:[#allocation3 + $0x120] sm:$0xff]
          %v1332 = vld [vmem:[#allocation3 + $0x128] sm:$0xff]
          %v1333 = vld [vmem:[#allocation3 + $0x130] sm:$0xff]
          %v1334 = vld [vmem:[#allocation3 + $0x138] sm:$0xff]
          %v1335 = vld [vmem:[#allocation3 + $0x140] sm:$0xff]
          %v1336 = vld [vmem:[#allocation3 + $0x148] sm:$0xff]
          %v1337 = vld [vmem:[#allocation3 + $0x150] sm:$0xff]
          %v1338 = vld [vmem:[#allocation3 + $0x158] sm:$0xff]
          %v1339 = vld [vmem:[#allocation3 + $0x160] sm:$0xff]
          %v1340 = vld [vmem:[#allocation3 + $0x168] sm:$0xff]
          %v1341 = vld [vmem:[#allocation3 + $0x170] sm:$0xff]
          %v1342 = vld [vmem:[#allocation3 + $0x178] sm:$0xff]
          %v1343 = vld [vmem:[#allocation3 + $0x180] sm:$0xff]
          %v1344 = vld [vmem:[#allocation3 + $0x188] sm:$0xff]
          %v1345 = vld [vmem:[#allocation3 + $0x190] sm:$0xff]
          %v1346 = vld [vmem:[#allocation3 + $0x198] sm:$0xff]
          %v1347 = vld [vmem:[#allocation3 + $0x1a0] sm:$0xff]
          %v1348 = vld [vmem:[#allocation3 + $0x1a8] sm:$0xff]
          %v1349 = vld [vmem:[#allocation3 + $0x1b0] sm:$0xff]
          %v1350 = vld [vmem:[#allocation3 + $0x1b8] sm:$0xff]
          %v1351 = vld [vmem:[#allocation3 + $0x1c0] sm:$0xff]
          %v1352 = vld [vmem:[#allocation3 + $0x1c8] sm:$0xff]
          %v1353 = vld [vmem:[#allocation3 + $0x1d0] sm:$0xff]
          %v1354 = vld [vmem:[#allocation3 + $0x1d8] sm:$0xff]
          %v1355 = vld [vmem:[#allocation3 + $0x1e0] sm:$0xff]
          %v1356 = vld [vmem:[#allocation3 + $0x1e8] sm:$0xff]
          %v1357 = vld [vmem:[#allocation3 + $0x1f0] sm:$0xff]
          %v1358 = vld [vmem:[#allocation3 + $0x1f8] sm:$0xff]
          %v1359 = vld [vmem:[%s4] sm:$0xff]
          %1361 = vset.pattern.permute.xlu0 0
          %1362 = vperm.xlu0 %1361, %v1359
          %v1363 = vpop.permute.xlu0 %1362
          %1365 = vmatprep.subr.mxu0 0.0
          %1366 = vmatpush1.msra.mxu0 %v1310
          %1367 = vmatprep.subr.mxu0 0.0
          %1368 = vmatpush1.msra.mxu0 %v1309
          %1369 = vmatprep.subr.mxu0 0.0
          %1370 = vmatpush1.msra.mxu0 %v1308
          %1371 = vmatprep.subr.mxu0 0.0
          %1372 = vmatpush1.msra.mxu0 %v1307
          %1373 = vmatprep.subr.mxu0 0.0
          %1374 = vmatpush1.msra.mxu0 %v1306
          %1375 = vmatprep.subr.mxu0 0.0
          %1376 = vmatpush1.msra.mxu0 %v1305
          %1377 = vmatprep.subr.mxu0 0.0
          %1378 = vmatpush1.msra.mxu0 %v1304
          %1379 = vmatprep.subr.mxu0 0.0
          %1380 = vmatpush1.msra.mxu0 %v1303
          %1381 = vmatprep.subr.mxu0 0.0
          %1382 = vmatpush1.msra.mxu0 %v1302
          %1383 = vmatprep.subr.mxu0 0.0
          %1384 = vmatpush1.msra.mxu0 %v1301
          %1385 = vmatprep.subr.mxu0 0.0
          %1386 = vmatpush1.msra.mxu0 %v1300
          %1387 = vmatprep.subr.mxu0 0.0
          %1388 = vmatpush1.msra.mxu0 %v1299
          %1389 = vmatprep.subr.mxu0 0.0
          %1390 = vmatpush1.msra.mxu0 %v1298
          %1391 = vmatprep.subr.mxu0 0.0
          %1392 = vmatpush1.msra.mxu0 %v1297
          %1393 = vmatprep.subr.mxu0 0.0
          %1394 = vmatpush1.msra.mxu0 %v1296
          %1395 = vmatprep.subr.mxu0 0.0
          %1396 = vmatpush1.msra.mxu0 %v1295
          %1397 = vmatprep.subr.mxu0 0.0
          %1398 = vmatpush2.msra.mxu0 %v1326
          %1399 = vmatprep.subr.mxu0 0.0
          %1400 = vmatpush2.msra.mxu0 %v1325
          %1401 = vmatprep.subr.mxu0 0.0
          %1402 = vmatpush2.msra.mxu0 %v1324
          %1403 = vmatprep.subr.mxu0 0.0
          %1404 = vmatpush2.msra.mxu0 %v1323
          %1405 = vmatprep.subr.mxu0 0.0
          %1406 = vmatpush2.msra.mxu0 %v1322
          %1407 = vmatprep.subr.mxu0 0.0
          %1408 = vmatpush2.msra.mxu0 %v1321
          %1409 = vmatprep.subr.mxu0 0.0
          %1410 = vmatpush2.msra.mxu0 %v1320
          %1411 = vmatprep.subr.mxu0 0.0
          %1412 = vmatpush2.msra.mxu0 %v1319
          %1413 = vmatprep.subr.mxu0 0.0
          %1414 = vmatpush2.msra.mxu0 %v1318
          %1415 = vmatprep.subr.mxu0 0.0
          %1416 = vmatpush2.msra.mxu0 %v1317
          %1417 = vmatprep.subr.mxu0 0.0
          %1418 = vmatpush2.msra.mxu0 %v1316
          %1419 = vmatprep.subr.mxu0 0.0
          %1420 = vmatpush2.msra.mxu0 %v1315
          %1421 = vmatprep.subr.mxu0 0.0
          %1422 = vmatpush2.msra.mxu0 %v1314
          %1423 = vmatprep.subr.mxu0 0.0
          %1424 = vmatpush2.msra.mxu0 %v1313
          %1425 = vmatprep.subr.mxu0 0.0
          %1426 = vmatpush2.msra.mxu0 %v1312
          %1427 = vmatprep.subr.mxu0 0.0
          %1428 = vmatpush2.msra.mxu0 %v1311
          %1429 = vmatprep.mubr.f32.mxu0 %v1250
          %1430 = vmatmul.mubr.f32.gmra.mxu0 %v1248
          %v1431 = vpop.f32.mrf.mxu0
          %v1432 = vadd.f32 %v1363, %v1431
          %v1433 = vpop.f32.mrf.mxu0
          %1434 = vdwg.mxu0
          %1435 = vmatprep.subr.mxu0 0.0
          %1436 = vmatpush1.msra.mxu0 %v1342
          %1437 = vmatprep.subr.mxu0 0.0
          %1438 = vmatpush1.msra.mxu0 %v1341
          %1439 = vmatprep.subr.mxu0 0.0
          %1440 = vmatpush1.msra.mxu0 %v1340
          %1441 = vmatprep.subr.mxu0 0.0
          %1442 = vmatpush1.msra.mxu0 %v1339
          %1443 = vmatprep.subr.mxu0 0.0
          %1444 = vmatpush1.msra.mxu0 %v1338
          %1445 = vmatprep.subr.mxu0 0.0
          %1446 = vmatpush1.msra.mxu0 %v1337
          %1447 = vmatprep.subr.mxu0 0.0
          %1448 = vmatpush1.msra.mxu0 %v1336
          %1449 = vmatprep.subr.mxu0 0.0
          %1450 = vmatpush1.msra.mxu0 %v1335
          %1451 = vmatprep.subr.mxu0 0.0
          %1452 = vmatpush1.msra.mxu0 %v1334
          %1453 = vmatprep.subr.mxu0 0.0
          %1454 = vmatpush1.msra.mxu0 %v1333
          %1455 = vmatprep.subr.mxu0 0.0
          %1456 = vmatpush1.msra.mxu0 %v1332
          %1457 = vmatprep.subr.mxu0 0.0
          %1458 = vmatpush1.msra.mxu0 %v1331
          %1459 = vmatprep.subr.mxu0 0.0
          %1460 = vmatpush1.msra.mxu0 %v1330
          %1461 = vmatprep.subr.mxu0 0.0
          %1462 = vmatpush1.msra.mxu0 %v1329
          %1463 = vmatprep.subr.mxu0 0.0
          %1464 = vmatpush1.msra.mxu0 %v1328
          %1465 = vmatprep.subr.mxu0 0.0
          %1466 = vmatpush1.msra.mxu0 %v1327
          %1467 = vmatprep.subr.mxu0 0.0
          %1468 = vmatpush2.msra.mxu0 %v1358
          %1469 = vmatprep.subr.mxu0 0.0
          %1470 = vmatpush2.msra.mxu0 %v1357
          %1471 = vmatprep.subr.mxu0 0.0
          %1472 = vmatpush2.msra.mxu0 %v1356
          %1473 = vmatprep.subr.mxu0 0.0
          %1474 = vmatpush2.msra.mxu0 %v1355
          %1475 = vmatprep.subr.mxu0 0.0
          %1476 = vmatpush2.msra.mxu0 %v1354
          %1477 = vmatprep.subr.mxu0 0.0
          %1478 = vmatpush2.msra.mxu0 %v1353
          %1479 = vmatprep.subr.mxu0 0.0
          %1480 = vmatpush2.msra.mxu0 %v1352
          %1481 = vmatprep.subr.mxu0 0.0
          %1482 = vmatpush2.msra.mxu0 %v1351
          %1483 = vmatprep.subr.mxu0 0.0
          %1484 = vmatpush2.msra.mxu0 %v1350
          %1485 = vmatprep.subr.mxu0 0.0
          %1486 = vmatpush2.msra.mxu0 %v1349
          %1487 = vmatprep.subr.mxu0 0.0
          %1488 = vmatpush2.msra.mxu0 %v1348
          %1489 = vmatprep.subr.mxu0 0.0
          %1490 = vmatpush2.msra.mxu0 %v1347
          %1491 = vmatprep.subr.mxu0 0.0
          %1492 = vmatpush2.msra.mxu0 %v1346
          %1493 = vmatprep.subr.mxu0 0.0
          %1494 = vmatpush2.msra.mxu0 %v1345
          %1495 = vmatprep.subr.mxu0 0.0
          %1496 = vmatpush2.msra.mxu0 %v1344
          %1497 = vmatprep.subr.mxu0 0.0
          %1498 = vmatpush2.msra.mxu0 %v1343
          %1499 = vmatprep.mubr.f32.mxu0 %v1291
          %1500 = vmatmul.mubr.f32.gmra.mxu0 %v1289
          %v1501 = vpop.f32.mrf.mxu0
          %v1502 = vadd.f32 %v1432, %v1501
          %v1503 = vpop.f32.mrf.mxu0
          %1504 = vdwg.mxu0
          %vm1505 = vcmask 261120
          %1506 = vst.msk [vmem:[%s337] sm:$0xff] %vm1505, %v1502
        $region60: #{forward.5} parent=47 // pred_fallthru
          _
        %p1507 = scmp.lt.s32.totalorder %s23, 1
        %s1508 = scalar_select %p1507, %s23, 1
        %s1509 = smul.addr %s1508, 8
        %s1510 = scalar_lea.vmem %s7, %s1509
        // Predicated region
        $region61: #{forward.5} parent=47 // pred_check
          %p1511 = pneg %p211
        $region62: #{forward.5} parent=47 // pred_check_branch
          %1513 = sbr.rel (%p1511) target = $region64
        $region63: #{forward.5} parent=47 // pred_region
          _
        $region64: #{forward.5} parent=47 // pred_fallthru
          _
      $region48: #{forward.5} parent=5 // pred_fallthru
        _
      %p1514 = scmp.le.s32.totalorder 2, %s14
      // Predicated region
      $region65: #{forward.5} parent=5 // pred_check
        %p1515 = pneg %p1514
      $region66: #{forward.5} parent=5 // pred_check_branch
        %1517 = sbr.rel (%p1515) target = $region68
      $region67: #{forward.5} parent=5 // pred_region
        %s1518 = ssub.s32 %s14, 2
        // Predicated region
        $region69: #{forward.5} parent=67 // pred_check
          %p1519 = pneg %p217
        $region70: #{forward.5} parent=67 // pred_check_branch
          %1521 = sbr.rel (%p1519) target = $region72
        $region71: #{forward.5} parent=67 // pred_region
          %p1522 = scmp.lt.s32.totalorder %s25, 1
          %s1523 = scalar_select %p1522, %s25, 1
          %s1524 = smul.addr %s1523, 8
          %s1525 = scalar_lea.vmem %s7, %s1524
        $region72: #{forward.5} parent=67 // pred_fallthru
          _
      $region68: #{forward.5} parent=5 // pred_fallthru
        _
    $region6: #{forward.5} parent=1 // loop_footer
      %s18 = sadd.s32 1, %s14
    $region7: #{forward.5} parent=1 // loop_footer_branch
      %13 = sbr.rel target = $region3
    $region8: #{forward.5} parent=1 // loop_exit
      _
    %1526 = vsyncpa [#allocation4], 1
    %s1527 = scalar_lea.sflag [#allocation4], 1
    %1528 = vsyncpa %s1527, 1

// kernel: forward.7
$region0: #{forward.7}
  #allocation0 [shape = 'u32[]', space=smem, size = 0x4, offset = 0x4, fixed_abs, tag = 'smem constant byte address 0x4 - core index']
  #allocation1 [shape = 'u32[144,128]{1,0:T(1,128)}', space=vmem, size = 0x12000, scoped, tag = 'internal scratch']
  #allocation2 [shape = 'f32[4,512]{1,0:T(4,128)}', space=vmem, size = 0x2000, scoped, tag = 'scratch operand']
  #allocation3 [shape = 'f32[1,1]{1,0:T(1,128)S(1)}', space=vmem, size = 0x200, scoped, tag = 'scoped memory for forward.7']
  %s0 = inlined_call_operand.vmem [shape: f32[2,8,32], index: 0, kind: input, shape index: {}]
  %s1 = inlined_call_operand.vmem [shape: f32[2,4,512], index: 1, kind: input, shape index: {}]
  %s2 = inlined_call_operand.vmem [shape: bf16[4,8], index: 2, kind: input, shape index: {}]
  %s3 = inlined_call_operand.vmem [shape: f32[4,1], index: 3, kind: input, shape index: {}]
  %s4 = inlined_call_operand.vmem [shape: f32[32,512], index: 4, kind: input, shape index: {}]
  %s5 = inlined_call_operand.vmem [shape: bf16[2,4,36], index: 5, kind: input, shape index: {}]
  %s6 = inlined_call_operand.vmem [shape: f32[2,4,1], index: 6, kind: input, shape index: {}]
  %s7 = inlined_call_operand.vmem [shape: bf16[4,4], index: 7, kind: input, shape index: {}]
  %s8 = inlined_call_operand.vmem [shape: bf16[4,4], index: 8, kind: input, shape index: {}]
  %s9 = inlined_call_operand.vmem [shape: f32[4,1], index: 9, kind: input, shape index: {}]
  %s10 = inlined_call_operand.vmem [shape: bf16[1,36], index: 10, kind: input, shape index: {}]
  %s11 = inlined_call_operand.<no memory space> [shape: f32[1,1], index: 11, kind: input, shape index: {}]
  %s12 = inlined_call_operand.vmem [shape: f32[9,512], index: 12, kind: input, shape index: {}]
  %s13 = inlined_call_operand.vmem [shape: f32[2,1,512], index: 13, kind: output, shape index: {}]
  %s14 = sld [smem:[#allocation0]]
  $region93: #{forward.7} parent=0
    _
  %s16 = ssub.s32 1, %s14
  %s17 = scalar_select 0, %s16, %s14
  %v18 = vstv %s11
  %19 = vst [vmem:[#allocation3] sm:$0x1] %v18
  loop: start=0, step=1, limit=6
  $region2: #{forward.7} parent=0 // loop_pre_header
    _
  $region3: #{forward.7} parent=0 // loop_header
    %s21 = sphi 0, %s25
    %p22 = scmp.ge.s32.totalorder %s21, 6
    %s28 = sphi 0, %s40
    %s29 = sphi 0, %s36
    %s30 = sphi 0, %s28
    %s31 = sphi 0, %s29
    %s32 = sphi 0, %s30
    %s33 = sphi 0, %s31
    %s43 = sphi 0, %s45
    %s46 = sphi 0, %s43
    %s47 = sphi 0, %s46
    %s63 = sphi 0, %s47
    %s69 = sphi 0, %s71
    %s72 = sphi 0, %s69
    %s73 = sphi 0, %s72
    %s89 = sphi 0, %s73
    %s93 = sphi 0, %s93
    %s95 = sphi 0, %s93
    %s96 = sphi 0, %s95
    %s110 = sphi 0, %s96
    %s114 = sphi 0, %s114
    %s116 = sphi 0, %s114
    %s117 = sphi 0, %s116
    %s131 = sphi 0, %s117
    %s135 = sphi 0, %s135
    %s137 = sphi 0, %s135
    %s138 = sphi 0, %s137
    %s152 = sphi 0, %s138
    %s158 = sphi 0, %s160
    %s161 = sphi 0, %s158
    %s162 = sphi 0, %s161
    %s178 = sphi 0, %s162
    %s184 = sphi 0, %s186
    %s187 = sphi 0, %s184
    %s188 = sphi 0, %s187
    %s204 = sphi 0, %s188
    %s208 = sphi 0, %s208
    %s210 = sphi 0, %s208
    %s211 = sphi 0, %s210
    %s225 = sphi 0, %s211
    %s229 = sphi 0, %s229
    %s231 = sphi 0, %s229
    %s232 = sphi 0, %s231
    %s246 = sphi 0, %s232
    %s250 = sphi 0, %s250
    %s252 = sphi 0, %s250
    %s253 = sphi 0, %s252
    %s267 = sphi 0, %s253
    %s271 = sphi 0, %s271
    %s273 = sphi 0, %s271
    %s274 = sphi 0, %s273
    %s288 = sphi 0, %s274
    %s292 = sphi 0, %s292
    %s294 = sphi 0, %s292
    %s295 = sphi 0, %s294
    %s309 = sphi 0, %s295
    %s313 = sphi 0, %s313
    %s315 = sphi 0, %s313
    %s316 = sphi 0, %s315
    %s330 = sphi 0, %s316
    %s336 = sphi 0, %s338
    %s339 = sphi 0, %s336
    %s340 = sphi 0, %s339
    %s356 = sphi 0, %s340
  $region4: #{forward.7} parent=0 // loop_header_branch
    %24 = sbr.rel (%p22) target = $region8
  $region5: #{forward.7} parent=0 // loop_body
    %s26 = ssub.s32 %s21, 1
    %s27 = ssub.s32 %s21, 2
    %s34 = sadd.s32 1, %s29
    %p35 = scmp.ge.s32.totalorder %s34, 2
    %s36 = scalar_select %p35, 0, %s34
    %s37 = sadd.s32 1, %s28
    %s38 = scalar_select %p35, %s37, %s28
    %p39 = scmp.ge.s32.totalorder %s38, 2
    %s40 = scalar_select %p39, 0, %s38
    %s41 = ssub.s32 %s28, %s40
    %p42 = scmp.eq.s32.totalorder %s41, 0
    %s44 = sadd.s32 %s43, 1
    %s45 = scalar_select %p42, %s43, %s44
    %p48 = pneg %p42
    %p49 = scmp.eq.s32.totalorder %s21, 3
    %p50 = por %p48, %p49
    %p51 = scmp.ne.s32.totalorder %s43, %s46
    %p52 = scmp.eq.s32.totalorder %s21, 0
    %p53 = por %p51, %p52
    %p54 = scmp.ne.s32.totalorder %s43, %s46
    %p55 = scmp.eq.s32.totalorder %s26, 3
    %p56 = por %p54, %p55
    %p57 = scmp.ne.s32.totalorder %s46, %s47
    %p58 = scmp.eq.s32.totalorder %s26, 0
    %p59 = por %p57, %p58
    %p60 = scmp.ne.s32.totalorder %s46, %s47
    %p61 = scmp.eq.s32.totalorder %s27, 3
    %p62 = por %p60, %p61
    %p64 = scmp.ne.s32.totalorder %s47, %s63
    %p65 = scmp.eq.s32.totalorder %s27, 0
    %p66 = por %p64, %p65
    %s67 = ssub.s32 %s28, %s40
    %p68 = scmp.eq.s32.totalorder %s67, 0
    %s70 = sadd.s32 %s69, 1
    %s71 = scalar_select %p68, %s69, %s70
    %p74 = pneg %p68
    %p75 = scmp.eq.s32.totalorder %s21, 3
    %p76 = por %p74, %p75
    %p77 = scmp.ne.s32.totalorder %s69, %s72
    %p78 = scmp.eq.s32.totalorder %s21, 0
    %p79 = por %p77, %p78
    %p80 = scmp.ne.s32.totalorder %s69, %s72
    %p81 = scmp.eq.s32.totalorder %s26, 3
    %p82 = por %p80, %p81
    %p83 = scmp.ne.s32.totalorder %s72, %s73
    %p84 = scmp.eq.s32.totalorder %s26, 0
    %p85 = por %p83, %p84
    %p86 = scmp.ne.s32.totalorder %s72, %s73
    %p87 = scmp.eq.s32.totalorder %s27, 3
    %p88 = por %p86, %p87
    %p90 = scmp.ne.s32.totalorder %s73, %s89
    %p91 = scmp.eq.s32.totalorder %s27, 0
    %p92 = por %p90, %p91
    %s94 = sadd.s32 %s93, 1
    %p97 = scmp.eq.s32.totalorder %s21, 3
    %p98 = scmp.ne.s32.totalorder %s93, %s95
    %p99 = scmp.eq.s32.totalorder %s21, 0
    %p100 = por %p98, %p99
    %p101 = scmp.ne.s32.totalorder %s93, %s95
    %p102 = scmp.eq.s32.totalorder %s26, 3
    %p103 = por %p101, %p102
    %p104 = scmp.ne.s32.totalorder %s95, %s96
    %p105 = scmp.eq.s32.totalorder %s26, 0
    %p106 = por %p104, %p105
    %p107 = scmp.ne.s32.totalorder %s95, %s96
    %p108 = scmp.eq.s32.totalorder %s27, 3
    %p109 = por %p107, %p108
    %p111 = scmp.ne.s32.totalorder %s96, %s110
    %p112 = scmp.eq.s32.totalorder %s27, 0
    %p113 = por %p111, %p112
    %s115 = sadd.s32 %s114, 1
    %p118 = scmp.eq.s32.totalorder %s21, 3
    %p119 = scmp.ne.s32.totalorder %s114, %s116
    %p120 = scmp.eq.s32.totalorder %s21, 0
    %p121 = por %p119, %p120
    %p122 = scmp.ne.s32.totalorder %s114, %s116
    %p123 = scmp.eq.s32.totalorder %s26, 3
    %p124 = por %p122, %p123
    %p125 = scmp.ne.s32.totalorder %s116, %s117
    %p126 = scmp.eq.s32.totalorder %s26, 0
    %p127 = por %p125, %p126
    %p128 = scmp.ne.s32.totalorder %s116, %s117
    %p129 = scmp.eq.s32.totalorder %s27, 3
    %p130 = por %p128, %p129
    %p132 = scmp.ne.s32.totalorder %s117, %s131
    %p133 = scmp.eq.s32.totalorder %s27, 0
    %p134 = por %p132, %p133
    %s136 = sadd.s32 %s135, 1
    %p139 = scmp.eq.s32.totalorder %s21, 3
    %p140 = scmp.ne.s32.totalorder %s135, %s137
    %p141 = scmp.eq.s32.totalorder %s21, 0
    %p142 = por %p140, %p141
    %p143 = scmp.ne.s32.totalorder %s135, %s137
    %p144 = scmp.eq.s32.totalorder %s26, 3
    %p145 = por %p143, %p144
    %p146 = scmp.ne.s32.totalorder %s137, %s138
    %p147 = scmp.eq.s32.totalorder %s26, 0
    %p148 = por %p146, %p147
    %p149 = scmp.ne.s32.totalorder %s137, %s138
    %p150 = scmp.eq.s32.totalorder %s27, 3
    %p151 = por %p149, %p150
    %p153 = scmp.ne.s32.totalorder %s138, %s152
    %p154 = scmp.eq.s32.totalorder %s27, 0
    %p155 = por %p153, %p154
    %s156 = ssub.s32 %s29, %s36
    %p157 = scmp.eq.s32.totalorder %s156, 0
    %s159 = sadd.s32 %s158, 1
    %s160 = scalar_select %p157, %s158, %s159
    %p163 = pneg %p157
    %p164 = scmp.eq.s32.totalorder %s21, 3
    %p165 = por %p163, %p164
    %p166 = scmp.ne.s32.totalorder %s158, %s161
    %p167 = scmp.eq.s32.totalorder %s21, 0
    %p168 = por %p166, %p167
    %p169 = scmp.ne.s32.totalorder %s158, %s161
    %p170 = scmp.eq.s32.totalorder %s26, 3
    %p171 = por %p169, %p170
    %p172 = scmp.ne.s32.totalorder %s161, %s162
    %p173 = scmp.eq.s32.totalorder %s26, 0
    %p174 = por %p172, %p173
    %p175 = scmp.ne.s32.totalorder %s161, %s162
    %p176 = scmp.eq.s32.totalorder %s27, 3
    %p177 = por %p175, %p176
    %p179 = scmp.ne.s32.totalorder %s162, %s178
    %p180 = scmp.eq.s32.totalorder %s27, 0
    %p181 = por %p179, %p180
    %s182 = ssub.s32 %s29, %s36
    %p183 = scmp.eq.s32.totalorder %s182, 0
    %s185 = sadd.s32 %s184, 1
    %s186 = scalar_select %p183, %s184, %s185
    %p189 = pneg %p183
    %p190 = scmp.eq.s32.totalorder %s21, 3
    %p191 = por %p189, %p190
    %p192 = scmp.ne.s32.totalorder %s184, %s187
    %p193 = scmp.eq.s32.totalorder %s21, 0
    %p194 = por %p192, %p193
    %p195 = scmp.ne.s32.totalorder %s184, %s187
    %p196 = scmp.eq.s32.totalorder %s26, 3
    %p197 = por %p195, %p196
    %p198 = scmp.ne.s32.totalorder %s187, %s188
    %p199 = scmp.eq.s32.totalorder %s26, 0
    %p200 = por %p198, %p199
    %p201 = scmp.ne.s32.totalorder %s187, %s188
    %p202 = scmp.eq.s32.totalorder %s27, 3
    %p203 = por %p201, %p202
    %p205 = scmp.ne.s32.totalorder %s188, %s204
    %p206 = scmp.eq.s32.totalorder %s27, 0
    %p207 = por %p205, %p206
    %s209 = sadd.s32 %s208, 1
    %p212 = scmp.eq.s32.totalorder %s21, 3
    %p213 = scmp.ne.s32.totalorder %s208, %s210
    %p214 = scmp.eq.s32.totalorder %s21, 0
    %p215 = por %p213, %p214
    %p216 = scmp.ne.s32.totalorder %s208, %s210
    %p217 = scmp.eq.s32.totalorder %s26, 3
    %p218 = por %p216, %p217
    %p219 = scmp.ne.s32.totalorder %s210, %s211
    %p220 = scmp.eq.s32.totalorder %s26, 0
    %p221 = por %p219, %p220
    %p222 = scmp.ne.s32.totalorder %s210, %s211
    %p223 = scmp.eq.s32.totalorder %s27, 3
    %p224 = por %p222, %p223
    %p226 = scmp.ne.s32.totalorder %s211, %s225
    %p227 = scmp.eq.s32.totalorder %s27, 0
    %p228 = por %p226, %p227
    %s230 = sadd.s32 %s229, 1
    %p233 = scmp.eq.s32.totalorder %s21, 3
    %p234 = scmp.ne.s32.totalorder %s229, %s231
    %p235 = scmp.eq.s32.totalorder %s21, 0
    %p236 = por %p234, %p235
    %p237 = scmp.ne.s32.totalorder %s229, %s231
    %p238 = scmp.eq.s32.totalorder %s26, 3
    %p239 = por %p237, %p238
    %p240 = scmp.ne.s32.totalorder %s231, %s232
    %p241 = scmp.eq.s32.totalorder %s26, 0
    %p242 = por %p240, %p241
    %p243 = scmp.ne.s32.totalorder %s231, %s232
    %p244 = scmp.eq.s32.totalorder %s27, 3
    %p245 = por %p243, %p244
    %p247 = scmp.ne.s32.totalorder %s232, %s246
    %p248 = scmp.eq.s32.totalorder %s27, 0
    %p249 = por %p247, %p248
    %s251 = sadd.s32 %s250, 1
    %p254 = scmp.eq.s32.totalorder %s21, 3
    %p255 = scmp.ne.s32.totalorder %s250, %s252
    %p256 = scmp.eq.s32.totalorder %s21, 0
    %p257 = por %p255, %p256
    %p258 = scmp.ne.s32.totalorder %s250, %s252
    %p259 = scmp.eq.s32.totalorder %s26, 3
    %p260 = por %p258, %p259
    %p261 = scmp.ne.s32.totalorder %s252, %s253
    %p262 = scmp.eq.s32.totalorder %s26, 0
    %p263 = por %p261, %p262
    %p264 = scmp.ne.s32.totalorder %s252, %s253
    %p265 = scmp.eq.s32.totalorder %s27, 3
    %p266 = por %p264, %p265
    %p268 = scmp.ne.s32.totalorder %s253, %s267
    %p269 = scmp.eq.s32.totalorder %s27, 0
    %p270 = por %p268, %p269
    %s272 = sadd.s32 %s271, 1
    %p275 = scmp.eq.s32.totalorder %s21, 3
    %p276 = scmp.ne.s32.totalorder %s271, %s273
    %p277 = scmp.eq.s32.totalorder %s21, 0
    %p278 = por %p276, %p277
    %p279 = scmp.ne.s32.totalorder %s271, %s273
    %p280 = scmp.eq.s32.totalorder %s26, 3
    %p281 = por %p279, %p280
    %p282 = scmp.ne.s32.totalorder %s273, %s274
    %p283 = scmp.eq.s32.totalorder %s26, 0
    %p284 = por %p282, %p283
    %p285 = scmp.ne.s32.totalorder %s273, %s274
    %p286 = scmp.eq.s32.totalorder %s27, 3
    %p287 = por %p285, %p286
    %p289 = scmp.ne.s32.totalorder %s274, %s288
    %p290 = scmp.eq.s32.totalorder %s27, 0
    %p291 = por %p289, %p290
    %s293 = sadd.s32 %s292, 1
    %p296 = scmp.eq.s32.totalorder %s21, 3
    %p297 = scmp.ne.s32.totalorder %s292, %s294
    %p298 = scmp.eq.s32.totalorder %s21, 0
    %p299 = por %p297, %p298
    %p300 = scmp.ne.s32.totalorder %s292, %s294
    %p301 = scmp.eq.s32.totalorder %s26, 3
    %p302 = por %p300, %p301
    %p303 = scmp.ne.s32.totalorder %s294, %s295
    %p304 = scmp.eq.s32.totalorder %s26, 0
    %p305 = por %p303, %p304
    %p306 = scmp.ne.s32.totalorder %s294, %s295
    %p307 = scmp.eq.s32.totalorder %s27, 3
    %p308 = por %p306, %p307
    %p310 = scmp.ne.s32.totalorder %s295, %s309
    %p311 = scmp.eq.s32.totalorder %s27, 0
    %p312 = por %p310, %p311
    %s314 = sadd.s32 %s313, 1
    %p317 = scmp.eq.s32.totalorder %s21, 3
    %p318 = scmp.ne.s32.totalorder %s313, %s315
    %p319 = scmp.eq.s32.totalorder %s21, 0
    %p320 = por %p318, %p319
    %p321 = scmp.ne.s32.totalorder %s313, %s315
    %p322 = scmp.eq.s32.totalorder %s26, 3
    %p323 = por %p321, %p322
    %p324 = scmp.ne.s32.totalorder %s315, %s316
    %p325 = scmp.eq.s32.totalorder %s26, 0
    %p326 = por %p324, %p325
    %p327 = scmp.ne.s32.totalorder %s315, %s316
    %p328 = scmp.eq.s32.totalorder %s27, 3
    %p329 = por %p327, %p328
    %p331 = scmp.ne.s32.totalorder %s316, %s330
    %p332 = scmp.eq.s32.totalorder %s27, 0
    %p333 = por %p331, %p332
    %s334 = ssub.s32 %s28, %s40
    %p335 = scmp.eq.s32.totalorder %s334, 0
    %s337 = sadd.s32 %s336, 1
    %s338 = scalar_select %p335, %s336, %s337
    %p341 = pneg %p335
    %p342 = scmp.eq.s32.totalorder %s21, 3
    %p343 = por %p341, %p342
    %p344 = scmp.ne.s32.totalorder %s336, %s339
    %p345 = scmp.eq.s32.totalorder %s21, 0
    %p346 = por %p344, %p345
    %p347 = scmp.ne.s32.totalorder %s336, %s339
    %p348 = scmp.eq.s32.totalorder %s26, 3
    %p349 = por %p347, %p348
    %p350 = scmp.ne.s32.totalorder %s339, %s340
    %p351 = scmp.eq.s32.totalorder %s26, 0
    %p352 = por %p350, %p351
    %p353 = scmp.ne.s32.totalorder %s339, %s340
    %p354 = scmp.eq.s32.totalorder %s27, 3
    %p355 = por %p353, %p354
    %p357 = scmp.ne.s32.totalorder %s340, %s356
    %p358 = scmp.eq.s32.totalorder %s27, 0
    %p359 = por %p357, %p358
    %p360 = scmp.le.s32.totalorder 1, %s21
    %p361 = scmp.lt.s32.totalorder %s21, 5
    %p362 = pnand %p360, %p361
    %p363 = pneg %p362
    // Predicated region
    $region9: #{forward.7} parent=5 // pred_check
      _
    $region10: #{forward.7} parent=5 // pred_check_branch
      %365 = sbr.rel (%p362) target = $region12
    $region11: #{forward.7} parent=5 // pred_region
      %s366 = ssub.s32 %s21, 1
      // Predicated region
      $region13: #{forward.7} parent=11 // pred_check
        %p367 = pneg %p106
      $region14: #{forward.7} parent=11 // pred_check_branch
        %369 = sbr.rel (%p367) target = $region16
      $region15: #{forward.7} parent=11 // pred_region
        _
      $region16: #{forward.7} parent=11 // pred_fallthru
        _
      // Predicated region
      $region17: #{forward.7} parent=11 // pred_check
        %p370 = pneg %p127
      $region18: #{forward.7} parent=11 // pred_check_branch
        %372 = sbr.rel (%p370) target = $region20
      $region19: #{forward.7} parent=11 // pred_region
        _
      $region20: #{forward.7} parent=11 // pred_fallthru
        _
      // Predicated region
      $region21: #{forward.7} parent=11 // pred_check
        %p373 = pneg %p148
      $region22: #{forward.7} parent=11 // pred_check_branch
        %375 = sbr.rel (%p373) target = $region24
      $region23: #{forward.7} parent=11 // pred_region
        _
      $region24: #{forward.7} parent=11 // pred_fallthru
        _
      // Predicated region
      $region25: #{forward.7} parent=11 // pred_check
        %p376 = pneg %p221
      $region26: #{forward.7} parent=11 // pred_check_branch
        %378 = sbr.rel (%p376) target = $region28
      $region27: #{forward.7} parent=11 // pred_region
        _
      $region28: #{forward.7} parent=11 // pred_fallthru
        _
      // Predicated region
      $region29: #{forward.7} parent=11 // pred_check
        %p379 = pneg %p242
      $region30: #{forward.7} parent=11 // pred_check_branch
        %381 = sbr.rel (%p379) target = $region32
      $region31: #{forward.7} parent=11 // pred_region
        _
      $region32: #{forward.7} parent=11 // pred_fallthru
        _
      // Predicated region
      $region33: #{forward.7} parent=11 // pred_check
        %p382 = pneg %p263
      $region34: #{forward.7} parent=11 // pred_check_branch
        %384 = sbr.rel (%p382) target = $region36
      $region35: #{forward.7} parent=11 // pred_region
        _
      $region36: #{forward.7} parent=11 // pred_fallthru
        _
      // Predicated region
      $region37: #{forward.7} parent=11 // pred_check
        %p385 = pneg %p284
      $region38: #{forward.7} parent=11 // pred_check_branch
        %387 = sbr.rel (%p385) target = $region40
      $region39: #{forward.7} parent=11 // pred_region
        _
      $region40: #{forward.7} parent=11 // pred_fallthru
        _
      // Predicated region
      $region41: #{forward.7} parent=11 // pred_check
        %p388 = pneg %p305
      $region42: #{forward.7} parent=11 // pred_check_branch
        %390 = sbr.rel (%p388) target = $region44
      $region43: #{forward.7} parent=11 // pred_region
        _
      $region44: #{forward.7} parent=11 // pred_fallthru
        _
      // Predicated region
      $region45: #{forward.7} parent=11 // pred_check
        %p391 = pneg %p326
      $region46: #{forward.7} parent=11 // pred_check_branch
        %393 = sbr.rel (%p391) target = $region48
      $region47: #{forward.7} parent=11 // pred_region
        _
      $region48: #{forward.7} parent=11 // pred_fallthru
        _
    $region12: #{forward.7} parent=5 // pred_fallthru
      _
    %p394 = scmp.lt.s32.totalorder %s21, 4
    // Predicated region
    $region49: #{forward.7} parent=5 // pred_check
      %p395 = pneg %p394
    $region50: #{forward.7} parent=5 // pred_check_branch
      %397 = sbr.rel (%p395) target = $region52
    $region51: #{forward.7} parent=5 // pred_region
      // Predicated region
      $region53: #{forward.7} parent=51 // pred_check
        %p398 = pneg %p53
      $region54: #{forward.7} parent=51 // pred_check_branch
        %400 = sbr.rel (%p398) target = $region56
      $region55: #{forward.7} parent=51 // pred_region
        %p401 = scmp.lt.s32.totalorder %s28, 1
        %s402 = scalar_select %p401, %s28, 1
        %s403 = smul.addr %s402, 8
        %s404 = scalar_lea.vmem %s0, %s403
      $region56: #{forward.7} parent=51 // pred_fallthru
        _
      // Predicated region
      $region57: #{forward.7} parent=51 // pred_check
        %p405 = pneg %p79
      $region58: #{forward.7} parent=51 // pred_check_branch
        %407 = sbr.rel (%p405) target = $region60
      $region59: #{forward.7} parent=51 // pred_region
        %p408 = scmp.lt.s32.totalorder %s28, 1
        %s409 = scalar_select %p408, %s28, 1
        %s410 = smul.addr %s409, 4
        %s411 = smul.addr %s410, 4
        %s412 = scalar_lea.vmem %s1, %s411
      $region60: #{forward.7} parent=51 // pred_fallthru
        _
      // Predicated region
      $region61: #{forward.7} parent=51 // pred_check
        %p413 = pneg %p168
      $region62: #{forward.7} parent=51 // pred_check_branch
        %415 = sbr.rel (%p413) target = $region64
      $region63: #{forward.7} parent=51 // pred_region
        %p416 = scmp.lt.s32.totalorder %s29, 1
        %s417 = scalar_select %p416, %s29, 1
        %s418 = smul.addr %s417, 2
        %s419 = scalar_lea.vmem %s5, %s418
      $region64: #{forward.7} parent=51 // pred_fallthru
        _
      // Predicated region
      $region65: #{forward.7} parent=51 // pred_check
        %p420 = pneg %p194
      $region66: #{forward.7} parent=51 // pred_check_branch
        %422 = sbr.rel (%p420) target = $region68
      $region67: #{forward.7} parent=51 // pred_region
        %p423 = scmp.lt.s32.totalorder %s29, 1
        %s424 = scalar_select %p423, %s29, 1
        %s425 = smul.addr %s424, 4
        %s426 = scalar_lea.vmem %s6, %s425
      $region68: #{forward.7} parent=51 // pred_fallthru
        _
    $region52: #{forward.7} parent=5 // pred_fallthru
      _
    %p427 = scmp.le.s32.totalorder 1, %s21
    %p428 = scmp.lt.s32.totalorder %s21, 5
    %p429 = pnand %p427, %p428
    %p430 = pneg %p429
    // Predicated region
    $region69: #{forward.7} parent=5 // pred_check
      _
    $region70: #{forward.7} parent=5 // pred_check_branch
      %432 = sbr.rel (%p429) target = $region72
    $region71: #{forward.7} parent=5 // pred_region
      %s433 = ssub.s32 %s21, 1
      %p434 = scmp.lt.s32.totalorder %s30, 1
      %s435 = scalar_select %p434, %s30, 1
      %s436 = smul.addr %s435, 8
      %s437 = scalar_lea.vmem %s0, %s436
      %p438 = pneg %p59
      %p439 = pneg %p56
      %p440 = scmp.lt.s32.totalorder %s30, 1
      %s441 = scalar_select %p440, %s30, 1
      %s442 = smul.addr %s441, 4
      %s443 = smul.addr %s442, 4
      %s444 = scalar_lea.vmem %s1, %s443
      %p445 = pneg %p85
      %p446 = pneg %p82
      %p447 = pneg %p106
      %p448 = pneg %p103
      %p449 = pneg %p127
      %p450 = pneg %p124
      %p451 = pneg %p148
      %p452 = pneg %p145
      %p453 = scmp.lt.s32.totalorder %s31, 1
      %s454 = scalar_select %p453, %s31, 1
      %s455 = smul.addr %s454, 2
      %s456 = scalar_lea.vmem %s5, %s455
      %p457 = pneg %p174
      %p458 = pneg %p171
      %p459 = scmp.lt.s32.totalorder %s31, 1
      %s460 = scalar_select %p459, %s31, 1
      %s461 = smul.addr %s460, 4
      %s462 = scalar_lea.vmem %s6, %s461
      %p463 = pneg %p200
      %p464 = pneg %p197
      %p465 = pneg %p221
      %p466 = pneg %p218
      %p467 = pneg %p242
      %p468 = pneg %p239
      %p469 = pneg %p263
      %p470 = pneg %p260
      %p471 = pneg %p284
      %p472 = pneg %p281
      %p473 = pneg %p305
      %p474 = pneg %p302
      %p475 = pneg %p326
      %p476 = pneg %p323
      %p477 = pneg %p352
      %p478 = pneg %p349
      %p479 = scmp.lt.s32.totalorder %s30, 1
      %s480 = scalar_select %p479, %s30, 1
      %s481 = smul.addr %s480, 4
      %s482 = scalar_lea.vmem %s13, %s481
      %p483 = scmp.lt.s32.totalorder %s30, 1
      %s484 = scalar_select %p483, %s30, 1
      %s485 = smul.addr %s484, 8
      %s486 = scalar_lea.vmem %s0, %s485
      %p487 = scmp.lt.s32.totalorder %s30, 1
      %s488 = scalar_select %p487, %s30, 1
      %s489 = smul.addr %s488, 4
      %s490 = smul.addr %s489, 4
      %s491 = scalar_lea.vmem %s1, %s490
      %p492 = scmp.lt.s32.totalorder %s31, 1
      %s493 = scalar_select %p492, %s31, 1
      %s494 = smul.addr %s493, 2
      %s495 = scalar_lea.vmem %s5, %s494
      %p496 = scmp.lt.s32.totalorder %s31, 1
      %s497 = scalar_select %p496, %s31, 1
      %s498 = smul.addr %s497, 4
      %s499 = scalar_lea.vmem %s6, %s498
      %p500 = scmp.lt.s32.totalorder %s30, 1
      %s501 = scalar_select %p500, %s30, 1
      %s502 = smul.addr %s501, 4
      %s503 = scalar_lea.vmem %s13, %s502
      %p505 = scmp.eq.s32.totalorder %s31, 0
      // Predicated region
      $region73: #{forward.7} parent=71 // pred_check
        %p506 = pneg %p505
      $region74: #{forward.7} parent=71 // pred_check_branch
        %508 = sbr.rel (%p506) target = $region76
      $region75: #{forward.7} parent=71 // pred_region
        %v509 = vld [vmem:[%s2] sm:$0x3]
        %v510 = vld [vmem:[%s486] sm:$0xff]
        %v511 = vpack.c.bf16 %v510, %v510
        %v512 = vld [vmem:[%s3] sm:$0xf]
        %514 = vset.pattern.permute.xlu0 0
        %515 = vperm.xlu0 %514, %v512
        %v516 = vpop.permute.xlu0 %515
        %vm518 = vcmask 64512
        %v520 = vsel %vm518, %v509, 0
        %vm522 = vcmask 1043456
        %v524 = vsel %vm522, %v511, 0
        %526 = vmatprep.subr.bf16.mxu0 0
        %527 = vmatpush1.bf16.msra.mxu0 0
        %528 = vmatprep.subr.bf16.mxu0 0
        %529 = vmatpush1.bf16.msra.mxu0 0
        %530 = vmatprep.subr.bf16.mxu0 0
        %531 = vmatpush1.bf16.msra.mxu0 0
        %532 = vmatprep.subr.bf16.mxu0 0
        %533 = vmatpush1.bf16.msra.mxu0 0
        %534 = vmatprep.subr.bf16.mxu0 0
        %535 = vmatpush1.bf16.msra.mxu0 0
        %536 = vmatprep.subr.bf16.mxu0 0
        %537 = vmatpush1.bf16.msra.mxu0 0
        %538 = vmatprep.subr.bf16.mxu0 0
        %539 = vmatpush1.bf16.msra.mxu0 0
        %540 = vmatprep.subr.bf16.mxu0 0
        %541 = vmatpush1.bf16.msra.mxu0 %v524
        %542 = vmatprep.subr.bf16.mxu0 0
        %543 = vmatpush2.bf16.msra.mxu0 0
        %544 = vmatprep.subr.bf16.mxu0 0
        %545 = vmatpush2.bf16.msra.mxu0 0
        %546 = vmatprep.subr.bf16.mxu0 0
        %547 = vmatpush2.bf16.msra.mxu0 0
        %548 = vmatprep.subr.bf16.mxu0 0
        %549 = vmatpush2.bf16.msra.mxu0 0
        %550 = vmatprep.subr.bf16.mxu0 0
        %551 = vmatpush2.bf16.msra.mxu0 0
        %552 = vmatprep.subr.bf16.mxu0 0
        %553 = vmatpush2.bf16.msra.mxu0 0
        %554 = vmatprep.subr.bf16.mxu0 0
        %555 = vmatpush2.bf16.msra.mxu0 0
        %556 = vmatprep.subr.bf16.mxu0 0
        %557 = vmatpush2.bf16.msra.mxu0 0
        %558 = vmatprep.mubr.bf16.mxu0 0
        %559 = vmatmul.mubr.bf16.gmra.mxu0 %v520
        %v560 = vpop.f32.mrf.mxu0
        %v561 = vadd.f32 %v516, %v560
        %v562 = vpop.f32.mrf.mxu0
        %v563 = vpop.f32.mrf.mxu0
        %v564 = vpop.f32.mrf.mxu0
        %565 = vdwg.mxu0
        %v566 = vld [vmem:[%s4] sm:$0xff]
        %v567 = vld [vmem:[%s4 + $0x8] sm:$0xff]
        %v568 = vld [vmem:[%s4 + $0x10] sm:$0xff]
        %v569 = vld [vmem:[%s4 + $0x18] sm:$0xff]
        %v570 = vld [vmem:[%s4 + $0x20] sm:$0xff]
        %v571 = vld [vmem:[%s4 + $0x28] sm:$0xff]
        %v572 = vld [vmem:[%s4 + $0x30] sm:$0xff]
        %v573 = vld [vmem:[%s4 + $0x38] sm:$0xff]
        %v574 = vld [vmem:[%s4 + $0x40] sm:$0xff]
        %v575 = vld [vmem:[%s4 + $0x48] sm:$0xff]
        %v576 = vld [vmem:[%s4 + $0x50] sm:$0xff]
        %v577 = vld [vmem:[%s4 + $0x58] sm:$0xff]
        %v578 = vld [vmem:[%s4 + $0x60] sm:$0xff]
        %v579 = vld [vmem:[%s4 + $0x68] sm:$0xff]
        %v580 = vld [vmem:[%s4 + $0x70] sm:$0xff]
        %v581 = vld [vmem:[%s4 + $0x78] sm:$0xff]
        %vm582 = vcmask 261120
        %v584 = vsel %vm582, %v561, 0
        %586 = vmatprep.subr.mxu0 0.0
        %587 = vmatpush1.msra.mxu0 0.0
        %588 = vmatprep.subr.mxu0 0.0
        %589 = vmatpush1.msra.mxu0 0.0
        %590 = vmatprep.subr.mxu0 0.0
        %591 = vmatpush1.msra.mxu0 0.0
        %592 = vmatprep.subr.mxu0 0.0
        %593 = vmatpush1.msra.mxu0 0.0
        %594 = vmatprep.subr.mxu0 0.0
        %595 = vmatpush1.msra.mxu0 0.0
        %596 = vmatprep.subr.mxu0 0.0
        %597 = vmatpush1.msra.mxu0 0.0
        %598 = vmatprep.subr.mxu0 0.0
        %599 = vmatpush1.msra.mxu0 0.0
        %600 = vmatprep.subr.mxu0 0.0
        %601 = vmatpush1.msra.mxu0 0.0
        %602 = vmatprep.subr.mxu0 0.0
        %603 = vmatpush1.msra.mxu0 0.0
        %604 = vmatprep.subr.mxu0 0.0
        %605 = vmatpush1.msra.mxu0 0.0
        %606 = vmatprep.subr.mxu0 0.0
        %607 = vmatpush1.msra.mxu0 0.0
        %608 = vmatprep.subr.mxu0 0.0
        %609 = vmatpush1.msra.mxu0 0.0
        %610 = vmatprep.subr.mxu0 %v579
        %611 = vmatpush1.msra.mxu0 %v578
        %612 = vmatprep.subr.mxu0 %v575
        %613 = vmatpush1.msra.mxu0 %v574
        %614 = vmatprep.subr.mxu0 %v571
        %615 = vmatpush1.msra.mxu0 %v570
        %616 = vmatprep.subr.mxu0 %v567
        %617 = vmatpush1.msra.mxu0 %v566
        %618 = vmatprep.subr.mxu0 0.0
        %619 = vmatpush2.msra.mxu0 0.0
        %620 = vmatprep.subr.mxu0 0.0
        %621 = vmatpush2.msra.mxu0 0.0
        %622 = vmatprep.subr.mxu0 0.0
        %623 = vmatpush2.msra.mxu0 0.0
        %624 = vmatprep.subr.mxu0 0.0
        %625 = vmatpush2.msra.mxu0 0.0
        %626 = vmatprep.subr.mxu0 0.0
        %627 = vmatpush2.msra.mxu0 0.0
        %628 = vmatprep.subr.mxu0 0.0
        %629 = vmatpush2.msra.mxu0 0.0
        %630 = vmatprep.subr.mxu0 0.0
        %631 = vmatpush2.msra.mxu0 0.0
        %632 = vmatprep.subr.mxu0 0.0
        %633 = vmatpush2.msra.mxu0 0.0
        %634 = vmatprep.subr.mxu0 0.0
        %635 = vmatpush2.msra.mxu0 0.0
        %636 = vmatprep.subr.mxu0 0.0
        %637 = vmatpush2.msra.mxu0 0.0
        %638 = vmatprep.subr.mxu0 0.0
        %639 = vmatpush2.msra.mxu0 0.0
        %640 = vmatprep.subr.mxu0 0.0
        %641 = vmatpush2.msra.mxu0 0.0
        %642 = vmatprep.subr.mxu0 0.0
        %643 = vmatpush2.msra.mxu0 0.0
        %644 = vmatprep.subr.mxu0 0.0
        %645 = vmatpush2.msra.mxu0 0.0
        %646 = vmatprep.subr.mxu0 0.0
        %647 = vmatpush2.msra.mxu0 0.0
        %648 = vmatprep.subr.mxu0 0.0
        %649 = vmatpush2.msra.mxu0 0.0
        %650 = vmatprep.mubr.f32.mxu0 0.0
        %651 = vmatmul.mubr.f32.gmra.mxu0 %v584
        %v652 = vpop.f32.mrf.mxu0
        %v653 = vadd.f32 0.0, %v652
        %v654 = vpop.f32.mrf.mxu0
        %v655 = vadd.f32 0.0, %v654
        %656 = vdwg.mxu0
        %657 = vmatprep.subr.mxu0 0.0
        %658 = vmatpush1.msra.mxu0 0.0
        %659 = vmatprep.subr.mxu0 0.0
        %660 = vmatpush1.msra.mxu0 0.0
        %661 = vmatprep.subr.mxu0 0.0
        %662 = vmatpush1.msra.mxu0 0.0
        %663 = vmatprep.subr.mxu0 0.0
        %664 = vmatpush1.msra.mxu0 0.0
        %665 = vmatprep.subr.mxu0 0.0
        %666 = vmatpush1.msra.mxu0 0.0
        %667 = vmatprep.subr.mxu0 0.0
        %668 = vmatpush1.msra.mxu0 0.0
        %669 = vmatprep.subr.mxu0 0.0
        %670 = vmatpush1.msra.mxu0 0.0
        %671 = vmatprep.subr.mxu0 0.0
        %672 = vmatpush1.msra.mxu0 0.0
        %673 = vmatprep.subr.mxu0 0.0
        %674 = vmatpush1.msra.mxu0 0.0
        %675 = vmatprep.subr.mxu0 0.0
        %676 = vmatpush1.msra.mxu0 0.0
        %677 = vmatprep.subr.mxu0 0.0
        %678 = vmatpush1.msra.mxu0 0.0
        %679 = vmatprep.subr.mxu0 0.0
        %680 = vmatpush1.msra.mxu0 0.0
        %681 = vmatprep.subr.mxu0 %v581
        %682 = vmatpush1.msra.mxu0 %v580
        %683 = vmatprep.subr.mxu0 %v577
        %684 = vmatpush1.msra.mxu0 %v576
        %685 = vmatprep.subr.mxu0 %v573
        %686 = vmatpush1.msra.mxu0 %v572
        %687 = vmatprep.subr.mxu0 %v569
        %688 = vmatpush1.msra.mxu0 %v568
        %689 = vmatprep.subr.mxu0 0.0
        %690 = vmatpush2.msra.mxu0 0.0
        %691 = vmatprep.subr.mxu0 0.0
        %692 = vmatpush2.msra.mxu0 0.0
        %693 = vmatprep.subr.mxu0 0.0
        %694 = vmatpush2.msra.mxu0 0.0
        %695 = vmatprep.subr.mxu0 0.0
        %696 = vmatpush2.msra.mxu0 0.0
        %697 = vmatprep.subr.mxu0 0.0
        %698 = vmatpush2.msra.mxu0 0.0
        %699 = vmatprep.subr.mxu0 0.0
        %700 = vmatpush2.msra.mxu0 0.0
        %701 = vmatprep.subr.mxu0 0.0
        %702 = vmatpush2.msra.mxu0 0.0
        %703 = vmatprep.subr.mxu0 0.0
        %704 = vmatpush2.msra.mxu0 0.0
        %705 = vmatprep.subr.mxu0 0.0
        %706 = vmatpush2.msra.mxu0 0.0
        %707 = vmatprep.subr.mxu0 0.0
        %708 = vmatpush2.msra.mxu0 0.0
        %709 = vmatprep.subr.mxu0 0.0
        %710 = vmatpush2.msra.mxu0 0.0
        %711 = vmatprep.subr.mxu0 0.0
        %712 = vmatpush2.msra.mxu0 0.0
        %713 = vmatprep.subr.mxu0 0.0
        %714 = vmatpush2.msra.mxu0 0.0
        %715 = vmatprep.subr.mxu0 0.0
        %716 = vmatpush2.msra.mxu0 0.0
        %717 = vmatprep.subr.mxu0 0.0
        %718 = vmatpush2.msra.mxu0 0.0
        %719 = vmatprep.subr.mxu0 0.0
        %720 = vmatpush2.msra.mxu0 0.0
        %721 = vmatprep.mubr.f32.mxu0 0.0
        %722 = vmatmul.mubr.f32.gmra.mxu0 %v584
        %v723 = vpop.f32.mrf.mxu0
        %v724 = vadd.f32 0.0, %v723
        %v725 = vpop.f32.mrf.mxu0
        %v726 = vadd.f32 0.0, %v725
        %727 = vdwg.mxu0
        %v732 = vcombine.low %v653, %v655
        %v733 = vcombine.low %v724, %v726
        %736 = vst [vmem:[#allocation2] sm:$0xff] %v732
        %737 = vst [vmem:[#allocation2 + $0x8] sm:$0xff] %v733
      $region76: #{forward.7} parent=71 // pred_fallthru
        _
      %v738 = vld [vmem:[#allocation2] sm:$0xff]
      %v739 = vld [vmem:[#allocation2 + $0x8] sm:$0xff]
      %vm740 = vcmp.gt.f32.partialorder %v738, 0.0
      %vm741 = vcmp.gt.f32.partialorder %v739, 0.0
      %v742 = vmul.f32 %v738, 0.01
      %v743 = vmul.f32 %v739, 0.01
      %v744 = vsel %vm740, %v738, %v742
      %v745 = vsel %vm741, %v739, %v743
      %v746 = vld [vmem:[%s495] sm:$0x3]
      %v747 = vld [vmem:[%s499] sm:$0xf]
      %v748 = vld [vmem:[%s12] sm:$0xff]
      %v749 = vld [vmem:[%s12 + $0x8] sm:$0xff]
      %v750 = vld [vmem:[%s12 + $0x10] sm:$0xff]
      %v751 = vld [vmem:[%s12 + $0x18] sm:$0xff]
      %v752 = vld [vmem:[%s12 + $0x20] sm:$0x1]
      %v753 = vld [vmem:[%s12 + $0x28] sm:$0x1]
      %v754 = vld [vmem:[%s12 + $0x30] sm:$0x1]
      %v755 = vld [vmem:[%s12 + $0x38] sm:$0x1]
      %v758 = vcombine.high %v744, %v744
      %v759 = vcombine.high %v745, %v745
      %762 = vrot.lane.b32.xlu0 %v744, 17
      %v763 = vpop.permute.xlu0 %762
      %764 = vrot.lane.b32.xlu0 %v758, 17
      %v765 = vpop.permute.xlu0 %764
      %766 = vrot.lane.b32.xlu0 %v745, 17
      %v767 = vpop.permute.xlu0 %766
      %768 = vrot.lane.b32.xlu0 %v759, 17
      %v769 = vpop.permute.xlu0 %768
      %v770 = vlaneseq
      %v771 = vand.u32 %v770, 127
      %vm772 = vcmp.lt.s32.totalorder %v771, 17
      %v773 = vsel %vm772, %v767, %v769
      %v774 = vsel %vm772, %v765, %v767
      %v775 = vsel %vm772, %v763, %v765
      %v776 = vsel %vm772, %v769, %v763
      %v777 = vlaneseq
      %v778 = vshrl.u32 %v777, 7
      %v779 = vsub.s32 0, %v778
      %v780 = vrot.slane %v748, %v779
      %v781 = vlaneseq
      %v782 = vshrl.u32 %v781, 7
      %v783 = vsub.s32 0, %v782
      %v784 = vrot.slane %v749, %v783
      %v785 = vlaneseq
      %v786 = vshrl.u32 %v785, 7
      %v787 = vsub.s32 0, %v786
      %v788 = vrot.slane %v750, %v787
      %v789 = vlaneseq
      %v790 = vshrl.u32 %v789, 7
      %v791 = vsub.s32 0, %v790
      %v792 = vrot.slane %v751, %v791
      %v793 = vmul.f32 %v776, %v780
      %v794 = vmul.f32 %v775, %v784
      %v795 = vmul.f32 %v774, %v788
      %v796 = vmul.f32 %v773, %v792
      %797 = vrot.lane.b32.xlu0 %v744, 16
      %v798 = vpop.permute.xlu0 %797
      %799 = vrot.lane.b32.xlu0 %v758, 16
      %v800 = vpop.permute.xlu0 %799
      %801 = vrot.lane.b32.xlu0 %v745, 16
      %v802 = vpop.permute.xlu0 %801
      %803 = vrot.lane.b32.xlu0 %v759, 16
      %v804 = vpop.permute.xlu0 %803
      %vm805 = vcmp.lt.s32.totalorder %v771, 16
      %v806 = vsel %vm805, %v802, %v804
      %v807 = vsel %vm805, %v800, %v802
      %v808 = vsel %vm805, %v798, %v800
      %v809 = vsel %vm805, %v804, %v798
      %v810 = vlaneseq
      %v811 = vshrl.u32 %v810, 7
      %v812 = vsub.s32 1, %v811
      %v813 = vrot.slane %v748, %v812
      %v814 = vlaneseq
      %v815 = vshrl.u32 %v814, 7
      %v816 = vsub.s32 1, %v815
      %v817 = vrot.slane %v749, %v816
      %v818 = vlaneseq
      %v819 = vshrl.u32 %v818, 7
      %v820 = vsub.s32 1, %v819
      %v821 = vrot.slane %v750, %v820
      %v822 = vlaneseq
      %v823 = vshrl.u32 %v822, 7
      %v824 = vsub.s32 1, %v823
      %v825 = vrot.slane %v751, %v824
      %v826 = vmul.f32 %v809, %v813
      %v827 = vmul.f32 %v808, %v817
      %v828 = vmul.f32 %v807, %v821
      %v829 = vmul.f32 %v806, %v825
      %830 = vrot.lane.b32.xlu0 %v744, 15
      %v831 = vpop.permute.xlu0 %830
      %832 = vrot.lane.b32.xlu0 %v758, 15
      %v833 = vpop.permute.xlu0 %832
      %834 = vrot.lane.b32.xlu0 %v745, 15
      %v835 = vpop.permute.xlu0 %834
      %836 = vrot.lane.b32.xlu0 %v759, 15
      %v837 = vpop.permute.xlu0 %836
      %vm838 = vcmp.lt.s32.totalorder %v771, 15
      %v839 = vsel %vm838, %v835, %v837
      %v840 = vsel %vm838, %v833, %v835
      %v841 = vsel %vm838, %v831, %v833
      %v842 = vsel %vm838, %v837, %v831
      %v843 = vlaneseq
      %v844 = vshrl.u32 %v843, 7
      %v845 = vsub.s32 2, %v844
      %v846 = vrot.slane %v748, %v845
      %v847 = vlaneseq
      %v848 = vshrl.u32 %v847, 7
      %v849 = vsub.s32 2, %v848
      %v850 = vrot.slane %v749, %v849
      %v851 = vlaneseq
      %v852 = vshrl.u32 %v851, 7
      %v853 = vsub.s32 2, %v852
      %v854 = vrot.slane %v750, %v853
      %v855 = vlaneseq
      %v856 = vshrl.u32 %v855, 7
      %v857 = vsub.s32 2, %v856
      %v858 = vrot.slane %v751, %v857
      %v859 = vmul.f32 %v842, %v846
      %v860 = vmul.f32 %v841, %v850
      %v861 = vmul.f32 %v840, %v854
      %v862 = vmul.f32 %v839, %v858
      %863 = vrot.lane.b32.xlu0 %v744, 1
      %v864 = vpop.permute.xlu0 %863
      %865 = vrot.lane.b32.xlu0 %v758, 1
      %v866 = vpop.permute.xlu0 %865
      %867 = vrot.lane.b32.xlu0 %v745, 1
      %v868 = vpop.permute.xlu0 %867
      %869 = vrot.lane.b32.xlu0 %v759, 1
      %v870 = vpop.permute.xlu0 %869
      %vm871 = vcmp.lt.s32.totalorder %v771, 1
      %v872 = vsel %vm871, %v868, %v870
      %v873 = vsel %vm871, %v866, %v868
      %v874 = vsel %vm871, %v864, %v866
      %v875 = vsel %vm871, %v870, %v864
      %v876 = vlaneseq
      %v877 = vshrl.u32 %v876, 7
      %v878 = vsub.s32 3, %v877
      %v879 = vrot.slane %v748, %v878
      %v880 = vlaneseq
      %v881 = vshrl.u32 %v880, 7
      %v882 = vsub.s32 3, %v881
      %v883 = vrot.slane %v749, %v882
      %v884 = vlaneseq
      %v885 = vshrl.u32 %v884, 7
      %v886 = vsub.s32 3, %v885
      %v887 = vrot.slane %v750, %v886
      %v888 = vlaneseq
      %v889 = vshrl.u32 %v888, 7
      %v890 = vsub.s32 3, %v889
      %v891 = vrot.slane %v751, %v890
      %v892 = vmul.f32 %v875, %v879
      %v893 = vmul.f32 %v874, %v883
      %v894 = vmul.f32 %v873, %v887
      %v895 = vmul.f32 %v872, %v891
      %v896 = vlaneseq
      %v897 = vshrl.u32 %v896, 7
      %v898 = vsub.s32 4, %v897
      %v899 = vrot.slane %v748, %v898
      %v900 = vlaneseq
      %v901 = vshrl.u32 %v900, 7
      %v902 = vsub.s32 4, %v901
      %v903 = vrot.slane %v749, %v902
      %v904 = vlaneseq
      %v905 = vshrl.u32 %v904, 7
      %v906 = vsub.s32 4, %v905
      %v907 = vrot.slane %v750, %v906
      %v908 = vlaneseq
      %v909 = vshrl.u32 %v908, 7
      %v910 = vsub.s32 4, %v909
      %v911 = vrot.slane %v751, %v910
      %v916 = vcombine.low %v899, %v903
      %v917 = vcombine.low %v907, %v911
      %v920 = vmul.f32 %v744, %v916
      %v921 = vmul.f32 %v745, %v917
      %922 = vrot.lane.b32.xlu0 %v744, 127
      %v923 = vpop.permute.xlu0 %922
      %924 = vrot.lane.b32.xlu0 %v758, 127
      %v925 = vpop.permute.xlu0 %924
      %926 = vrot.lane.b32.xlu0 %v745, 127
      %v927 = vpop.permute.xlu0 %926
      %928 = vrot.lane.b32.xlu0 %v759, 127
      %v929 = vpop.permute.xlu0 %928
      %vm930 = vcmp.lt.s32.totalorder %v771, 127
      %v931 = vsel %vm930, %v927, %v929
      %v932 = vsel %vm930, %v925, %v927
      %v933 = vsel %vm930, %v923, %v925
      %v934 = vsel %vm930, %v929, %v923
      %v935 = vlaneseq
      %v936 = vshrl.u32 %v935, 7
      %v937 = vsub.s32 5, %v936
      %v938 = vrot.slane %v748, %v937
      %v939 = vlaneseq
      %v940 = vshrl.u32 %v939, 7
      %v941 = vsub.s32 5, %v940
      %v942 = vrot.slane %v749, %v941
      %v943 = vlaneseq
      %v944 = vshrl.u32 %v943, 7
      %v945 = vsub.s32 5, %v944
      %v946 = vrot.slane %v750, %v945
      %v947 = vlaneseq
      %v948 = vshrl.u32 %v947, 7
      %v949 = vsub.s32 5, %v948
      %v950 = vrot.slane %v751, %v949
      %v951 = vmul.f32 %v933, %v938
      %v952 = vmul.f32 %v932, %v942
      %v953 = vmul.f32 %v931, %v946
      %v954 = vmul.f32 %v934, %v950
      %955 = vrot.lane.b32.xlu0 %v744, 113
      %v956 = vpop.permute.xlu0 %955
      %957 = vrot.lane.b32.xlu0 %v758, 113
      %v958 = vpop.permute.xlu0 %957
      %959 = vrot.lane.b32.xlu0 %v745, 113
      %v960 = vpop.permute.xlu0 %959
      %961 = vrot.lane.b32.xlu0 %v759, 113
      %v962 = vpop.permute.xlu0 %961
      %vm963 = vcmp.lt.s32.totalorder %v771, 113
      %v964 = vsel %vm963, %v960, %v962
      %v965 = vsel %vm963, %v958, %v960
      %v966 = vsel %vm963, %v956, %v958
      %v967 = vsel %vm963, %v962, %v956
      %v968 = vlaneseq
      %v969 = vshrl.u32 %v968, 7
      %v970 = vsub.s32 6, %v969
      %v971 = vrot.slane %v748, %v970
      %v972 = vlaneseq
      %v973 = vshrl.u32 %v972, 7
      %v974 = vsub.s32 6, %v973
      %v975 = vrot.slane %v749, %v974
      %v976 = vlaneseq
      %v977 = vshrl.u32 %v976, 7
      %v978 = vsub.s32 6, %v977
      %v979 = vrot.slane %v750, %v978
      %v980 = vlaneseq
      %v981 = vshrl.u32 %v980, 7
      %v982 = vsub.s32 6, %v981
      %v983 = vrot.slane %v751, %v982
      %v984 = vmul.f32 %v966, %v971
      %v985 = vmul.f32 %v965, %v975
      %v986 = vmul.f32 %v964, %v979
      %v987 = vmul.f32 %v967, %v983
      %988 = vrot.lane.b32.xlu0 %v744, 112
      %v989 = vpop.permute.xlu0 %988
      %990 = vrot.lane.b32.xlu0 %v758, 112
      %v991 = vpop.permute.xlu0 %990
      %992 = vrot.lane.b32.xlu0 %v745, 112
      %v993 = vpop.permute.xlu0 %992
      %994 = vrot.lane.b32.xlu0 %v759, 112
      %v995 = vpop.permute.xlu0 %994
      %vm996 = vcmp.lt.s32.totalorder %v771, 112
      %v997 = vsel %vm996, %v993, %v995
      %v998 = vsel %vm996, %v991, %v993
      %v999 = vsel %vm996, %v989, %v991
      %v1000 = vsel %vm996, %v995, %v989
      %v1001 = vlaneseq
      %v1002 = vshrl.u32 %v1001, 7
      %v1003 = vsub.s32 7, %v1002
      %v1004 = vrot.slane %v748, %v1003
      %v1005 = vlaneseq
      %v1006 = vshrl.u32 %v1005, 7
      %v1007 = vsub.s32 7, %v1006
      %v1008 = vrot.slane %v749, %v1007
      %v1009 = vlaneseq
      %v1010 = vshrl.u32 %v1009, 7
      %v1011 = vsub.s32 7, %v1010
      %v1012 = vrot.slane %v750, %v1011
      %v1013 = vlaneseq
      %v1014 = vshrl.u32 %v1013, 7
      %v1015 = vsub.s32 7, %v1014
      %v1016 = vrot.slane %v751, %v1015
      %v1017 = vmul.f32 %v999, %v1004
      %v1018 = vmul.f32 %v998, %v1008
      %v1019 = vmul.f32 %v997, %v1012
      %v1020 = vmul.f32 %v1000, %v1016
      %1021 = vrot.lane.b32.xlu0 %v744, 111
      %v1022 = vpop.permute.xlu0 %1021
      %1023 = vrot.lane.b32.xlu0 %v758, 111
      %v1024 = vpop.permute.xlu0 %1023
      %1025 = vrot.lane.b32.xlu0 %v745, 111
      %v1026 = vpop.permute.xlu0 %1025
      %1027 = vrot.lane.b32.xlu0 %v759, 111
      %v1028 = vpop.permute.xlu0 %1027
      %vm1029 = vcmp.lt.s32.totalorder %v771, 111
      %v1030 = vsel %vm1029, %v1026, %v1028
      %v1031 = vsel %vm1029, %v1024, %v1026
      %v1032 = vsel %vm1029, %v1022, %v1024
      %v1033 = vsel %vm1029, %v1028, %v1022
      %v1034 = vlaneseq
      %v1035 = vshrl.u32 %v1034, 7
      %v1036 = vsub.s32 0, %v1035
      %v1037 = vrot.slane %v752, %v1036
      %v1038 = vlaneseq
      %v1039 = vshrl.u32 %v1038, 7
      %v1040 = vsub.s32 0, %v1039
      %v1041 = vrot.slane %v753, %v1040
      %v1042 = vlaneseq
      %v1043 = vshrl.u32 %v1042, 7
      %v1044 = vsub.s32 0, %v1043
      %v1045 = vrot.slane %v754, %v1044
      %v1046 = vlaneseq
      %v1047 = vshrl.u32 %v1046, 7
      %v1048 = vsub.s32 0, %v1047
      %v1049 = vrot.slane %v755, %v1048
      %v1050 = vmul.f32 %v1032, %v1037
      %v1051 = vmul.f32 %v1031, %v1041
      %v1052 = vmul.f32 %v1030, %v1045
      %v1053 = vmul.f32 %v1033, %v1049
      %v1058 = vrot.slane %v826, 4
      %v1059 = vrot.slane %v827, 4
      %v1060 = vrot.slane %v828, 4
      %v1061 = vrot.slane %v829, 4
      %v1070 = vrot.slane %v892, 4
      %v1071 = vrot.slane %v893, 4
      %v1072 = vrot.slane %v894, 4
      %v1073 = vrot.slane %v895, 4
      %v1080 = vcombine.high %v920, %v920
      %v1081 = vcombine.high %v921, %v921
      %v1088 = vrot.slane %v951, 4
      %v1089 = vrot.slane %v952, 4
      %v1090 = vrot.slane %v953, 4
      %v1091 = vrot.slane %v954, 4
      %v1100 = vrot.slane %v1017, 4
      %v1101 = vrot.slane %v1018, 4
      %v1102 = vrot.slane %v1019, 4
      %v1103 = vrot.slane %v1020, 4
      %vm1108 = vcmask 1043456
      %v1109 = vsel %vm1108, %v793, %v1058
      %v1110 = vsel %vm1108, %v794, %v1059
      %v1111 = vsel %vm1108, %v795, %v1060
      %v1112 = vsel %vm1108, %v796, %v1061
      %v1113 = vsel %vm1108, %v859, %v1070
      %v1114 = vsel %vm1108, %v860, %v1071
      %v1115 = vsel %vm1108, %v861, %v1072
      %v1116 = vsel %vm1108, %v862, %v1073
      %v1117 = vsel %vm1108, %v920, %v1088
      %v1118 = vsel %vm1108, %v1080, %v1089
      %v1119 = vsel %vm1108, %v921, %v1090
      %v1120 = vsel %vm1108, %v1081, %v1091
      %v1121 = vsel %vm1108, %v984, %v1100
      %v1122 = vsel %vm1108, %v985, %v1101
      %v1123 = vsel %vm1108, %v986, %v1102
      %v1124 = vsel %vm1108, %v987, %v1103
      %v1125 = vpack.c.bf16 %v1113, %v1109
      %v1126 = vpack.c.bf16 %v1114, %v1110
      %v1127 = vpack.c.bf16 %v1115, %v1111
      %v1128 = vpack.c.bf16 %v1116, %v1112
      %v1129 = vpack.c.bf16 %v1121, %v1117
      %v1130 = vpack.c.bf16 %v1122, %v1118
      %v1131 = vpack.c.bf16 %v1123, %v1119
      %v1132 = vpack.c.bf16 %v1124, %v1120
      %v1133 = vpack.c.bf16 %v1050, %v1050
      %v1134 = vpack.c.bf16 %v1051, %v1051
      %v1135 = vpack.c.bf16 %v1052, %v1052
      %v1136 = vpack.c.bf16 %v1053, %v1053
      %1138 = vset.pattern.permute.xlu0 0
      %1139 = vperm.xlu0 %1138, %v747
      %v1140 = vpop.permute.xlu0 %1139
      %vm1142 = vcmask 293888
      %v1144 = vsel %vm1142, %v746, 0
      %vm1146 = vcmask 1041408
      %v1148 = vsel %vm1146, %v1133, 0
      %v1151 = vsel %vm1146, %v1134, 0
      %v1154 = vsel %vm1146, %v1135, 0
      %v1157 = vsel %vm1146, %v1136, 0
      %1159 = vmatprep.subr.bf16.mxu0 0
      %1160 = vmatpush1.bf16.msra.mxu0 0
      %1161 = vmatprep.subr.bf16.mxu0 0
      %1162 = vmatpush1.bf16.msra.mxu0 0
      %1163 = vmatprep.subr.bf16.mxu0 0
      %1164 = vmatpush1.bf16.msra.mxu0 0
      %1165 = vmatprep.subr.bf16.mxu0 0
      %1166 = vmatpush1.bf16.msra.mxu0 0
      %1167 = vmatprep.subr.bf16.mxu0 0
      %1168 = vmatpush1.bf16.msra.mxu0 0
      %1169 = vmatprep.subr.bf16.mxu0 %v1151
      %1170 = vmatpush1.bf16.msra.mxu0 %v1148
      %1171 = vmatprep.subr.bf16.mxu0 %v1130
      %1172 = vmatpush1.bf16.msra.mxu0 %v1129
      %1173 = vmatprep.subr.bf16.mxu0 %v1126
      %1174 = vmatpush1.bf16.msra.mxu0 %v1125
      %1175 = vmatprep.subr.bf16.mxu0 0
      %1176 = vmatpush2.bf16.msra.mxu0 0
      %1177 = vmatprep.subr.bf16.mxu0 0
      %1178 = vmatpush2.bf16.msra.mxu0 0
      %1179 = vmatprep.subr.bf16.mxu0 0
      %1180 = vmatpush2.bf16.msra.mxu0 0
      %1181 = vmatprep.subr.bf16.mxu0 0
      %1182 = vmatpush2.bf16.msra.mxu0 0
      %1183 = vmatprep.subr.bf16.mxu0 0
      %1184 = vmatpush2.bf16.msra.mxu0 0
      %1185 = vmatprep.subr.bf16.mxu0 0
      %1186 = vmatpush2.bf16.msra.mxu0 0
      %1187 = vmatprep.subr.bf16.mxu0 0
      %1188 = vmatpush2.bf16.msra.mxu0 0
      %1189 = vmatprep.subr.bf16.mxu0 0
      %1190 = vmatpush2.bf16.msra.mxu0 0
      %1191 = vmatprep.mubr.bf16.mxu0 0
      %1192 = vmatmul.mubr.bf16.gmra.mxu0 %v1144
      %v1193 = vpop.f32.mrf.mxu0
      %v1194 = vadd.f32 %v1140, %v1193
      %v1195 = vpop.f32.mrf.mxu0
      %v1196 = vadd.f32 %v1140, %v1195
      %v1197 = vpop.f32.mrf.mxu0
      %v1198 = vpop.f32.mrf.mxu0
      %1199 = vdwg.mxu0
      %1200 = vmatprep.subr.bf16.mxu0 0
      %1201 = vmatpush1.bf16.msra.mxu0 0
      %1202 = vmatprep.subr.bf16.mxu0 0
      %1203 = vmatpush1.bf16.msra.mxu0 0
      %1204 = vmatprep.subr.bf16.mxu0 0
      %1205 = vmatpush1.bf16.msra.mxu0 0
      %1206 = vmatprep.subr.bf16.mxu0 0
      %1207 = vmatpush1.bf16.msra.mxu0 0
      %1208 = vmatprep.subr.bf16.mxu0 0
      %1209 = vmatpush1.bf16.msra.mxu0 0
      %1210 = vmatprep.subr.bf16.mxu0 %v1157
      %1211 = vmatpush1.bf16.msra.mxu0 %v1154
      %1212 = vmatprep.subr.bf16.mxu0 %v1132
      %1213 = vmatpush1.bf16.msra.mxu0 %v1131
      %1214 = vmatprep.subr.bf16.mxu0 %v1128
      %1215 = vmatpush1.bf16.msra.mxu0 %v1127
      %1216 = vmatprep.subr.bf16.mxu0 0
      %1217 = vmatpush2.bf16.msra.mxu0 0
      %1218 = vmatprep.subr.bf16.mxu0 0
      %1219 = vmatpush2.bf16.msra.mxu0 0
      %1220 = vmatprep.subr.bf16.mxu0 0
      %1221 = vmatpush2.bf16.msra.mxu0 0
      %1222 = vmatprep.subr.bf16.mxu0 0
      %1223 = vmatpush2.bf16.msra.mxu0 0
      %1224 = vmatprep.subr.bf16.mxu0 0
      %1225 = vmatpush2.bf16.msra.mxu0 0
      %1226 = vmatprep.subr.bf16.mxu0 0
      %1227 = vmatpush2.bf16.msra.mxu0 0
      %1228 = vmatprep.subr.bf16.mxu0 0
      %1229 = vmatpush2.bf16.msra.mxu0 0
      %1230 = vmatprep.subr.bf16.mxu0 0
      %1231 = vmatpush2.bf16.msra.mxu0 0
      %1232 = vmatprep.mubr.bf16.mxu0 0
      %1233 = vmatmul.mubr.bf16.gmra.mxu0 %v1144
      %v1234 = vpop.f32.mrf.mxu0
      %v1235 = vadd.f32 %v1140, %v1234
      %v1236 = vpop.f32.mrf.mxu0
      %v1237 = vadd.f32 %v1140, %v1236
      %v1238 = vpop.f32.mrf.mxu0
      %v1239 = vpop.f32.mrf.mxu0
      %1240 = vdwg.mxu0
      %v1245 = vcombine.low %v1194, %v1196
      %v1246 = vcombine.low %v1235, %v1237
      %v1249 = vadd.f32 %v738, %v1245
      %v1250 = vadd.f32 %v739, %v1246
      %1251 = vst [vmem:[#allocation2] sm:$0xff] %v1249
      %1252 = vst [vmem:[#allocation2 + $0x8] sm:$0xff] %v1250
      %p1253 = scmp.eq.s32.totalorder %s31, 1
      // Predicated region
      $region77: #{forward.7} parent=71 // pred_check
        %p1254 = pneg %p1253
      $region78: #{forward.7} parent=71 // pred_check_branch
        %1256 = sbr.rel (%p1254) target = $region80
      $region79: #{forward.7} parent=71 // pred_region
        %v1257 = vld [vmem:[%s7] sm:$0x3]
        %v1258 = vld [vmem:[%s491] sm:$0xff]
        %v1259 = vld [vmem:[%s491 + $0x8] sm:$0xff]
        %v1262 = vcombine.high %v1258, %v1258
        %v1263 = vcombine.high %v1259, %v1259
        %v1266 = vpack.c.bf16 %v1258, %v1258
        %v1267 = vpack.c.bf16 %v1262, %v1262
        %v1268 = vpack.c.bf16 %v1259, %v1259
        %v1269 = vpack.c.bf16 %v1263, %v1263
        %v1270 = vld [vmem:[%s8] sm:$0x3]
        %v1273 = vcombine.high %v1249, %v1249
        %v1274 = vcombine.high %v1250, %v1250
        %v1277 = vpack.c.bf16 %v1249, %v1249
        %v1278 = vpack.c.bf16 %v1273, %v1273
        %v1279 = vpack.c.bf16 %v1250, %v1250
        %v1280 = vpack.c.bf16 %v1274, %v1274
        %vm1281 = vcmask 31744
        %v1283 = vsel %vm1281, %v1270, 0
        %v1286 = vsel %vm1146, %v1277, 0
        %v1289 = vsel %vm1146, %v1278, 0
        %v1292 = vsel %vm1146, %v1279, 0
        %v1295 = vsel %vm1146, %v1280, 0
        %1297 = vmatprep.subr.bf16.mxu0 0
        %1298 = vmatpush1.bf16.msra.mxu0 0
        %1299 = vmatprep.subr.bf16.mxu0 0
        %1300 = vmatpush1.bf16.msra.mxu0 0
        %1301 = vmatprep.subr.bf16.mxu0 0
        %1302 = vmatpush1.bf16.msra.mxu0 0
        %1303 = vmatprep.subr.bf16.mxu0 0
        %1304 = vmatpush1.bf16.msra.mxu0 0
        %1305 = vmatprep.subr.bf16.mxu0 0
        %1306 = vmatpush1.bf16.msra.mxu0 0
        %1307 = vmatprep.subr.bf16.mxu0 0
        %1308 = vmatpush1.bf16.msra.mxu0 0
        %1309 = vmatprep.subr.bf16.mxu0 0
        %1310 = vmatpush1.bf16.msra.mxu0 0
        %1311 = vmatprep.subr.bf16.mxu0 %v1289
        %1312 = vmatpush1.bf16.msra.mxu0 %v1286
        %1313 = vmatprep.subr.bf16.mxu0 0
        %1314 = vmatpush2.bf16.msra.mxu0 0
        %1315 = vmatprep.subr.bf16.mxu0 0
        %1316 = vmatpush2.bf16.msra.mxu0 0
        %1317 = vmatprep.subr.bf16.mxu0 0
        %1318 = vmatpush2.bf16.msra.mxu0 0
        %1319 = vmatprep.subr.bf16.mxu0 0
        %1320 = vmatpush2.bf16.msra.mxu0 0
        %1321 = vmatprep.subr.bf16.mxu0 0
        %1322 = vmatpush2.bf16.msra.mxu0 0
        %1323 = vmatprep.subr.bf16.mxu0 0
        %1324 = vmatpush2.bf16.msra.mxu0 0
        %1325 = vmatprep.subr.bf16.mxu0 0
        %1326 = vmatpush2.bf16.msra.mxu0 0
        %1327 = vmatprep.subr.bf16.mxu0 0
        %1328 = vmatpush2.bf16.msra.mxu0 0
        %1329 = vmatprep.mubr.bf16.mxu0 0
        %1330 = vmatmul.mubr.bf16.gmra.mxu0 %v1283
        %v1331 = vpop.f32.mrf.mxu0
        %v1332 = vadd.f32 0.0, %v1331
        %v1333 = vpop.f32.mrf.mxu0
        %v1334 = vadd.f32 0.0, %v1333
        %v1335 = vpop.f32.mrf.mxu0
        %v1336 = vpop.f32.mrf.mxu0
        %1337 = vdwg.mxu0
        %1338 = vmatprep.subr.bf16.mxu0 0
        %1339 = vmatpush1.bf16.msra.mxu0 0
        %1340 = vmatprep.subr.bf16.mxu0 0
        %1341 = vmatpush1.bf16.msra.mxu0 0
        %1342 = vmatprep.subr.bf16.mxu0 0
        %1343 = vmatpush1.bf16.msra.mxu0 0
        %1344 = vmatprep.subr.bf16.mxu0 0
        %1345 = vmatpush1.bf16.msra.mxu0 0
        %1346 = vmatprep.subr.bf16.mxu0 0
        %1347 = vmatpush1.bf16.msra.mxu0 0
        %1348 = vmatprep.subr.bf16.mxu0 0
        %1349 = vmatpush1.bf16.msra.mxu0 0
        %1350 = vmatprep.subr.bf16.mxu0 0
        %1351 = vmatpush1.bf16.msra.mxu0 0
        %1352 = vmatprep.subr.bf16.mxu0 %v1295
        %1353 = vmatpush1.bf16.msra.mxu0 %v1292
        %1354 = vmatprep.subr.bf16.mxu0 0
        %1355 = vmatpush2.bf16.msra.mxu0 0
        %1356 = vmatprep.subr.bf16.mxu0 0
        %1357 = vmatpush2.bf16.msra.mxu0 0
        %1358 = vmatprep.subr.bf16.mxu0 0
        %1359 = vmatpush2.bf16.msra.mxu0 0
        %1360 = vmatprep.subr.bf16.mxu0 0
        %1361 = vmatpush2.bf16.msra.mxu0 0
        %1362 = vmatprep.subr.bf16.mxu0 0
        %1363 = vmatpush2.bf16.msra.mxu0 0
        %1364 = vmatprep.subr.bf16.mxu0 0
        %1365 = vmatpush2.bf16.msra.mxu0 0
        %1366 = vmatprep.subr.bf16.mxu0 0
        %1367 = vmatpush2.bf16.msra.mxu0 0
        %1368 = vmatprep.subr.bf16.mxu0 0
        %1369 = vmatpush2.bf16.msra.mxu0 0
        %1370 = vmatprep.mubr.bf16.mxu0 0
        %1371 = vmatmul.mubr.bf16.gmra.mxu0 %v1283
        %v1372 = vpop.f32.mrf.mxu0
        %v1373 = vadd.f32 0.0, %v1372
        %v1374 = vpop.f32.mrf.mxu0
        %v1375 = vadd.f32 0.0, %v1374
        %v1376 = vpop.f32.mrf.mxu0
        %v1377 = vpop.f32.mrf.mxu0
        %1378 = vdwg.mxu0
        %v1380 = vsel %vm1281, %v1257, 0
        %v1383 = vsel %vm1146, %v1266, 0
        %v1386 = vsel %vm1146, %v1267, 0
        %v1389 = vsel %vm1146, %v1268, 0
        %v1392 = vsel %vm1146, %v1269, 0
        %1394 = vmatprep.subr.bf16.mxu0 0
        %1395 = vmatpush1.bf16.msra.mxu0 0
        %1396 = vmatprep.subr.bf16.mxu0 0
        %1397 = vmatpush1.bf16.msra.mxu0 0
        %1398 = vmatprep.subr.bf16.mxu0 0
        %1399 = vmatpush1.bf16.msra.mxu0 0
        %1400 = vmatprep.subr.bf16.mxu0 0
        %1401 = vmatpush1.bf16.msra.mxu0 0
        %1402 = vmatprep.subr.bf16.mxu0 0
        %1403 = vmatpush1.bf16.msra.mxu0 0
        %1404 = vmatprep.subr.bf16.mxu0 0
        %1405 = vmatpush1.bf16.msra.mxu0 0
        %1406 = vmatprep.subr.bf16.mxu0 0
        %1407 = vmatpush1.bf16.msra.mxu0 0
        %1408 = vmatprep.subr.bf16.mxu0 %v1386
        %1409 = vmatpush1.bf16.msra.mxu0 %v1383
        %1410 = vmatprep.subr.bf16.mxu0 0
        %1411 = vmatpush2.bf16.msra.mxu0 0
        %1412 = vmatprep.subr.bf16.mxu0 0
        %1413 = vmatpush2.bf16.msra.mxu0 0
        %1414 = vmatprep.subr.bf16.mxu0 0
        %1415 = vmatpush2.bf16.msra.mxu0 0
        %1416 = vmatprep.subr.bf16.mxu0 0
        %1417 = vmatpush2.bf16.msra.mxu0 0
        %1418 = vmatprep.subr.bf16.mxu0 0
        %1419 = vmatpush2.bf16.msra.mxu0 0
        %1420 = vmatprep.subr.bf16.mxu0 0
        %1421 = vmatpush2.bf16.msra.mxu0 0
        %1422 = vmatprep.subr.bf16.mxu0 0
        %1423 = vmatpush2.bf16.msra.mxu0 0
        %1424 = vmatprep.subr.bf16.mxu0 0
        %1425 = vmatpush2.bf16.msra.mxu0 0
        %1426 = vmatprep.mubr.bf16.mxu0 0
        %1427 = vmatmul.mubr.bf16.gmra.mxu0 %v1380
        %v1428 = vpop.f32.mrf.mxu0
        %v1429 = vadd.f32 %v1332, %v1428
        %v1430 = vpop.f32.mrf.mxu0
        %v1431 = vadd.f32 %v1334, %v1430
        %v1432 = vpop.f32.mrf.mxu0
        %v1433 = vpop.f32.mrf.mxu0
        %1434 = vdwg.mxu0
        %1435 = vmatprep.subr.bf16.mxu0 0
        %1436 = vmatpush1.bf16.msra.mxu0 0
        %1437 = vmatprep.subr.bf16.mxu0 0
        %1438 = vmatpush1.bf16.msra.mxu0 0
        %1439 = vmatprep.subr.bf16.mxu0 0
        %1440 = vmatpush1.bf16.msra.mxu0 0
        %1441 = vmatprep.subr.bf16.mxu0 0
        %1442 = vmatpush1.bf16.msra.mxu0 0
        %1443 = vmatprep.subr.bf16.mxu0 0
        %1444 = vmatpush1.bf16.msra.mxu0 0
        %1445 = vmatprep.subr.bf16.mxu0 0
        %1446 = vmatpush1.bf16.msra.mxu0 0
        %1447 = vmatprep.subr.bf16.mxu0 0
        %1448 = vmatpush1.bf16.msra.mxu0 0
        %1449 = vmatprep.subr.bf16.mxu0 %v1392
        %1450 = vmatpush1.bf16.msra.mxu0 %v1389
        %1451 = vmatprep.subr.bf16.mxu0 0
        %1452 = vmatpush2.bf16.msra.mxu0 0
        %1453 = vmatprep.subr.bf16.mxu0 0
        %1454 = vmatpush2.bf16.msra.mxu0 0
        %1455 = vmatprep.subr.bf16.mxu0 0
        %1456 = vmatpush2.bf16.msra.mxu0 0
        %1457 = vmatprep.subr.bf16.mxu0 0
        %1458 = vmatpush2.bf16.msra.mxu0 0
        %1459 = vmatprep.subr.bf16.mxu0 0
        %1460 = vmatpush2.bf16.msra.mxu0 0
        %1461 = vmatprep.subr.bf16.mxu0 0
        %1462 = vmatpush2.bf16.msra.mxu0 0
        %1463 = vmatprep.subr.bf16.mxu0 0
        %1464 = vmatpush2.bf16.msra.mxu0 0
        %1465 = vmatprep.subr.bf16.mxu0 0
        %1466 = vmatpush2.bf16.msra.mxu0 0
        %1467 = vmatprep.mubr.bf16.mxu0 0
        %1468 = vmatmul.mubr.bf16.gmra.mxu0 %v1380
        %v1469 = vpop.f32.mrf.mxu0
        %v1470 = vadd.f32 %v1373, %v1469
        %v1471 = vpop.f32.mrf.mxu0
        %v1472 = vadd.f32 %v1375, %v1471
        %v1473 = vpop.f32.mrf.mxu0
        %v1474 = vpop.f32.mrf.mxu0
        %1475 = vdwg.mxu0
        %v1476 = vld [vmem:[%s9] sm:$0xf]
        %1478 = vset.pattern.permute.xlu0 0
        %1479 = vperm.xlu0 %1478, %v1476
        %v1480 = vpop.permute.xlu0 %1479
        %v1482 = vadd.f32 %v1429, %v1480
        %v1483 = vadd.f32 %v1431, %v1480
        %v1484 = vadd.f32 %v1470, %v1480
        %v1485 = vadd.f32 %v1472, %v1480
        %v1486 = vld [vmem:[%s10] sm:$0x1]
        %v1487 = vld [vmem:[#allocation3] sm:$0x1]
        %v1488 = vld [vmem:[%s12] sm:$0xff]
        %v1489 = vld [vmem:[%s12 + $0x8] sm:$0xff]
        %v1490 = vld [vmem:[%s12 + $0x10] sm:$0xff]
        %v1491 = vld [vmem:[%s12 + $0x18] sm:$0xff]
        %v1492 = vld [vmem:[%s12 + $0x20] sm:$0x1]
        %v1493 = vld [vmem:[%s12 + $0x28] sm:$0x1]
        %v1494 = vld [vmem:[%s12 + $0x30] sm:$0x1]
        %v1495 = vld [vmem:[%s12 + $0x38] sm:$0x1]
        %1496 = vrot.lane.b32.xlu0 %v1482, 17
        %v1497 = vpop.permute.xlu0 %1496
        %1498 = vrot.lane.b32.xlu0 %v1483, 17
        %v1499 = vpop.permute.xlu0 %1498
        %1500 = vrot.lane.b32.xlu0 %v1484, 17
        %v1501 = vpop.permute.xlu0 %1500
        %1502 = vrot.lane.b32.xlu0 %v1485, 17
        %v1503 = vpop.permute.xlu0 %1502
        %v1504 = vsel %vm772, %v1501, %v1503
        %v1505 = vsel %vm772, %v1499, %v1501
        %v1506 = vsel %vm772, %v1497, %v1499
        %v1507 = vsel %vm772, %v1503, %v1497
        %v1508 = vlaneseq
        %v1509 = vshrl.u32 %v1508, 7
        %v1510 = vsub.s32 0, %v1509
        %v1511 = vrot.slane %v1488, %v1510
        %v1512 = vlaneseq
        %v1513 = vshrl.u32 %v1512, 7
        %v1514 = vsub.s32 0, %v1513
        %v1515 = vrot.slane %v1489, %v1514
        %v1516 = vlaneseq
        %v1517 = vshrl.u32 %v1516, 7
        %v1518 = vsub.s32 0, %v1517
        %v1519 = vrot.slane %v1490, %v1518
        %v1520 = vlaneseq
        %v1521 = vshrl.u32 %v1520, 7
        %v1522 = vsub.s32 0, %v1521
        %v1523 = vrot.slane %v1491, %v1522
        %v1524 = vmul.f32 %v1507, %v1511
        %v1525 = vmul.f32 %v1506, %v1515
        %v1526 = vmul.f32 %v1505, %v1519
        %v1527 = vmul.f32 %v1504, %v1523
        %1528 = vrot.lane.b32.xlu0 %v1482, 16
        %v1529 = vpop.permute.xlu0 %1528
        %1530 = vrot.lane.b32.xlu0 %v1483, 16
        %v1531 = vpop.permute.xlu0 %1530
        %1532 = vrot.lane.b32.xlu0 %v1484, 16
        %v1533 = vpop.permute.xlu0 %1532
        %1534 = vrot.lane.b32.xlu0 %v1485, 16
        %v1535 = vpop.permute.xlu0 %1534
        %v1536 = vsel %vm805, %v1533, %v1535
        %v1537 = vsel %vm805, %v1531, %v1533
        %v1538 = vsel %vm805, %v1529, %v1531
        %v1539 = vsel %vm805, %v1535, %v1529
        %v1540 = vlaneseq
        %v1541 = vshrl.u32 %v1540, 7
        %v1542 = vsub.s32 1, %v1541
        %v1543 = vrot.slane %v1488, %v1542
        %v1544 = vlaneseq
        %v1545 = vshrl.u32 %v1544, 7
        %v1546 = vsub.s32 1, %v1545
        %v1547 = vrot.slane %v1489, %v1546
        %v1548 = vlaneseq
        %v1549 = vshrl.u32 %v1548, 7
        %v1550 = vsub.s32 1, %v1549
        %v1551 = vrot.slane %v1490, %v1550
        %v1552 = vlaneseq
        %v1553 = vshrl.u32 %v1552, 7
        %v1554 = vsub.s32 1, %v1553
        %v1555 = vrot.slane %v1491, %v1554
        %v1556 = vmul.f32 %v1539, %v1543
        %v1557 = vmul.f32 %v1538, %v1547
        %v1558 = vmul.f32 %v1537, %v1551
        %v1559 = vmul.f32 %v1536, %v1555
        %1560 = vrot.lane.b32.xlu0 %v1482, 15
        %v1561 = vpop.permute.xlu0 %1560
        %1562 = vrot.lane.b32.xlu0 %v1483, 15
        %v1563 = vpop.permute.xlu0 %1562
        %1564 = vrot.lane.b32.xlu0 %v1484, 15
        %v1565 = vpop.permute.xlu0 %1564
        %1566 = vrot.lane.b32.xlu0 %v1485, 15
        %v1567 = vpop.permute.xlu0 %1566
        %v1568 = vsel %vm838, %v1565, %v1567
        %v1569 = vsel %vm838, %v1563, %v1565
        %v1570 = vsel %vm838, %v1561, %v1563
        %v1571 = vsel %vm838, %v1567, %v1561
        %v1572 = vlaneseq
        %v1573 = vshrl.u32 %v1572, 7
        %v1574 = vsub.s32 2, %v1573
        %v1575 = vrot.slane %v1488, %v1574
        %v1576 = vlaneseq
        %v1577 = vshrl.u32 %v1576, 7
        %v1578 = vsub.s32 2, %v1577
        %v1579 = vrot.slane %v1489, %v1578
        %v1580 = vlaneseq
        %v1581 = vshrl.u32 %v1580, 7
        %v1582 = vsub.s32 2, %v1581
        %v1583 = vrot.slane %v1490, %v1582
        %v1584 = vlaneseq
        %v1585 = vshrl.u32 %v1584, 7
        %v1586 = vsub.s32 2, %v1585
        %v1587 = vrot.slane %v1491, %v1586
        %v1588 = vmul.f32 %v1571, %v1575
        %v1589 = vmul.f32 %v1570, %v1579
        %v1590 = vmul.f32 %v1569, %v1583
        %v1591 = vmul.f32 %v1568, %v1587
        %1592 = vrot.lane.b32.xlu0 %v1482, 1
        %v1593 = vpop.permute.xlu0 %1592
        %1594 = vrot.lane.b32.xlu0 %v1483, 1
        %v1595 = vpop.permute.xlu0 %1594
        %1596 = vrot.lane.b32.xlu0 %v1484, 1
        %v1597 = vpop.permute.xlu0 %1596
        %1598 = vrot.lane.b32.xlu0 %v1485, 1
        %v1599 = vpop.permute.xlu0 %1598
        %v1600 = vsel %vm871, %v1597, %v1599
        %v1601 = vsel %vm871, %v1595, %v1597
        %v1602 = vsel %vm871, %v1593, %v1595
        %v1603 = vsel %vm871, %v1599, %v1593
        %v1604 = vlaneseq
        %v1605 = vshrl.u32 %v1604, 7
        %v1606 = vsub.s32 3, %v1605
        %v1607 = vrot.slane %v1488, %v1606
        %v1608 = vlaneseq
        %v1609 = vshrl.u32 %v1608, 7
        %v1610 = vsub.s32 3, %v1609
        %v1611 = vrot.slane %v1489, %v1610
        %v1612 = vlaneseq
        %v1613 = vshrl.u32 %v1612, 7
        %v1614 = vsub.s32 3, %v1613
        %v1615 = vrot.slane %v1490, %v1614
        %v1616 = vlaneseq
        %v1617 = vshrl.u32 %v1616, 7
        %v1618 = vsub.s32 3, %v1617
        %v1619 = vrot.slane %v1491, %v1618
        %v1620 = vmul.f32 %v1603, %v1607
        %v1621 = vmul.f32 %v1602, %v1611
        %v1622 = vmul.f32 %v1601, %v1615
        %v1623 = vmul.f32 %v1600, %v1619
        %v1624 = vlaneseq
        %v1625 = vshrl.u32 %v1624, 7
        %v1626 = vsub.s32 4, %v1625
        %v1627 = vrot.slane %v1488, %v1626
        %v1628 = vlaneseq
        %v1629 = vshrl.u32 %v1628, 7
        %v1630 = vsub.s32 4, %v1629
        %v1631 = vrot.slane %v1489, %v1630
        %v1632 = vlaneseq
        %v1633 = vshrl.u32 %v1632, 7
        %v1634 = vsub.s32 4, %v1633
        %v1635 = vrot.slane %v1490, %v1634
        %v1636 = vlaneseq
        %v1637 = vshrl.u32 %v1636, 7
        %v1638 = vsub.s32 4, %v1637
        %v1639 = vrot.slane %v1491, %v1638
        %v1640 = vmul.f32 %v1482, %v1627
        %v1641 = vmul.f32 %v1483, %v1631
        %v1642 = vmul.f32 %v1484, %v1635
        %v1643 = vmul.f32 %v1485, %v1639
        %1644 = vrot.lane.b32.xlu0 %v1482, 127
        %v1645 = vpop.permute.xlu0 %1644
        %1646 = vrot.lane.b32.xlu0 %v1483, 127
        %v1647 = vpop.permute.xlu0 %1646
        %1648 = vrot.lane.b32.xlu0 %v1484, 127
        %v1649 = vpop.permute.xlu0 %1648
        %1650 = vrot.lane.b32.xlu0 %v1485, 127
        %v1651 = vpop.permute.xlu0 %1650
        %v1652 = vsel %vm930, %v1649, %v1651
        %v1653 = vsel %vm930, %v1647, %v1649
        %v1654 = vsel %vm930, %v1645, %v1647
        %v1655 = vsel %vm930, %v1651, %v1645
        %v1656 = vlaneseq
        %v1657 = vshrl.u32 %v1656, 7
        %v1658 = vsub.s32 5, %v1657
        %v1659 = vrot.slane %v1488, %v1658
        %v1660 = vlaneseq
        %v1661 = vshrl.u32 %v1660, 7
        %v1662 = vsub.s32 5, %v1661
        %v1663 = vrot.slane %v1489, %v1662
        %v1664 = vlaneseq
        %v1665 = vshrl.u32 %v1664, 7
        %v1666 = vsub.s32 5, %v1665
        %v1667 = vrot.slane %v1490, %v1666
        %v1668 = vlaneseq
        %v1669 = vshrl.u32 %v1668, 7
        %v1670 = vsub.s32 5, %v1669
        %v1671 = vrot.slane %v1491, %v1670
        %v1672 = vmul.f32 %v1654, %v1659
        %v1673 = vmul.f32 %v1653, %v1663
        %v1674 = vmul.f32 %v1652, %v1667
        %v1675 = vmul.f32 %v1655, %v1671
        %1676 = vrot.lane.b32.xlu0 %v1482, 113
        %v1677 = vpop.permute.xlu0 %1676
        %1678 = vrot.lane.b32.xlu0 %v1483, 113
        %v1679 = vpop.permute.xlu0 %1678
        %1680 = vrot.lane.b32.xlu0 %v1484, 113
        %v1681 = vpop.permute.xlu0 %1680
        %1682 = vrot.lane.b32.xlu0 %v1485, 113
        %v1683 = vpop.permute.xlu0 %1682
        %v1684 = vsel %vm963, %v1681, %v1683
        %v1685 = vsel %vm963, %v1679, %v1681
        %v1686 = vsel %vm963, %v1677, %v1679
        %v1687 = vsel %vm963, %v1683, %v1677
        %v1688 = vlaneseq
        %v1689 = vshrl.u32 %v1688, 7
        %v1690 = vsub.s32 6, %v1689
        %v1691 = vrot.slane %v1488, %v1690
        %v1692 = vlaneseq
        %v1693 = vshrl.u32 %v1692, 7
        %v1694 = vsub.s32 6, %v1693
        %v1695 = vrot.slane %v1489, %v1694
        %v1696 = vlaneseq
        %v1697 = vshrl.u32 %v1696, 7
        %v1698 = vsub.s32 6, %v1697
        %v1699 = vrot.slane %v1490, %v1698
        %v1700 = vlaneseq
        %v1701 = vshrl.u32 %v1700, 7
        %v1702 = vsub.s32 6, %v1701
        %v1703 = vrot.slane %v1491, %v1702
        %v1704 = vmul.f32 %v1686, %v1691
        %v1705 = vmul.f32 %v1685, %v1695
        %v1706 = vmul.f32 %v1684, %v1699
        %v1707 = vmul.f32 %v1687, %v1703
        %1708 = vrot.lane.b32.xlu0 %v1482, 112
        %v1709 = vpop.permute.xlu0 %1708
        %1710 = vrot.lane.b32.xlu0 %v1483, 112
        %v1711 = vpop.permute.xlu0 %1710
        %1712 = vrot.lane.b32.xlu0 %v1484, 112
        %v1713 = vpop.permute.xlu0 %1712
        %1714 = vrot.lane.b32.xlu0 %v1485, 112
        %v1715 = vpop.permute.xlu0 %1714
        %v1716 = vsel %vm996, %v1713, %v1715
        %v1717 = vsel %vm996, %v1711, %v1713
        %v1718 = vsel %vm996, %v1709, %v1711
        %v1719 = vsel %vm996, %v1715, %v1709
        %v1720 = vlaneseq
        %v1721 = vshrl.u32 %v1720, 7
        %v1722 = vsub.s32 7, %v1721
        %v1723 = vrot.slane %v1488, %v1722
        %v1724 = vlaneseq
        %v1725 = vshrl.u32 %v1724, 7
        %v1726 = vsub.s32 7, %v1725
        %v1727 = vrot.slane %v1489, %v1726
        %v1728 = vlaneseq
        %v1729 = vshrl.u32 %v1728, 7
        %v1730 = vsub.s32 7, %v1729
        %v1731 = vrot.slane %v1490, %v1730
        %v1732 = vlaneseq
        %v1733 = vshrl.u32 %v1732, 7
        %v1734 = vsub.s32 7, %v1733
        %v1735 = vrot.slane %v1491, %v1734
        %v1736 = vmul.f32 %v1718, %v1723
        %v1737 = vmul.f32 %v1717, %v1727
        %v1738 = vmul.f32 %v1716, %v1731
        %v1739 = vmul.f32 %v1719, %v1735
        %1740 = vrot.lane.b32.xlu0 %v1482, 111
        %v1741 = vpop.permute.xlu0 %1740
        %1742 = vrot.lane.b32.xlu0 %v1483, 111
        %v1743 = vpop.permute.xlu0 %1742
        %1744 = vrot.lane.b32.xlu0 %v1484, 111
        %v1745 = vpop.permute.xlu0 %1744
        %1746 = vrot.lane.b32.xlu0 %v1485, 111
        %v1747 = vpop.permute.xlu0 %1746
        %v1748 = vsel %vm1029, %v1745, %v1747
        %v1749 = vsel %vm1029, %v1743, %v1745
        %v1750 = vsel %vm1029, %v1741, %v1743
        %v1751 = vsel %vm1029, %v1747, %v1741
        %v1752 = vlaneseq
        %v1753 = vshrl.u32 %v1752, 7
        %v1754 = vsub.s32 0, %v1753
        %v1755 = vrot.slane %v1492, %v1754
        %v1756 = vlaneseq
        %v1757 = vshrl.u32 %v1756, 7
        %v1758 = vsub.s32 0, %v1757
        %v1759 = vrot.slane %v1493, %v1758
        %v1760 = vlaneseq
        %v1761 = vshrl.u32 %v1760, 7
        %v1762 = vsub.s32 0, %v1761
        %v1763 = vrot.slane %v1494, %v1762
        %v1764 = vlaneseq
        %v1765 = vshrl.u32 %v1764, 7
        %v1766 = vsub.s32 0, %v1765
        %v1767 = vrot.slane %v1495, %v1766
        %v1768 = vmul.f32 %v1750, %v1755
        %v1769 = vmul.f32 %v1749, %v1759
        %v1770 = vmul.f32 %v1748, %v1763
        %v1771 = vmul.f32 %v1751, %v1767
        %v1776 = vrot.slane %v1556, 4
        %v1777 = vrot.slane %v1557, 4
        %v1778 = vrot.slane %v1558, 4
        %v1779 = vrot.slane %v1559, 4
        %v1788 = vrot.slane %v1620, 4
        %v1789 = vrot.slane %v1621, 4
        %v1790 = vrot.slane %v1622, 4
        %v1791 = vrot.slane %v1623, 4
        %v1800 = vrot.slane %v1672, 4
        %v1801 = vrot.slane %v1673, 4
        %v1802 = vrot.slane %v1674, 4
        %v1803 = vrot.slane %v1675, 4
        %v1812 = vrot.slane %v1736, 4
        %v1813 = vrot.slane %v1737, 4
        %v1814 = vrot.slane %v1738, 4
        %v1815 = vrot.slane %v1739, 4
        %v1820 = vsel %vm1108, %v1524, %v1776
        %v1821 = vsel %vm1108, %v1525, %v1777
        %v1822 = vsel %vm1108, %v1526, %v1778
        %v1823 = vsel %vm1108, %v1527, %v1779
        %v1824 = vsel %vm1108, %v1588, %v1788
        %v1825 = vsel %vm1108, %v1589, %v1789
        %v1826 = vsel %vm1108, %v1590, %v1790
        %v1827 = vsel %vm1108, %v1591, %v1791
        %v1828 = vsel %vm1108, %v1640, %v1800
        %v1829 = vsel %vm1108, %v1641, %v1801
        %v1830 = vsel %vm1108, %v1642, %v1802
        %v1831 = vsel %vm1108, %v1643, %v1803
        %v1832 = vsel %vm1108, %v1704, %v1812
        %v1833 = vsel %vm1108, %v1705, %v1813
        %v1834 = vsel %vm1108, %v1706, %v1814
        %v1835 = vsel %vm1108, %v1707, %v1815
        %v1836 = vpack.c.bf16 %v1824, %v1820
        %v1837 = vpack.c.bf16 %v1825, %v1821
        %v1838 = vpack.c.bf16 %v1826, %v1822
        %v1839 = vpack.c.bf16 %v1827, %v1823
        %v1840 = vpack.c.bf16 %v1832, %v1828
        %v1841 = vpack.c.bf16 %v1833, %v1829
        %v1842 = vpack.c.bf16 %v1834, %v1830
        %v1843 = vpack.c.bf16 %v1835, %v1831
        %v1844 = vpack.c.bf16 %v1768, %v1768
        %v1845 = vpack.c.bf16 %v1769, %v1769
        %v1846 = vpack.c.bf16 %v1770, %v1770
        %v1847 = vpack.c.bf16 %v1771, %v1771
        %1849 = vset.pattern.permute.xlu0 0
        %1850 = vperm.xlu0 %1849, %v1487
        %v1851 = vpop.permute.xlu0 %1850
        %v1853 = vlaneseq
        %v1854 = vshrl.u32 %v1853, 7
        %v1855 = vsub.s32 0, %v1854
        %v1856 = vrot.slane %v1851, %v1855
        %v1858 = vsel %vm1142, %v1486, 0
        %v1861 = vsel %vm1146, %v1844, 0
        %v1864 = vsel %vm1146, %v1845, 0
        %v1867 = vsel %vm1146, %v1846, 0
        %v1870 = vsel %vm1146, %v1847, 0
        %1872 = vmatprep.subr.bf16.mxu0 0
        %1873 = vmatpush1.bf16.msra.mxu0 0
        %1874 = vmatprep.subr.bf16.mxu0 0
        %1875 = vmatpush1.bf16.msra.mxu0 0
        %1876 = vmatprep.subr.bf16.mxu0 0
        %1877 = vmatpush1.bf16.msra.mxu0 0
        %1878 = vmatprep.subr.bf16.mxu0 0
        %1879 = vmatpush1.bf16.msra.mxu0 0
        %1880 = vmatprep.subr.bf16.mxu0 0
        %1881 = vmatpush1.bf16.msra.mxu0 0
        %1882 = vmatprep.subr.bf16.mxu0 %v1864
        %1883 = vmatpush1.bf16.msra.mxu0 %v1861
        %1884 = vmatprep.subr.bf16.mxu0 %v1841
        %1885 = vmatpush1.bf16.msra.mxu0 %v1840
        %1886 = vmatprep.subr.bf16.mxu0 %v1837
        %1887 = vmatpush1.bf16.msra.mxu0 %v1836
        %1888 = vmatprep.subr.bf16.mxu0 0
        %1889 = vmatpush2.bf16.msra.mxu0 0
        %1890 = vmatprep.subr.bf16.mxu0 0
        %1891 = vmatpush2.bf16.msra.mxu0 0
        %1892 = vmatprep.subr.bf16.mxu0 0
        %1893 = vmatpush2.bf16.msra.mxu0 0
        %1894 = vmatprep.subr.bf16.mxu0 0
        %1895 = vmatpush2.bf16.msra.mxu0 0
        %1896 = vmatprep.subr.bf16.mxu0 0
        %1897 = vmatpush2.bf16.msra.mxu0 0
        %1898 = vmatprep.subr.bf16.mxu0 0
        %1899 = vmatpush2.bf16.msra.mxu0 0
        %1900 = vmatprep.subr.bf16.mxu0 0
        %1901 = vmatpush2.bf16.msra.mxu0 0
        %1902 = vmatprep.subr.bf16.mxu0 0
        %1903 = vmatpush2.bf16.msra.mxu0 0
        %1904 = vmatprep.mubr.bf16.mxu0 0
        %1905 = vmatmul.mubr.bf16.gmra.mxu0 %v1858
        %v1906 = vpop.f32.mrf.mxu0
        %v1907 = vadd.f32 %v1856, %v1906
        %v1908 = vpop.f32.mrf.mxu0
        %v1909 = vadd.f32 %v1856, %v1908
        %v1910 = vpop.f32.mrf.mxu0
        %v1911 = vpop.f32.mrf.mxu0
        %1912 = vdwg.mxu0
        %1913 = vmatprep.subr.bf16.mxu0 0
        %1914 = vmatpush1.bf16.msra.mxu0 0
        %1915 = vmatprep.subr.bf16.mxu0 0
        %1916 = vmatpush1.bf16.msra.mxu0 0
        %1917 = vmatprep.subr.bf16.mxu0 0
        %1918 = vmatpush1.bf16.msra.mxu0 0
        %1919 = vmatprep.subr.bf16.mxu0 0
        %1920 = vmatpush1.bf16.msra.mxu0 0
        %1921 = vmatprep.subr.bf16.mxu0 0
        %1922 = vmatpush1.bf16.msra.mxu0 0
        %1923 = vmatprep.subr.bf16.mxu0 %v1870
        %1924 = vmatpush1.bf16.msra.mxu0 %v1867
        %1925 = vmatprep.subr.bf16.mxu0 %v1843
        %1926 = vmatpush1.bf16.msra.mxu0 %v1842
        %1927 = vmatprep.subr.bf16.mxu0 %v1839
        %1928 = vmatpush1.bf16.msra.mxu0 %v1838
        %1929 = vmatprep.subr.bf16.mxu0 0
        %1930 = vmatpush2.bf16.msra.mxu0 0
        %1931 = vmatprep.subr.bf16.mxu0 0
        %1932 = vmatpush2.bf16.msra.mxu0 0
        %1933 = vmatprep.subr.bf16.mxu0 0
        %1934 = vmatpush2.bf16.msra.mxu0 0
        %1935 = vmatprep.subr.bf16.mxu0 0
        %1936 = vmatpush2.bf16.msra.mxu0 0
        %1937 = vmatprep.subr.bf16.mxu0 0
        %1938 = vmatpush2.bf16.msra.mxu0 0
        %1939 = vmatprep.subr.bf16.mxu0 0
        %1940 = vmatpush2.bf16.msra.mxu0 0
        %1941 = vmatprep.subr.bf16.mxu0 0
        %1942 = vmatpush2.bf16.msra.mxu0 0
        %1943 = vmatprep.subr.bf16.mxu0 0
        %1944 = vmatpush2.bf16.msra.mxu0 0
        %1945 = vmatprep.mubr.bf16.mxu0 0
        %1946 = vmatmul.mubr.bf16.gmra.mxu0 %v1858
        %v1947 = vpop.f32.mrf.mxu0
        %v1948 = vadd.f32 %v1856, %v1947
        %v1949 = vpop.f32.mrf.mxu0
        %v1950 = vadd.f32 %v1856, %v1949
        %v1951 = vpop.f32.mrf.mxu0
        %v1952 = vpop.f32.mrf.mxu0
        %1953 = vdwg.mxu0
        %v1958 = vcombine.low %v1907, %v1909
        %v1959 = vcombine.low %v1948, %v1950
        %v1961 = vunpack.c.l.s4 1966171168
        %v1962 = vunpack.c.0.s8 %v1961
        %v1963 = vlaneseq
        %v1964 = vshrl.u32 %v1963, 7
        %v1965 = vsub.s32 %v1962, %v1964
        %v1966 = vrot.slane %v1958, %v1965
        %v1968 = vunpack.c.l.s4 1966171168
        %v1969 = vunpack.c.0.s8 %v1968
        %v1970 = vlaneseq
        %v1971 = vshrl.u32 %v1970, 7
        %v1972 = vsub.s32 %v1969, %v1971
        %v1973 = vrot.slane %v1959, %v1972
        %v1974 = vcombine.low %v1966, %v1973
        %v1976 = vunpack.c.l.s4 1966171168
        %v1977 = vunpack.c.0.s8 %v1976
        %v1978 = vlaneseq
        %v1979 = vshrl.u32 %v1978, 7
        %v1980 = vsub.s32 %v1977, %v1979
        %v1981 = vrot.slane %v1974, %v1980
        %v1983 = vlaneseq
        %vm1984 = vcmp.ge.s32.totalorder %v1983, 0
        %vm1985 = vcmp.lt.s32.totalorder %v1983, 512
        %vm1986 = vmand %vm1984, %vm1985
        %1987 = vst.msk [vmem:[%s503] sm:$0xf] %vm1986, %v1981
      $region80: #{forward.7} parent=71 // pred_fallthru
        _
      %p1988 = scmp.lt.s32.totalorder %s30, 1
      %s1989 = scalar_select %p1988, %s30, 1
      %s1990 = smul.addr %s1989, 4
      %s1991 = scalar_lea.vmem %s13, %s1990
      // Predicated region
      $region81: #{forward.7} parent=71 // pred_check
        %p1992 = pneg %p349
      $region82: #{forward.7} parent=71 // pred_check_branch
        %1994 = sbr.rel (%p1992) target = $region84
      $region83: #{forward.7} parent=71 // pred_region
        _
      $region84: #{forward.7} parent=71 // pred_fallthru
        _
    $region72: #{forward.7} parent=5 // pred_fallthru
      _
    %p1995 = scmp.le.s32.totalorder 2, %s21
    // Predicated region
    $region85: #{forward.7} parent=5 // pred_check
      %p1996 = pneg %p1995
    $region86: #{forward.7} parent=5 // pred_check_branch
      %1998 = sbr.rel (%p1996) target = $region88
    $region87: #{forward.7} parent=5 // pred_region
      %s1999 = ssub.s32 %s21, 2
      // Predicated region
      $region89: #{forward.7} parent=87 // pred_check
        %p2000 = pneg %p355
      $region90: #{forward.7} parent=87 // pred_check_branch
        %2002 = sbr.rel (%p2000) target = $region92
      $region91: #{forward.7} parent=87 // pred_region
        %p2003 = scmp.lt.s32.totalorder %s32, 1
        %s2004 = scalar_select %p2003, %s32, 1
        %s2005 = smul.addr %s2004, 4
        %s2006 = scalar_lea.vmem %s13, %s2005
      $region92: #{forward.7} parent=87 // pred_fallthru
        _
    $region88: #{forward.7} parent=5 // pred_fallthru
      _
  $region6: #{forward.7} parent=0 // loop_footer
    %s25 = sadd.s32 1, %s21
  $region7: #{forward.7} parent=0 // loop_footer_branch
    %20 = sbr.rel target = $region3
  $region8: #{forward.7} parent=0 // loop_exit
    _

</llo_original>
